<compile_context>
chip_gen: v7x
topology: tpu7x:2x2x1
jax: 0.10.0
libtpu: 0.0.40
codegen_flags: <defaults>
</compile_context>

<pallas_src>
import jax
import jax.numpy as jnp
from jax.experimental import pallas as pl
from jax.experimental.pallas import tpu as pltpu

FEAT_DIM = 1792      # EfficientNet-b4 extract_features channel count
HIDDEN_DIM = 64      # self.hidden_dim
H_PAD = 128          # lane-dense padding of the 64-wide hidden axis
F_BLOCK = 256        # feature chunk per grid step (1792 = 7 * 256)
PC_MAX = 512         # max pixel (lane) chunk per grid step

assert FEAT_DIM % F_BLOCK == 0


# --------------------------------------------------------------------------
# Kernel 1: stem projection + ReLU + global average pool (accumulating)
# --------------------------------------------------------------------------
def _make_pool_kernel(total_pixels, c_in, f_block):
    inv_p = 1.0 / float(total_pixels)
    use_vpu = c_in <= 16   # tiny K: VPU broadcast-FMA beats a ~3%-utilized MXU pass

    def pool_kernel(x_ref, wt_ref, pooled_ref, acc_ref):
        # x_ref:      (BT, C, Pc)   f32  -- pixels on lanes, channels on sublanes
        # wt_ref:     (FB, C)       f32  -- transposed stem-weight chunk
        # pooled_ref: (BT, FB)      f32  -- written on the last pixel step
        # acc_ref:    (BT, FB)      f32  -- running per-image feature sums
        p = pl.program_id(2)

        @pl.when(p == 0)
        def _():
            acc_ref[...] = jnp.zeros_like(acc_ref)

        # TODO(synk): the full EfficientNet-b4 backbone (MBConv/SE/BatchNorm
        # stacks behind extract_features) has no clean single-kernel Pallas
        # equivalent; it is substituted by a frozen bias-free 1x1 pointwise
        # stem that emits the 1792-channel feature map the backbone would.
        x = x_ref[...]
        wt = wt_ref[...]

        if use_vpu:
            # feats[b, f, p] = sum_c x[b, c, p] * W[f, c]   (C broadcast FMAs)
            feats = None
            for c in range(c_in):
                xc = x[:, c:c + 1, :].astype(jnp.float32)     # (BT, 1, Pc)
                wc = wt[:, c:c + 1][None, :, :]               # (1, FB, 1)
                term = xc * wc                                # (BT, FB, Pc)
                feats = term if feats is None else feats + term
            feats = jnp.maximum(feats, 0.0)                   # ReLU
            chunk_sum = jnp.sum(feats, axis=-1)               # lane (pixel) reduce
        else:
            # MXU fallback for larger channel counts.
            feats = jnp.einsum('bcp,fc->bpf', x.astype(jnp.float32), wt,
                               preferred_element_type=jnp.float32)
            feats = jnp.maximum(feats, 0.0)
            chunk_sum = jnp.sum(feats, axis=1)

        acc_ref[...] += chunk_sum                             # one RMW per step

        @pl.when(p == pl.num_programs(2) - 1)
        def _():
            pooled_ref[...] = acc_ref[...] * inv_p            # mean over true P

    return pool_kernel


# --------------------------------------------------------------------------
# Kernel 2: e2h + fc MLP, run over the whole (padded) batch, lane-dense I/O
# --------------------------------------------------------------------------
def mlp_kernel(pooled_ref, we2h_ref, be2h_ref, w1_ref, b1_ref,
               w2_ref, b2_ref, w3_ref, b3_ref, hidden_ref, logits_ref):
    pooled = pooled_ref[...].astype(jnp.bfloat16)                      # (Bm, 1792)

    # e2h: Linear(1792 -> 64), padded to 128 lanes (zero cols are inert).
    hidden = (jnp.dot(pooled, we2h_ref[...],
                      preferred_element_type=jnp.float32) + be2h_ref[...])

    # fc: Linear(64->256) -> Linear(256->64) -> ReLU -> Linear(64->nc_pad)
    h1 = (jnp.dot(hidden.astype(jnp.bfloat16), w1_ref[...],
                  preferred_element_type=jnp.float32) + b1_ref[...])
    h2 = (jnp.dot(h1.astype(jnp.bfloat16), w2_ref[...],
                  preferred_element_type=jnp.float32) + b2_ref[...])
    h3 = jnp.maximum(h2, 0.0)
    logits = (jnp.dot(h3.astype(jnp.bfloat16), w3_ref[...],
                      preferred_element_type=jnp.float32) + b3_ref[...])

    hidden_ref[...] = hidden
    logits_ref[...] = logits


# --------------------------------------------------------------------------
# Wrapper
# --------------------------------------------------------------------------
def cnn_expert1_forward(x_nchw, kernel_params, numclasses):
    """Returns (hidden_state, logits) exactly like CNNExpert1.forward."""
    (wstem_t, we2h_p, be2h_p, w1_p, b1_p, w2_p, b2_p, w3_p, b3_p) = kernel_params
    B, C, H, W = x_nchw.shape
    P = H * W
    assert wstem_t.shape == (FEAT_DIM, C)

    # NCHW -> (B, C, P): pure metadata reshape (no transpose, no cast).
    x = jnp.reshape(x_nchw, (B, C, P)).astype(jnp.float32)

    # Batch tiling: full sublane groups of 8 where possible; tiny batches go
    # through unpadded (block dim == full dim is allowed).
    if B % 8 == 0:
        BT, Bp = 8, B
    elif B < 8:
        BT, Bp = B, B
    else:
        BT, Bp = 8, ((B + 7) // 8) * 8
    if Bp != B:
        x = jnp.pad(x, ((0, Bp - B), (0, 0), (0, 0)))

    # Pixel (lane) tiling: pad P up to a multiple of the chunk; zero pixels
    # contribute relu(0)=0 to the sums and we divide by the true P.
    Pp = ((P + 127) // 128) * 128
    if Pp <= PC_MAX:
        Pc = Pp
    else:
        Pc = PC_MAX
        Pp = ((P + Pc - 1) // Pc) * Pc
    if Pp != P:
        x = jnp.pad(x, ((0, 0), (0, 0), (0, Pp - P)))

    NF = FEAT_DIM // F_BLOCK

    pooled = pl.pallas_call(
        _make_pool_kernel(P, C, F_BLOCK),
        out_shape=jax.ShapeDtypeStruct((Bp, FEAT_DIM), jnp.float32),
        grid=(Bp // BT, NF, Pp // Pc),
        in_specs=[
            pl.BlockSpec((BT, C, Pc), lambda b, f, p: (b, 0, p)),
            pl.BlockSpec((F_BLOCK, C), lambda b, f, p: (f, 0)),
        ],
        out_specs=pl.BlockSpec((BT, F_BLOCK), lambda b, f, p: (b, f)),
        scratch_shapes=[pltpu.VMEM((BT, F_BLOCK), jnp.float32)],
        compiler_params=pltpu.CompilerParams(
            dimension_semantics=("parallel", "parallel", "arbitrary"),
            vmem_limit_bytes=32 * 1024 * 1024),
    )(x, wstem_t)

    nc_pad = w3_p.shape[1]
    h_pad = we2h_p.shape[1]
    BT_M = Bp if Bp <= 512 else 8

    hidden_pad, logits_pad = pl.pallas_call(
        mlp_kernel,
        out_shape=(jax.ShapeDtypeStruct((Bp, h_pad), jnp.float32),
                   jax.ShapeDtypeStruct((Bp, nc_pad), jnp.float32)),
        grid=(Bp // BT_M,),
        in_specs=[
            pl.BlockSpec((BT_M, FEAT_DIM), lambda i: (i, 0)),
            pl.BlockSpec(we2h_p.shape, lambda i: (0, 0)),
            pl.BlockSpec(be2h_p.shape, lambda i: (0, 0)),
            pl.BlockSpec(w1_p.shape, lambda i: (0, 0)),
            pl.BlockSpec(b1_p.shape, lambda i: (0, 0)),
            pl.BlockSpec(w2_p.shape, lambda i: (0, 0)),
            pl.BlockSpec(b2_p.shape, lambda i: (0, 0)),
            pl.BlockSpec(w3_p.shape, lambda i: (0, 0)),
            pl.BlockSpec(b3_p.shape, lambda i: (0, 0)),
        ],
        out_specs=(pl.BlockSpec((BT_M, h_pad), lambda i: (i, 0)),
                   pl.BlockSpec((BT_M, nc_pad), lambda i: (i, 0))),
        compiler_params=pltpu.CompilerParams(
            dimension_semantics=("arbitrary",)),
    )(pooled, we2h_p, be2h_p, w1_p, b1_p, w2_p, b2_p, w3_p, b3_p)

    return hidden_pad[:B, :HIDDEN_DIM], logits_pad[:B, :numclasses]


# --------------------------------------------------------------------------
# Params (math form), one-time kernel prep, and pure-JAX reference
# --------------------------------------------------------------------------
def init_params(key, inchannel, numclasses):
    """Deterministic parameter init (PyTorch nn.Linear-style uniform), f32."""
    ks = jax.random.split(key, 10)

    def linear(kw, kb, fan_in, fan_out):
        bound = 1.0 / (fan_in ** 0.5)
        w = jax.random.uniform(kw, (fan_in, fan_out), jnp.float32, -bound, bound)
        b = jax.random.uniform(kb, (1, fan_out), jnp.float32, -bound, bound)
        return w, b

    # frozen backbone stub (bias-free 1x1 stem)
    wstem = jax.random.uniform(ks[0], (inchannel, FEAT_DIM), jnp.float32,
                               -1.0 / (inchannel ** 0.5), 1.0 / (inchannel ** 0.5))
    we2h, be2h = linear(ks[1], ks[2], FEAT_DIM, HIDDEN_DIM)       # e2h
    w1, b1 = linear(ks[3], ks[4], HIDDEN_DIM, 256)                # fc[0]
    w2, b2 = linear(ks[5], ks[6], 256, HIDDEN_DIM)                # fc[1]
    w3, b3 = linear(ks[7], ks[8], HIDDEN_DIM, numclasses)         # fc[3]
    return (wstem, we2h, be2h, w1, b1, w2, b2, w3, b3)


def prepare_params(params):
    """One-time kernel prep: transpose stem, zero-pad to lane-dense widths,
    cast MLP weights to bf16.  Called once, not per forward."""
    wstem, we2h, be2h, w1, b1, w2, b2, w3, b3 = params
    numclasses = w3.shape[1]
    nc_pad = max(128, ((numclasses + 127) // 128) * 128)

    wstem_t = jnp.asarray(wstem.T, jnp.float32)                       # (1792, C)

    we2h_p = (jnp.zeros((FEAT_DIM, H_PAD), jnp.bfloat16)
              .at[:, :HIDDEN_DIM].set(we2h.astype(jnp.bfloat16)))
    be2h_p = jnp.zeros((1, H_PAD), jnp.float32).at[:, :HIDDEN_DIM].set(be2h)

    w1_p = (jnp.zeros((H_PAD, 256), jnp.bfloat16)
            .at[:HIDDEN_DIM, :].set(w1.astype(jnp.bfloat16)))
    b1_p = jnp.asarray(b1, jnp.float32)

    w2_p = (jnp.zeros((256, H_PAD), jnp.bfloat16)
            .at[:, :HIDDEN_DIM].set(w2.astype(jnp.bfloat16)))
    b2_p = jnp.zeros((1, H_PAD), jnp.float32).at[:, :HIDDEN_DIM].set(b2)

    w3_p = (jnp.zeros((H_PAD, nc_pad), jnp.bfloat16)
            .at[:HIDDEN_DIM, :numclasses].set(w3.astype(jnp.bfloat16)))
    b3_p = jnp.zeros((1, nc_pad), jnp.float32).at[:, :numclasses].set(b3)

    return (wstem_t, we2h_p, be2h_p, w1_p, b1_p, w2_p, b2_p, w3_p, b3_p)


def ref_forward(x_nchw, params):
    """Pure-JAX f32 reference of the same computation (for correctness check)."""
    wstem, we2h, be2h, w1, b1, w2, b2, w3, b3 = params
    B, C, H, W = x_nchw.shape
    x = jnp.transpose(x_nchw, (0, 2, 3, 1)).reshape(B, H * W, C)
    feats = jnp.maximum(jnp.einsum('bpc,cf->bpf', x, wstem), 0.0)
    pooled = feats.mean(axis=1)
    hidden = pooled @ we2h + be2h
    h1 = hidden @ w1 + b1
    h2 = h1 @ w2 + b2
    h3 = jnp.maximum(h2, 0.0)
    logits = h3 @ w3 + b3
    return hidden, logits


if __name__ == "__main__":
    key = jax.random.PRNGKey(0)
    k_x, k_p = jax.random.split(key)

    B, inchannel, H, W = 2, 4, 16, 16
    numclasses = 10

    x = jax.random.normal(k_x, (B, inchannel, H, W), jnp.float32)
    params = init_params(k_p, inchannel, numclasses)
    kparams = prepare_params(params)

    hidden, logits = cnn_expert1_forward(x, kparams, numclasses)
    jax.block_until_ready((hidden, logits))

    hidden_ref, logits_ref = ref_forward(x, params)
    assert hidden.shape == (B, HIDDEN_DIM)
    assert logits.shape == (B, numclasses)
    # Stem/pool run in f32; the MLP uses bf16 weights with f32 accumulation,
    # so compare at bf16-level tolerance.
    assert jnp.allclose(hidden, hidden_ref, rtol=2e-2, atol=2e-2)
    assert jnp.allclose(logits, logits_ref, rtol=2e-2, atol=2e-2)

    print("KERNEL_OK")
</pallas_src>

<mosaic_0001>
module attributes {stable_mosaic.version = 11 : i64} {
  func.func @pool_kernel(%arg0: i32, %arg1: i32, %arg2: i32, %arg3: memref<2x4x256xf32, #tpu.memory_space<vmem>>, %arg4: memref<256x4xf32, #tpu.memory_space<vmem>>, %arg5: memref<2x256xf32, #tpu.memory_space<vmem>>, %arg6: memref<2x256xf32, #tpu.memory_space<vmem>>) attributes {dimension_semantics = [#tpu.dimension_semantics<parallel>, #tpu.dimension_semantics<parallel>, #tpu.dimension_semantics<arbitrary>], iteration_bounds = array<i64: 1, 7, 1>, scalar_prefetch = 0 : i64, scratch_operands = 1 : i64, tpu.core_type = #tpu.core_type<tc>, window_params = [{transform_indices = @transform_0, window_bounds = array<i64: 2, 4, 256>}, {transform_indices = @transform_1, window_bounds = array<i64: 256, 4>}, {transform_indices = @transform_2, window_bounds = array<i64: 2, 256>}]} {
    %c0_i32 = arith.constant 0 : i32
    %0 = arith.cmpi eq, %arg2, %c0_i32 : i32
    %1 = arith.extui %0 : i1 to i32
    %c0_i32_0 = arith.constant 0 : i32
    %2 = arith.cmpi ne, %1, %c0_i32_0 : i32
    scf.if %2 {
      %cst_12 = arith.constant 0.000000e+00 : f32
      %41 = vector.broadcast %cst_12 : f32 to vector<2x256xf32>
      %c0_13 = arith.constant 0 : index
      %c0_14 = arith.constant 0 : index
      %42 = vector.load %arg6[%c0_13, %c0_14] : memref<2x256xf32, #tpu.memory_space<vmem>>, vector<2x256xf32>
      tpu.vector_store %arg6[%c0_13, %c0_14], %41 {strides = array<i32>} : memref<2x256xf32, #tpu.memory_space<vmem>>, vector<2x256xf32>,
    } else {
    }
    %c0 = arith.constant 0 : index
    %c0_1 = arith.constant 0 : index
    %c0_2 = arith.constant 0 : index
    %3 = vector.load %arg3[%c0, %c0_1, %c0_2] : memref<2x4x256xf32, #tpu.memory_space<vmem>>, vector<2x4x256xf32>
    %c0_3 = arith.constant 0 : index
    %c0_4 = arith.constant 0 : index
    %4 = vector.load %arg4[%c0_3, %c0_4] : memref<256x4xf32, #tpu.memory_space<vmem>>, vector<256x4xf32>
    %5 = vector.extract_strided_slice %3 {offsets = [0, 0, 0], sizes = [2, 1, 256], strides = [1, 1, 1]} : vector<2x4x256xf32> to vector<2x1x256xf32>
    %6 = vector.extract_strided_slice %4 {offsets = [0, 0], sizes = [256, 1], strides = [1, 1]} : vector<256x4xf32> to vector<256x1xf32>
    %7 = vector.shape_cast %6 : vector<256x1xf32> to vector<1x256x1xf32>
    %8 = vector.broadcast %5 : vector<2x1x256xf32> to vector<2x256x256xf32>
    %9 = vector.broadcast %7 : vector<1x256x1xf32> to vector<2x256x256xf32>
    %10 = arith.mulf %8, %9 : vector<2x256x256xf32>
    %11 = vector.extract_strided_slice %3 {offsets = [0, 1, 0], sizes = [2, 1, 256], strides = [1, 1, 1]} : vector<2x4x256xf32> to vector<2x1x256xf32>
    %12 = vector.extract_strided_slice %4 {offsets = [0, 1], sizes = [256, 1], strides = [1, 1]} : vector<256x4xf32> to vector<256x1xf32>
    %13 = vector.shape_cast %12 : vector<256x1xf32> to vector<1x256x1xf32>
    %14 = vector.broadcast %11 : vector<2x1x256xf32> to vector<2x256x256xf32>
    %15 = vector.broadcast %13 : vector<1x256x1xf32> to vector<2x256x256xf32>
    %16 = arith.mulf %14, %15 : vector<2x256x256xf32>
    %17 = arith.addf %10, %16 : vector<2x256x256xf32>
    %18 = vector.extract_strided_slice %3 {offsets = [0, 2, 0], sizes = [2, 1, 256], strides = [1, 1, 1]} : vector<2x4x256xf32> to vector<2x1x256xf32>
    %19 = vector.extract_strided_slice %4 {offsets = [0, 2], sizes = [256, 1], strides = [1, 1]} : vector<256x4xf32> to vector<256x1xf32>
    %20 = vector.shape_cast %19 : vector<256x1xf32> to vector<1x256x1xf32>
    %21 = vector.broadcast %18 : vector<2x1x256xf32> to vector<2x256x256xf32>
    %22 = vector.broadcast %20 : vector<1x256x1xf32> to vector<2x256x256xf32>
    %23 = arith.mulf %21, %22 : vector<2x256x256xf32>
    %24 = arith.addf %17, %23 : vector<2x256x256xf32>
    %25 = vector.extract_strided_slice %3 {offsets = [0, 3, 0], sizes = [2, 1, 256], strides = [1, 1, 1]} : vector<2x4x256xf32> to vector<2x1x256xf32>
    %26 = vector.extract_strided_slice %4 {offsets = [0, 3], sizes = [256, 1], strides = [1, 1]} : vector<256x4xf32> to vector<256x1xf32>
    %27 = vector.shape_cast %26 : vector<256x1xf32> to vector<1x256x1xf32>
    %28 = vector.broadcast %25 : vector<2x1x256xf32> to vector<2x256x256xf32>
    %29 = vector.broadcast %27 : vector<1x256x1xf32> to vector<2x256x256xf32>
    %30 = arith.mulf %28, %29 : vector<2x256x256xf32>
    %31 = arith.addf %24, %30 : vector<2x256x256xf32>
    %cst = arith.constant 0.000000e+00 : f32
    %32 = vector.broadcast %cst : f32 to vector<2x256x256xf32>
    %33 = arith.maximumf %31, %32 : vector<2x256x256xf32>
    %cst_5 = arith.constant dense<0.000000e+00> : vector<2x256xf32>
    %34 = vector.multi_reduction <add>, %33, %cst_5 [2] : vector<2x256x256xf32> to vector<2x256xf32>
    %c0_6 = arith.constant 0 : index
    %c0_7 = arith.constant 0 : index
    %35 = vector.load %arg6[%c0_6, %c0_7] : memref<2x256xf32, #tpu.memory_space<vmem>>, vector<2x256xf32>
    %36 = arith.addf %35, %34 : vector<2x256xf32>
    %c0_8 = arith.constant 0 : index
    %c0_9 = arith.constant 0 : index
    %37 = vector.load %arg6[%c0_8, %c0_9] : memref<2x256xf32, #tpu.memory_space<vmem>>, vector<2x256xf32>
    tpu.vector_store %arg6[%c0_8, %c0_9], %36 {strides = array<i32>} : memref<2x256xf32, #tpu.memory_space<vmem>>, vector<2x256xf32>,
    %c0_i32_10 = arith.constant 0 : i32
    %38 = arith.cmpi eq, %arg2, %c0_i32_10 : i32
    %39 = arith.extui %38 : i1 to i32
    %c0_i32_11 = arith.constant 0 : i32
    %40 = arith.cmpi ne, %39, %c0_i32_11 : i32
    scf.if %40 {
      %c0_12 = arith.constant 0 : index
      %c0_13 = arith.constant 0 : index
      %41 = vector.load %arg6[%c0_12, %c0_13] : memref<2x256xf32, #tpu.memory_space<vmem>>, vector<2x256xf32>
      %cst_14 = arith.constant 3.906250e-03 : f32
      %42 = vector.broadcast %cst_14 : f32 to vector<2x256xf32>
      %43 = arith.mulf %41, %42 : vector<2x256xf32>
      %c0_15 = arith.constant 0 : index
      %c0_16 = arith.constant 0 : index
      %44 = vector.load %arg5[%c0_15, %c0_16] : memref<2x256xf32, #tpu.memory_space<vmem>>, vector<2x256xf32>
      tpu.vector_store %arg5[%c0_15, %c0_16], %43 {strides = array<i32>} : memref<2x256xf32, #tpu.memory_space<vmem>>, vector<2x256xf32>,
    } else {
    }
    return
  }
  func.func @transform_0(%arg0: i32, %arg1: i32, %arg2: i32) -> (i32, i32, i32) {
    %c0_i32 = arith.constant 0 : i32
    %c0_i32_0 = arith.constant 0 : i32
    return %arg0, %c0_i32, %arg2 : i32, i32, i32
  }
  func.func @transform_1(%arg0: i32, %arg1: i32, %arg2: i32) -> (i32, i32) {
    %c0_i32 = arith.constant 0 : i32
    %c0_i32_0 = arith.constant 0 : i32
    return %arg1, %c0_i32 : i32, i32
  }
  func.func @transform_2(%arg0: i32, %arg1: i32, %arg2: i32) -> (i32, i32) {
    %c0_i32 = arith.constant 0 : i32
    return %arg0, %arg1 : i32, i32
  }
}

</mosaic_0001>

<llo_original>
// kernel: tpu_custom_call.1
$region0: #{tpu_custom_call.1}
  #allocation0 [shape = 'u32[]', space=smem, size = 0x4, offset = 0x4, fixed_abs, tag = 'smem constant byte address 0x4 - core index']
  #allocation1 [shape = 'u32[144,128]{1,0:T(1,128)}', space=vmem, size = 0x12000, scoped, tag = 'internal scratch']
  #allocation2 [shape = 'f32[2,256]{1,0:T(2,128)}', space=vmem, size = 0x800, scoped, tag = 'scratch operand']
  %s0 = inlined_call_operand.vmem [shape: f32[2,4,256], index: 0, kind: input, shape index: {}]
  %s1 = inlined_call_operand.vmem [shape: f32[1792,4], index: 1, kind: input, shape index: {}]
  %s2 = inlined_call_operand.hbm [shape: f32[2,1792], index: 2, kind: output, shape index: {}]
  %s3 = sld [smem:[#allocation0]]
  $region49: #{tpu_custom_call.1} parent=0
    _
  %s5 = ssub.s32 1, %s3
  %s6 = scalar_select 0, %s5, %s3
  $region1: #{tpu_custom_call.1} parent=0
    #allocation3 [shape = 'u8[4096]{0}', space=vmem, size = 0x1000, scoped, tag = 'output window, operand 0']
    #allocation4 [shape = 's32[2]{0}', space=sflag, size = 0x8, scoped, tag = 'scoped memory for tpu_custom_call.1']
    %7 = vsyncpa [#allocation4], 0
    %s8 = scalar_lea.sflag [#allocation4], 1
    %9 = vsyncpa %s8, 0
    loop: start=0, step=1, limit=9
    $region2: #{tpu_custom_call.1} parent=1 // loop_pre_header
      _
    $region3: #{tpu_custom_call.1} parent=1 // loop_header
      %s11 = sphi 0, %s15
      %p12 = scmp.ge.s32.totalorder %s11, 9
      %s18 = sphi 0, %s37
      %s19 = sphi 0, %s33
      %s20 = sphi 0, %s29
      %s21 = sphi 0, %s18
      %s22 = sphi 0, %s19
      %s23 = sphi 0, %s20
      %s24 = sphi 0, %s21
      %s25 = sphi 0, %s22
      %s26 = sphi 0, %s23
      %s42 = sphi 0, %s44
      %s45 = sphi 0, %s42
      %s46 = sphi 0, %s45
      %s62 = sphi 0, %s46
      %s68 = sphi 0, %s70
      %s71 = sphi 0, %s68
      %s72 = sphi 0, %s71
      %s88 = sphi 0, %s72
      %s96 = sphi 0, %s98
      %s99 = sphi 0, %s96
      %s100 = sphi 0, %s99
      %s116 = sphi 0, %s100
    $region4: #{tpu_custom_call.1} parent=1 // loop_header_branch
      %14 = sbr.rel (%p12) target = $region8
    $region5: #{tpu_custom_call.1} parent=1 // loop_body
      %s16 = ssub.s32 %s11, 1
      %s17 = ssub.s32 %s11, 2
      %s27 = sadd.s32 1, %s20
      %p28 = scmp.ge.s32.totalorder %s27, 1
      %s29 = scalar_select %p28, 0, %s27
      %s30 = sadd.s32 1, %s19
      %s31 = scalar_select %p28, %s30, %s19
      %p32 = scmp.ge.s32.totalorder %s31, 7
      %s33 = scalar_select %p32, 0, %s31
      %s34 = sadd.s32 1, %s18
      %s35 = scalar_select %p32, %s34, %s18
      %p36 = scmp.ge.s32.totalorder %s35, 1
      %s37 = scalar_select %p36, 0, %s35
      %s38 = ssub.s32 %s18, %s37
      %s39 = ssub.s32 %s20, %s29
      %s40 = sor.u32 %s38, %s39
      %p41 = scmp.eq.s32.totalorder %s40, 0
      %s43 = sadd.s32 %s42, 1
      %s44 = scalar_select %p41, %s42, %s43
      %p47 = pneg %p41
      %p48 = scmp.eq.s32.totalorder %s11, 6
      %p49 = por %p47, %p48
      %p50 = scmp.ne.s32.totalorder %s42, %s45
      %p51 = scmp.eq.s32.totalorder %s11, 0
      %p52 = por %p50, %p51
      %p53 = scmp.ne.s32.totalorder %s42, %s45
      %p54 = scmp.eq.s32.totalorder %s16, 6
      %p55 = por %p53, %p54
      %p56 = scmp.ne.s32.totalorder %s45, %s46
      %p57 = scmp.eq.s32.totalorder %s16, 0
      %p58 = por %p56, %p57
      %p59 = scmp.ne.s32.totalorder %s45, %s46
      %p60 = scmp.eq.s32.totalorder %s17, 6
      %p61 = por %p59, %p60
      %p63 = scmp.ne.s32.totalorder %s46, %s62
      %p64 = scmp.eq.s32.totalorder %s17, 0
      %p65 = por %p63, %p64
      %s66 = ssub.s32 %s19, %s33
      %p67 = scmp.eq.s32.totalorder %s66, 0
      %s69 = sadd.s32 %s68, 1
      %s70 = scalar_select %p67, %s68, %s69
      %p73 = pneg %p67
      %p74 = scmp.eq.s32.totalorder %s11, 6
      %p75 = por %p73, %p74
      %p76 = scmp.ne.s32.totalorder %s68, %s71
      %p77 = scmp.eq.s32.totalorder %s11, 0
      %p78 = por %p76, %p77
      %p79 = scmp.ne.s32.totalorder %s68, %s71
      %p80 = scmp.eq.s32.totalorder %s16, 6
      %p81 = por %p79, %p80
      %p82 = scmp.ne.s32.totalorder %s71, %s72
      %p83 = scmp.eq.s32.totalorder %s16, 0
      %p84 = por %p82, %p83
      %p85 = scmp.ne.s32.totalorder %s71, %s72
      %p86 = scmp.eq.s32.totalorder %s17, 6
      %p87 = por %p85, %p86
      %p89 = scmp.ne.s32.totalorder %s72, %s88
      %p90 = scmp.eq.s32.totalorder %s17, 0
      %p91 = por %p89, %p90
      %s92 = ssub.s32 %s18, %s37
      %s93 = ssub.s32 %s19, %s33
      %s94 = sor.u32 %s92, %s93
      %p95 = scmp.eq.s32.totalorder %s94, 0
      %s97 = sadd.s32 %s96, 1
      %s98 = scalar_select %p95, %s96, %s97
      %p101 = pneg %p95
      %p102 = scmp.eq.s32.totalorder %s11, 6
      %p103 = por %p101, %p102
      %p104 = scmp.ne.s32.totalorder %s96, %s99
      %p105 = scmp.eq.s32.totalorder %s11, 0
      %p106 = por %p104, %p105
      %p107 = scmp.ne.s32.totalorder %s96, %s99
      %p108 = scmp.eq.s32.totalorder %s16, 6
      %p109 = por %p107, %p108
      %p110 = scmp.ne.s32.totalorder %s99, %s100
      %p111 = scmp.eq.s32.totalorder %s16, 0
      %p112 = por %p110, %p111
      %p113 = scmp.ne.s32.totalorder %s99, %s100
      %p114 = scmp.eq.s32.totalorder %s17, 6
      %p115 = por %p113, %p114
      %p117 = scmp.ne.s32.totalorder %s100, %s116
      %p118 = scmp.eq.s32.totalorder %s17, 0
      %p119 = por %p117, %p118
      %p120 = scmp.le.s32.totalorder 1, %s11
      %p121 = scmp.lt.s32.totalorder %s11, 8
      %p122 = pnand %p120, %p121
      %p123 = pneg %p122
      // Predicated region
      $region9: #{tpu_custom_call.1} parent=5 // pred_check
        _
      $region10: #{tpu_custom_call.1} parent=5 // pred_check_branch
        %125 = sbr.rel (%p122) target = $region12
      $region11: #{tpu_custom_call.1} parent=5 // pred_region
        %s126 = ssub.s32 %s11, 1
        // Predicated region
        $region13: #{tpu_custom_call.1} parent=11 // pred_check
          %p127 = pneg %p58
        $region14: #{tpu_custom_call.1} parent=11 // pred_check_branch
          %129 = sbr.rel (%p127) target = $region16
        $region15: #{tpu_custom_call.1} parent=11 // pred_region
          %s130 = smul.u32 2, %s21
          %s131 = smul.u32 2, %s23
          %p132 = scmp.lt.s32.totalorder %s130, 1
          %s133 = scalar_select %p132, %s130, 1
          %p134 = scmp.lt.s32.totalorder %s131, 1
          %s135 = scalar_select %p134, %s131, 1
          %s136 = smul.addr %s133, 2
          %s137 = sadd.s32 %s135, %s136
          %s138 = smul.addr %s137, 4
          %s139 = scalar_lea.vmem %s0, %s138
          %s140 = smul.u32 2, %s21
          %s141 = smul.u32 2, %s23
        $region16: #{tpu_custom_call.1} parent=11 // pred_fallthru
          _
      $region12: #{tpu_custom_call.1} parent=5 // pred_fallthru
        _
      %p142 = scmp.lt.s32.totalorder %s11, 7
      // Predicated region
      $region17: #{tpu_custom_call.1} parent=5 // pred_check
        %p143 = pneg %p142
      $region18: #{tpu_custom_call.1} parent=5 // pred_check_branch
        %145 = sbr.rel (%p143) target = $region20
      $region19: #{tpu_custom_call.1} parent=5 // pred_region
        // Predicated region
        $region21: #{tpu_custom_call.1} parent=19 // pred_check
          %p146 = pneg %p78
        $region22: #{tpu_custom_call.1} parent=19 // pred_check_branch
          %148 = sbr.rel (%p146) target = $region24
        $region23: #{tpu_custom_call.1} parent=19 // pred_region
          %s149 = smul.u32 32, %s19
          %p150 = scmp.lt.s32.totalorder %s149, 223
          %s151 = scalar_select %p150, %s149, 223
          %s152 = smul.addr %s151, 8
          %s153 = scalar_lea.vmem %s1, %s152
          %s154 = smul.u32 32, %s19
        $region24: #{tpu_custom_call.1} parent=19 // pred_fallthru
          _
      $region20: #{tpu_custom_call.1} parent=5 // pred_fallthru
        _
      %p155 = scmp.le.s32.totalorder 1, %s11
      %p156 = scmp.lt.s32.totalorder %s11, 8
      %p157 = pnand %p155, %p156
      %p158 = pneg %p157
      // Predicated region
      $region25: #{tpu_custom_call.1} parent=5 // pred_check
        _
      $region26: #{tpu_custom_call.1} parent=5 // pred_check_branch
        %160 = sbr.rel (%p157) target = $region28
      $region27: #{tpu_custom_call.1} parent=5 // pred_region
        %s161 = ssub.s32 %s11, 1
        %s162 = smul.u32 2, %s21
        %s163 = smul.u32 2, %s23
        %p164 = scmp.lt.s32.totalorder %s162, 1
        %s165 = scalar_select %p164, %s162, 1
        %p166 = scmp.lt.s32.totalorder %s163, 1
        %s167 = scalar_select %p166, %s163, 1
        %s168 = smul.addr %s165, 2
        %s169 = sadd.s32 %s167, %s168
        %s170 = smul.addr %s169, 4
        %s171 = scalar_lea.vmem %s0, %s170
        %p172 = pneg %p58
        %p173 = pneg %p55
        %s174 = smul.u32 32, %s22
        %p175 = scmp.lt.s32.totalorder %s174, 223
        %s176 = scalar_select %p175, %s174, 223
        %s177 = smul.addr %s176, 8
        %s178 = scalar_lea.vmem %s1, %s177
        %p179 = pneg %p84
        %p180 = pneg %p81
        %p181 = pneg %p112
        %p182 = pneg %p109
        %s183 = sand.u32 %s99, 1
        %s184 = scalar_lea.sflag [#allocation4], %s183
        %s185 = sand.u32 %s99, 1
        %s186 = smul.addr %s185, 4
        %s187 = scalar_lea.vmem [#allocation3], %s186
        %s188 = smul.u32 2, %s21
        %s189 = smul.u32 2, %s23
        %p190 = scmp.lt.s32.totalorder %s188, 1
        %s191 = scalar_select %p190, %s188, 1
        %p192 = scmp.lt.s32.totalorder %s189, 1
        %s193 = scalar_select %p192, %s189, 1
        %s194 = smul.addr %s191, 2
        %s195 = sadd.s32 %s193, %s194
        %s196 = smul.addr %s195, 4
        %s197 = scalar_lea.vmem %s0, %s196
        %s198 = smul.u32 2, %s21
        %s199 = smul.u32 2, %s23
        %s200 = smul.u32 32, %s22
        %p201 = scmp.lt.s32.totalorder %s200, 223
        %s202 = scalar_select %p201, %s200, 223
        %s203 = smul.addr %s202, 8
        %s204 = scalar_lea.vmem %s1, %s203
        %s205 = smul.u32 32, %s22
        %s206 = smul.u32 2, %s22
        %p207 = scmp.eq.s32.totalorder %s23, 0
        // Predicated region
        $region29: #{tpu_custom_call.1} parent=27 // pred_check
          %p208 = pneg %p207
        $region30: #{tpu_custom_call.1} parent=27 // pred_check_branch
          %210 = sbr.rel (%p208) target = $region32
        $region31: #{tpu_custom_call.1} parent=27 // pred_region
          %211 = vst [vmem:[#allocation2] sm:$0xf] 0.0
        $region32: #{tpu_custom_call.1} parent=27 // pred_fallthru
          _
        %v212 = vld [vmem:[%s197] sm:$0xff]
        %v213 = vld [vmem:[%s197 + $0x8] sm:$0xff]
        %v214 = vld [vmem:[%s204] sm:$0xff]
        %v215 = vld [vmem:[%s204 + $0x8] sm:$0xff]
        %v216 = vld [vmem:[%s204 + $0x10] sm:$0xff]
        %v217 = vld [vmem:[%s204 + $0x18] sm:$0xff]
        %v218 = vld [vmem:[%s204 + $0x20] sm:$0xff]
        %v219 = vld [vmem:[%s204 + $0x28] sm:$0xff]
        %v220 = vld [vmem:[%s204 + $0x30] sm:$0xff]
        %v221 = vld [vmem:[%s204 + $0x38] sm:$0xff]
        %v222 = vld [vmem:[%s204 + $0x40] sm:$0xff]
        %v223 = vld [vmem:[%s204 + $0x48] sm:$0xff]
        %v224 = vld [vmem:[%s204 + $0x50] sm:$0xff]
        %v225 = vld [vmem:[%s204 + $0x58] sm:$0xff]
        %v226 = vld [vmem:[%s204 + $0x60] sm:$0xff]
        %v227 = vld [vmem:[%s204 + $0x68] sm:$0xff]
        %v228 = vld [vmem:[%s204 + $0x70] sm:$0xff]
        %v229 = vld [vmem:[%s204 + $0x78] sm:$0xff]
        %v230 = vld [vmem:[%s204 + $0x80] sm:$0xff]
        %v231 = vld [vmem:[%s204 + $0x88] sm:$0xff]
        %v232 = vld [vmem:[%s204 + $0x90] sm:$0xff]
        %v233 = vld [vmem:[%s204 + $0x98] sm:$0xff]
        %v234 = vld [vmem:[%s204 + $0xa0] sm:$0xff]
        %v235 = vld [vmem:[%s204 + $0xa8] sm:$0xff]
        %v236 = vld [vmem:[%s204 + $0xb0] sm:$0xff]
        %v237 = vld [vmem:[%s204 + $0xb8] sm:$0xff]
        %v238 = vld [vmem:[%s204 + $0xc0] sm:$0xff]
        %v239 = vld [vmem:[%s204 + $0xc8] sm:$0xff]
        %v240 = vld [vmem:[%s204 + $0xd0] sm:$0xff]
        %v241 = vld [vmem:[%s204 + $0xd8] sm:$0xff]
        %v242 = vld [vmem:[%s204 + $0xe0] sm:$0xff]
        %v243 = vld [vmem:[%s204 + $0xe8] sm:$0xff]
        %v244 = vld [vmem:[%s204 + $0xf0] sm:$0xff]
        %v245 = vld [vmem:[%s204 + $0xf8] sm:$0xff]
        %v248 = vlaneseq
        %v249 = vshrl.u32 %v248, 7
        %v250 = vsub.s32 0, %v249
        %v251 = vrot.slane %v212, %v250
        %v252 = vlaneseq
        %v253 = vshrl.u32 %v252, 7
        %v254 = vsub.s32 4, %v253
        %v255 = vrot.slane %v212, %v254
        %v256 = vlaneseq
        %v257 = vshrl.u32 %v256, 7
        %v258 = vsub.s32 0, %v257
        %v259 = vrot.slane %v213, %v258
        %v260 = vlaneseq
        %v261 = vshrl.u32 %v260, 7
        %v262 = vsub.s32 4, %v261
        %v263 = vrot.slane %v213, %v262
        %v268 = vlaneseq
        %v269 = vshrl.u32 %v268, 7
        %v270 = vsub.s32 0, %v269
        %v271 = vrot.slane %v251, %v270
        %v272 = vlaneseq
        %v273 = vshrl.u32 %v272, 7
        %v274 = vsub.s32 0, %v273
        %v275 = vrot.slane %v255, %v274
        %v276 = vlaneseq
        %v277 = vshrl.u32 %v276, 7
        %v278 = vsub.s32 0, %v277
        %v279 = vrot.slane %v259, %v278
        %v280 = vlaneseq
        %v281 = vshrl.u32 %v280, 7
        %v282 = vsub.s32 0, %v281
        %v283 = vrot.slane %v263, %v282
        %285 = vset.pattern.permute.xlu0 0
        %286 = vperm.xlu0 %285, %v214
        %v287 = vpop.permute.xlu0 %286
        %290 = vset.pattern.permute.xlu0 0
        %291 = vperm.xlu0 %290, %v215
        %v292 = vpop.permute.xlu0 %291
        %295 = vset.pattern.permute.xlu0 0
        %296 = vperm.xlu0 %295, %v216
        %v297 = vpop.permute.xlu0 %296
        %300 = vset.pattern.permute.xlu0 0
        %301 = vperm.xlu0 %300, %v217
        %v302 = vpop.permute.xlu0 %301
        %305 = vset.pattern.permute.xlu0 0
        %306 = vperm.xlu0 %305, %v218
        %v307 = vpop.permute.xlu0 %306
        %310 = vset.pattern.permute.xlu0 0
        %311 = vperm.xlu0 %310, %v219
        %v312 = vpop.permute.xlu0 %311
        %315 = vset.pattern.permute.xlu0 0
        %316 = vperm.xlu0 %315, %v220
        %v317 = vpop.permute.xlu0 %316
        %320 = vset.pattern.permute.xlu0 0
        %321 = vperm.xlu0 %320, %v221
        %v322 = vpop.permute.xlu0 %321
        %325 = vset.pattern.permute.xlu0 0
        %326 = vperm.xlu0 %325, %v222
        %v327 = vpop.permute.xlu0 %326
        %330 = vset.pattern.permute.xlu0 0
        %331 = vperm.xlu0 %330, %v223
        %v332 = vpop.permute.xlu0 %331
        %335 = vset.pattern.permute.xlu0 0
        %336 = vperm.xlu0 %335, %v224
        %v337 = vpop.permute.xlu0 %336
        %340 = vset.pattern.permute.xlu0 0
        %341 = vperm.xlu0 %340, %v225
        %v342 = vpop.permute.xlu0 %341
        %345 = vset.pattern.permute.xlu0 0
        %346 = vperm.xlu0 %345, %v226
        %v347 = vpop.permute.xlu0 %346
        %350 = vset.pattern.permute.xlu0 0
        %351 = vperm.xlu0 %350, %v227
        %v352 = vpop.permute.xlu0 %351
        %355 = vset.pattern.permute.xlu0 0
        %356 = vperm.xlu0 %355, %v228
        %v357 = vpop.permute.xlu0 %356
        %360 = vset.pattern.permute.xlu0 0
        %361 = vperm.xlu0 %360, %v229
        %v362 = vpop.permute.xlu0 %361
        %365 = vset.pattern.permute.xlu0 0
        %366 = vperm.xlu0 %365, %v230
        %v367 = vpop.permute.xlu0 %366
        %370 = vset.pattern.permute.xlu0 0
        %371 = vperm.xlu0 %370, %v231
        %v372 = vpop.permute.xlu0 %371
        %375 = vset.pattern.permute.xlu0 0
        %376 = vperm.xlu0 %375, %v232
        %v377 = vpop.permute.xlu0 %376
        %380 = vset.pattern.permute.xlu0 0
        %381 = vperm.xlu0 %380, %v233
        %v382 = vpop.permute.xlu0 %381
        %385 = vset.pattern.permute.xlu0 0
        %386 = vperm.xlu0 %385, %v234
        %v387 = vpop.permute.xlu0 %386
        %390 = vset.pattern.permute.xlu0 0
        %391 = vperm.xlu0 %390, %v235
        %v392 = vpop.permute.xlu0 %391
        %395 = vset.pattern.permute.xlu0 0
        %396 = vperm.xlu0 %395, %v236
        %v397 = vpop.permute.xlu0 %396
        %400 = vset.pattern.permute.xlu0 0
        %401 = vperm.xlu0 %400, %v237
        %v402 = vpop.permute.xlu0 %401
        %405 = vset.pattern.permute.xlu0 0
        %406 = vperm.xlu0 %405, %v238
        %v407 = vpop.permute.xlu0 %406
        %410 = vset.pattern.permute.xlu0 0
        %411 = vperm.xlu0 %410, %v239
        %v412 = vpop.permute.xlu0 %411
        %415 = vset.pattern.permute.xlu0 0
        %416 = vperm.xlu0 %415, %v240
        %v417 = vpop.permute.xlu0 %416
        %420 = vset.pattern.permute.xlu0 0
        %421 = vperm.xlu0 %420, %v241
        %v422 = vpop.permute.xlu0 %421
        %425 = vset.pattern.permute.xlu0 0
        %426 = vperm.xlu0 %425, %v242
        %v427 = vpop.permute.xlu0 %426
        %430 = vset.pattern.permute.xlu0 0
        %431 = vperm.xlu0 %430, %v243
        %v432 = vpop.permute.xlu0 %431
        %435 = vset.pattern.permute.xlu0 0
        %436 = vperm.xlu0 %435, %v244
        %v437 = vpop.permute.xlu0 %436
        %440 = vset.pattern.permute.xlu0 0
        %441 = vperm.xlu0 %440, %v245
        %v442 = vpop.permute.xlu0 %441
        %v444 = vmul.f32 %v271, %v287
        %v445 = vmul.f32 %v275, %v287
        %v446 = vmul.f32 %v271, %v292
        %v447 = vmul.f32 %v275, %v292
        %v448 = vmul.f32 %v271, %v297
        %v449 = vmul.f32 %v275, %v297
        %v450 = vmul.f32 %v271, %v302
        %v451 = vmul.f32 %v275, %v302
        %v452 = vmul.f32 %v271, %v307
        %v453 = vmul.f32 %v275, %v307
        %v454 = vmul.f32 %v271, %v312
        %v455 = vmul.f32 %v275, %v312
        %v456 = vmul.f32 %v271, %v317
        %v457 = vmul.f32 %v275, %v317
        %v458 = vmul.f32 %v271, %v322
        %v459 = vmul.f32 %v275, %v322
        %v460 = vmul.f32 %v271, %v327
        %v461 = vmul.f32 %v275, %v327
        %v462 = vmul.f32 %v271, %v332
        %v463 = vmul.f32 %v275, %v332
        %v464 = vmul.f32 %v271, %v337
        %v465 = vmul.f32 %v275, %v337
        %v466 = vmul.f32 %v271, %v342
        %v467 = vmul.f32 %v275, %v342
        %v468 = vmul.f32 %v271, %v347
        %v469 = vmul.f32 %v275, %v347
        %v470 = vmul.f32 %v271, %v352
        %v471 = vmul.f32 %v275, %v352
        %v472 = vmul.f32 %v271, %v357
        %v473 = vmul.f32 %v275, %v357
        %v474 = vmul.f32 %v271, %v362
        %v475 = vmul.f32 %v275, %v362
        %v476 = vmul.f32 %v271, %v367
        %v477 = vmul.f32 %v275, %v367
        %v478 = vmul.f32 %v271, %v372
        %v479 = vmul.f32 %v275, %v372
        %v480 = vmul.f32 %v271, %v377
        %v481 = vmul.f32 %v275, %v377
        %v482 = vmul.f32 %v271, %v382
        %v483 = vmul.f32 %v275, %v382
        %v484 = vmul.f32 %v271, %v387
        %v485 = vmul.f32 %v275, %v387
        %v486 = vmul.f32 %v271, %v392
        %v487 = vmul.f32 %v275, %v392
        %v488 = vmul.f32 %v271, %v397
        %v489 = vmul.f32 %v275, %v397
        %v490 = vmul.f32 %v271, %v402
        %v491 = vmul.f32 %v275, %v402
        %v492 = vmul.f32 %v271, %v407
        %v493 = vmul.f32 %v275, %v407
        %v494 = vmul.f32 %v271, %v412
        %v495 = vmul.f32 %v275, %v412
        %v496 = vmul.f32 %v271, %v417
        %v497 = vmul.f32 %v275, %v417
        %v498 = vmul.f32 %v271, %v422
        %v499 = vmul.f32 %v275, %v422
        %v500 = vmul.f32 %v271, %v427
        %v501 = vmul.f32 %v275, %v427
        %v502 = vmul.f32 %v271, %v432
        %v503 = vmul.f32 %v275, %v432
        %v504 = vmul.f32 %v271, %v437
        %v505 = vmul.f32 %v275, %v437
        %v506 = vmul.f32 %v271, %v442
        %v507 = vmul.f32 %v275, %v442
        %v508 = vmul.f32 %v279, %v287
        %v509 = vmul.f32 %v283, %v287
        %v510 = vmul.f32 %v279, %v292
        %v511 = vmul.f32 %v283, %v292
        %v512 = vmul.f32 %v279, %v297
        %v513 = vmul.f32 %v283, %v297
        %v514 = vmul.f32 %v279, %v302
        %v515 = vmul.f32 %v283, %v302
        %v516 = vmul.f32 %v279, %v307
        %v517 = vmul.f32 %v283, %v307
        %v518 = vmul.f32 %v279, %v312
        %v519 = vmul.f32 %v283, %v312
        %v520 = vmul.f32 %v279, %v317
        %v521 = vmul.f32 %v283, %v317
        %v522 = vmul.f32 %v279, %v322
        %v523 = vmul.f32 %v283, %v322
        %v524 = vmul.f32 %v279, %v327
        %v525 = vmul.f32 %v283, %v327
        %v526 = vmul.f32 %v279, %v332
        %v527 = vmul.f32 %v283, %v332
        %v528 = vmul.f32 %v279, %v337
        %v529 = vmul.f32 %v283, %v337
        %v530 = vmul.f32 %v279, %v342
        %v531 = vmul.f32 %v283, %v342
        %v532 = vmul.f32 %v279, %v347
        %v533 = vmul.f32 %v283, %v347
        %v534 = vmul.f32 %v279, %v352
        %v535 = vmul.f32 %v283, %v352
        %v536 = vmul.f32 %v279, %v357
        %v537 = vmul.f32 %v283, %v357
        %v538 = vmul.f32 %v279, %v362
        %v539 = vmul.f32 %v283, %v362
        %v540 = vmul.f32 %v279, %v367
        %v541 = vmul.f32 %v283, %v367
        %v542 = vmul.f32 %v279, %v372
        %v543 = vmul.f32 %v283, %v372
        %v544 = vmul.f32 %v279, %v377
        %v545 = vmul.f32 %v283, %v377
        %v546 = vmul.f32 %v279, %v382
        %v547 = vmul.f32 %v283, %v382
        %v548 = vmul.f32 %v279, %v387
        %v549 = vmul.f32 %v283, %v387
        %v550 = vmul.f32 %v279, %v392
        %v551 = vmul.f32 %v283, %v392
        %v552 = vmul.f32 %v279, %v397
        %v553 = vmul.f32 %v283, %v397
        %v554 = vmul.f32 %v279, %v402
        %v555 = vmul.f32 %v283, %v402
        %v556 = vmul.f32 %v279, %v407
        %v557 = vmul.f32 %v283, %v407
        %v558 = vmul.f32 %v279, %v412
        %v559 = vmul.f32 %v283, %v412
        %v560 = vmul.f32 %v279, %v417
        %v561 = vmul.f32 %v283, %v417
        %v562 = vmul.f32 %v279, %v422
        %v563 = vmul.f32 %v283, %v422
        %v564 = vmul.f32 %v279, %v427
        %v565 = vmul.f32 %v283, %v427
        %v566 = vmul.f32 %v279, %v432
        %v567 = vmul.f32 %v283, %v432
        %v568 = vmul.f32 %v279, %v437
        %v569 = vmul.f32 %v283, %v437
        %v570 = vmul.f32 %v279, %v442
        %v571 = vmul.f32 %v283, %v442
        %v572 = vlaneseq
        %v573 = vshrl.u32 %v572, 7
        %v574 = vsub.s32 1, %v573
        %v575 = vrot.slane %v212, %v574
        %v576 = vlaneseq
        %v577 = vshrl.u32 %v576, 7
        %v578 = vsub.s32 5, %v577
        %v579 = vrot.slane %v212, %v578
        %v580 = vlaneseq
        %v581 = vshrl.u32 %v580, 7
        %v582 = vsub.s32 1, %v581
        %v583 = vrot.slane %v213, %v582
        %v584 = vlaneseq
        %v585 = vshrl.u32 %v584, 7
        %v586 = vsub.s32 5, %v585
        %v587 = vrot.slane %v213, %v586
        %v592 = vlaneseq
        %v593 = vshrl.u32 %v592, 7
        %v594 = vsub.s32 1, %v593
        %v595 = vrot.slane %v575, %v594
        %v596 = vlaneseq
        %v597 = vshrl.u32 %v596, 7
        %v598 = vsub.s32 1, %v597
        %v599 = vrot.slane %v579, %v598
        %v600 = vlaneseq
        %v601 = vshrl.u32 %v600, 7
        %v602 = vsub.s32 1, %v601
        %v603 = vrot.slane %v583, %v602
        %v604 = vlaneseq
        %v605 = vshrl.u32 %v604, 7
        %v606 = vsub.s32 1, %v605
        %v607 = vrot.slane %v587, %v606
        %608 = vset.pattern.permute.xlu0 1
        %609 = vperm.xlu0 %608, %v214
        %v610 = vpop.permute.xlu0 %609
        %612 = vset.pattern.permute.xlu0 1
        %613 = vperm.xlu0 %612, %v215
        %v614 = vpop.permute.xlu0 %613
        %616 = vset.pattern.permute.xlu0 1
        %617 = vperm.xlu0 %616, %v216
        %v618 = vpop.permute.xlu0 %617
        %620 = vset.pattern.permute.xlu0 1
        %621 = vperm.xlu0 %620, %v217
        %v622 = vpop.permute.xlu0 %621
        %624 = vset.pattern.permute.xlu0 1
        %625 = vperm.xlu0 %624, %v218
        %v626 = vpop.permute.xlu0 %625
        %628 = vset.pattern.permute.xlu0 1
        %629 = vperm.xlu0 %628, %v219
        %v630 = vpop.permute.xlu0 %629
        %632 = vset.pattern.permute.xlu0 1
        %633 = vperm.xlu0 %632, %v220
        %v634 = vpop.permute.xlu0 %633
        %636 = vset.pattern.permute.xlu0 1
        %637 = vperm.xlu0 %636, %v221
        %v638 = vpop.permute.xlu0 %637
        %640 = vset.pattern.permute.xlu0 1
        %641 = vperm.xlu0 %640, %v222
        %v642 = vpop.permute.xlu0 %641
        %644 = vset.pattern.permute.xlu0 1
        %645 = vperm.xlu0 %644, %v223
        %v646 = vpop.permute.xlu0 %645
        %648 = vset.pattern.permute.xlu0 1
        %649 = vperm.xlu0 %648, %v224
        %v650 = vpop.permute.xlu0 %649
        %652 = vset.pattern.permute.xlu0 1
        %653 = vperm.xlu0 %652, %v225
        %v654 = vpop.permute.xlu0 %653
        %656 = vset.pattern.permute.xlu0 1
        %657 = vperm.xlu0 %656, %v226
        %v658 = vpop.permute.xlu0 %657
        %660 = vset.pattern.permute.xlu0 1
        %661 = vperm.xlu0 %660, %v227
        %v662 = vpop.permute.xlu0 %661
        %664 = vset.pattern.permute.xlu0 1
        %665 = vperm.xlu0 %664, %v228
        %v666 = vpop.permute.xlu0 %665
        %668 = vset.pattern.permute.xlu0 1
        %669 = vperm.xlu0 %668, %v229
        %v670 = vpop.permute.xlu0 %669
        %672 = vset.pattern.permute.xlu0 1
        %673 = vperm.xlu0 %672, %v230
        %v674 = vpop.permute.xlu0 %673
        %676 = vset.pattern.permute.xlu0 1
        %677 = vperm.xlu0 %676, %v231
        %v678 = vpop.permute.xlu0 %677
        %680 = vset.pattern.permute.xlu0 1
        %681 = vperm.xlu0 %680, %v232
        %v682 = vpop.permute.xlu0 %681
        %684 = vset.pattern.permute.xlu0 1
        %685 = vperm.xlu0 %684, %v233
        %v686 = vpop.permute.xlu0 %685
        %688 = vset.pattern.permute.xlu0 1
        %689 = vperm.xlu0 %688, %v234
        %v690 = vpop.permute.xlu0 %689
        %692 = vset.pattern.permute.xlu0 1
        %693 = vperm.xlu0 %692, %v235
        %v694 = vpop.permute.xlu0 %693
        %696 = vset.pattern.permute.xlu0 1
        %697 = vperm.xlu0 %696, %v236
        %v698 = vpop.permute.xlu0 %697
        %700 = vset.pattern.permute.xlu0 1
        %701 = vperm.xlu0 %700, %v237
        %v702 = vpop.permute.xlu0 %701
        %704 = vset.pattern.permute.xlu0 1
        %705 = vperm.xlu0 %704, %v238
        %v706 = vpop.permute.xlu0 %705
        %708 = vset.pattern.permute.xlu0 1
        %709 = vperm.xlu0 %708, %v239
        %v710 = vpop.permute.xlu0 %709
        %712 = vset.pattern.permute.xlu0 1
        %713 = vperm.xlu0 %712, %v240
        %v714 = vpop.permute.xlu0 %713
        %716 = vset.pattern.permute.xlu0 1
        %717 = vperm.xlu0 %716, %v241
        %v718 = vpop.permute.xlu0 %717
        %720 = vset.pattern.permute.xlu0 1
        %721 = vperm.xlu0 %720, %v242
        %v722 = vpop.permute.xlu0 %721
        %724 = vset.pattern.permute.xlu0 1
        %725 = vperm.xlu0 %724, %v243
        %v726 = vpop.permute.xlu0 %725
        %728 = vset.pattern.permute.xlu0 1
        %729 = vperm.xlu0 %728, %v244
        %v730 = vpop.permute.xlu0 %729
        %732 = vset.pattern.permute.xlu0 1
        %733 = vperm.xlu0 %732, %v245
        %v734 = vpop.permute.xlu0 %733
        %v736 = vmul.f32 %v595, %v610
        %v737 = vmul.f32 %v599, %v610
        %v738 = vmul.f32 %v595, %v614
        %v739 = vmul.f32 %v599, %v614
        %v740 = vmul.f32 %v595, %v618
        %v741 = vmul.f32 %v599, %v618
        %v742 = vmul.f32 %v595, %v622
        %v743 = vmul.f32 %v599, %v622
        %v744 = vmul.f32 %v595, %v626
        %v745 = vmul.f32 %v599, %v626
        %v746 = vmul.f32 %v595, %v630
        %v747 = vmul.f32 %v599, %v630
        %v748 = vmul.f32 %v595, %v634
        %v749 = vmul.f32 %v599, %v634
        %v750 = vmul.f32 %v595, %v638
        %v751 = vmul.f32 %v599, %v638
        %v752 = vmul.f32 %v595, %v642
        %v753 = vmul.f32 %v599, %v642
        %v754 = vmul.f32 %v595, %v646
        %v755 = vmul.f32 %v599, %v646
        %v756 = vmul.f32 %v595, %v650
        %v757 = vmul.f32 %v599, %v650
        %v758 = vmul.f32 %v595, %v654
        %v759 = vmul.f32 %v599, %v654
        %v760 = vmul.f32 %v595, %v658
        %v761 = vmul.f32 %v599, %v658
        %v762 = vmul.f32 %v595, %v662
        %v763 = vmul.f32 %v599, %v662
        %v764 = vmul.f32 %v595, %v666
        %v765 = vmul.f32 %v599, %v666
        %v766 = vmul.f32 %v595, %v670
        %v767 = vmul.f32 %v599, %v670
        %v768 = vmul.f32 %v595, %v674
        %v769 = vmul.f32 %v599, %v674
        %v770 = vmul.f32 %v595, %v678
        %v771 = vmul.f32 %v599, %v678
        %v772 = vmul.f32 %v595, %v682
        %v773 = vmul.f32 %v599, %v682
        %v774 = vmul.f32 %v595, %v686
        %v775 = vmul.f32 %v599, %v686
        %v776 = vmul.f32 %v595, %v690
        %v777 = vmul.f32 %v599, %v690
        %v778 = vmul.f32 %v595, %v694
        %v779 = vmul.f32 %v599, %v694
        %v780 = vmul.f32 %v595, %v698
        %v781 = vmul.f32 %v599, %v698
        %v782 = vmul.f32 %v595, %v702
        %v783 = vmul.f32 %v599, %v702
        %v784 = vmul.f32 %v595, %v706
        %v785 = vmul.f32 %v599, %v706
        %v786 = vmul.f32 %v595, %v710
        %v787 = vmul.f32 %v599, %v710
        %v788 = vmul.f32 %v595, %v714
        %v789 = vmul.f32 %v599, %v714
        %v790 = vmul.f32 %v595, %v718
        %v791 = vmul.f32 %v599, %v718
        %v792 = vmul.f32 %v595, %v722
        %v793 = vmul.f32 %v599, %v722
        %v794 = vmul.f32 %v595, %v726
        %v795 = vmul.f32 %v599, %v726
        %v796 = vmul.f32 %v595, %v730
        %v797 = vmul.f32 %v599, %v730
        %v798 = vmul.f32 %v595, %v734
        %v799 = vmul.f32 %v599, %v734
        %v800 = vmul.f32 %v603, %v610
        %v801 = vmul.f32 %v607, %v610
        %v802 = vmul.f32 %v603, %v614
        %v803 = vmul.f32 %v607, %v614
        %v804 = vmul.f32 %v603, %v618
        %v805 = vmul.f32 %v607, %v618
        %v806 = vmul.f32 %v603, %v622
        %v807 = vmul.f32 %v607, %v622
        %v808 = vmul.f32 %v603, %v626
        %v809 = vmul.f32 %v607, %v626
        %v810 = vmul.f32 %v603, %v630
        %v811 = vmul.f32 %v607, %v630
        %v812 = vmul.f32 %v603, %v634
        %v813 = vmul.f32 %v607, %v634
        %v814 = vmul.f32 %v603, %v638
        %v815 = vmul.f32 %v607, %v638
        %v816 = vmul.f32 %v603, %v642
        %v817 = vmul.f32 %v607, %v642
        %v818 = vmul.f32 %v603, %v646
        %v819 = vmul.f32 %v607, %v646
        %v820 = vmul.f32 %v603, %v650
        %v821 = vmul.f32 %v607, %v650
        %v822 = vmul.f32 %v603, %v654
        %v823 = vmul.f32 %v607, %v654
        %v824 = vmul.f32 %v603, %v658
        %v825 = vmul.f32 %v607, %v658
        %v826 = vmul.f32 %v603, %v662
        %v827 = vmul.f32 %v607, %v662
        %v828 = vmul.f32 %v603, %v666
        %v829 = vmul.f32 %v607, %v666
        %v830 = vmul.f32 %v603, %v670
        %v831 = vmul.f32 %v607, %v670
        %v832 = vmul.f32 %v603, %v674
        %v833 = vmul.f32 %v607, %v674
        %v834 = vmul.f32 %v603, %v678
        %v835 = vmul.f32 %v607, %v678
        %v836 = vmul.f32 %v603, %v682
        %v837 = vmul.f32 %v607, %v682
        %v838 = vmul.f32 %v603, %v686
        %v839 = vmul.f32 %v607, %v686
        %v840 = vmul.f32 %v603, %v690
        %v841 = vmul.f32 %v607, %v690
        %v842 = vmul.f32 %v603, %v694
        %v843 = vmul.f32 %v607, %v694
        %v844 = vmul.f32 %v603, %v698
        %v845 = vmul.f32 %v607, %v698
        %v846 = vmul.f32 %v603, %v702
        %v847 = vmul.f32 %v607, %v702
        %v848 = vmul.f32 %v603, %v706
        %v849 = vmul.f32 %v607, %v706
        %v850 = vmul.f32 %v603, %v710
        %v851 = vmul.f32 %v607, %v710
        %v852 = vmul.f32 %v603, %v714
        %v853 = vmul.f32 %v607, %v714
        %v854 = vmul.f32 %v603, %v718
        %v855 = vmul.f32 %v607, %v718
        %v856 = vmul.f32 %v603, %v722
        %v857 = vmul.f32 %v607, %v722
        %v858 = vmul.f32 %v603, %v726
        %v859 = vmul.f32 %v607, %v726
        %v860 = vmul.f32 %v603, %v730
        %v861 = vmul.f32 %v607, %v730
        %v862 = vmul.f32 %v603, %v734
        %v863 = vmul.f32 %v607, %v734
        %v864 = vadd.f32 %v444, %v736
        %v865 = vadd.f32 %v445, %v737
        %v866 = vadd.f32 %v446, %v738
        %v867 = vadd.f32 %v447, %v739
        %v868 = vadd.f32 %v448, %v740
        %v869 = vadd.f32 %v449, %v741
        %v870 = vadd.f32 %v450, %v742
        %v871 = vadd.f32 %v451, %v743
        %v872 = vadd.f32 %v452, %v744
        %v873 = vadd.f32 %v453, %v745
        %v874 = vadd.f32 %v454, %v746
        %v875 = vadd.f32 %v455, %v747
        %v876 = vadd.f32 %v456, %v748
        %v877 = vadd.f32 %v457, %v749
        %v878 = vadd.f32 %v458, %v750
        %v879 = vadd.f32 %v459, %v751
        %v880 = vadd.f32 %v460, %v752
        %v881 = vadd.f32 %v461, %v753
        %v882 = vadd.f32 %v462, %v754
        %v883 = vadd.f32 %v463, %v755
        %v884 = vadd.f32 %v464, %v756
        %v885 = vadd.f32 %v465, %v757
        %v886 = vadd.f32 %v466, %v758
        %v887 = vadd.f32 %v467, %v759
        %v888 = vadd.f32 %v468, %v760
        %v889 = vadd.f32 %v469, %v761
        %v890 = vadd.f32 %v470, %v762
        %v891 = vadd.f32 %v471, %v763
        %v892 = vadd.f32 %v472, %v764
        %v893 = vadd.f32 %v473, %v765
        %v894 = vadd.f32 %v474, %v766
        %v895 = vadd.f32 %v475, %v767
        %v896 = vadd.f32 %v476, %v768
        %v897 = vadd.f32 %v477, %v769
        %v898 = vadd.f32 %v478, %v770
        %v899 = vadd.f32 %v479, %v771
        %v900 = vadd.f32 %v480, %v772
        %v901 = vadd.f32 %v481, %v773
        %v902 = vadd.f32 %v482, %v774
        %v903 = vadd.f32 %v483, %v775
        %v904 = vadd.f32 %v484, %v776
        %v905 = vadd.f32 %v485, %v777
        %v906 = vadd.f32 %v486, %v778
        %v907 = vadd.f32 %v487, %v779
        %v908 = vadd.f32 %v488, %v780
        %v909 = vadd.f32 %v489, %v781
        %v910 = vadd.f32 %v490, %v782
        %v911 = vadd.f32 %v491, %v783
        %v912 = vadd.f32 %v492, %v784
        %v913 = vadd.f32 %v493, %v785
        %v914 = vadd.f32 %v494, %v786
        %v915 = vadd.f32 %v495, %v787
        %v916 = vadd.f32 %v496, %v788
        %v917 = vadd.f32 %v497, %v789
        %v918 = vadd.f32 %v498, %v790
        %v919 = vadd.f32 %v499, %v791
        %v920 = vadd.f32 %v500, %v792
        %v921 = vadd.f32 %v501, %v793
        %v922 = vadd.f32 %v502, %v794
        %v923 = vadd.f32 %v503, %v795
        %v924 = vadd.f32 %v504, %v796
        %v925 = vadd.f32 %v505, %v797
        %v926 = vadd.f32 %v506, %v798
        %v927 = vadd.f32 %v507, %v799
        %v928 = vadd.f32 %v508, %v800
        %v929 = vadd.f32 %v509, %v801
        %v930 = vadd.f32 %v510, %v802
        %v931 = vadd.f32 %v511, %v803
        %v932 = vadd.f32 %v512, %v804
        %v933 = vadd.f32 %v513, %v805
        %v934 = vadd.f32 %v514, %v806
        %v935 = vadd.f32 %v515, %v807
        %v936 = vadd.f32 %v516, %v808
        %v937 = vadd.f32 %v517, %v809
        %v938 = vadd.f32 %v518, %v810
        %v939 = vadd.f32 %v519, %v811
        %v940 = vadd.f32 %v520, %v812
        %v941 = vadd.f32 %v521, %v813
        %v942 = vadd.f32 %v522, %v814
        %v943 = vadd.f32 %v523, %v815
        %v944 = vadd.f32 %v524, %v816
        %v945 = vadd.f32 %v525, %v817
        %v946 = vadd.f32 %v526, %v818
        %v947 = vadd.f32 %v527, %v819
        %v948 = vadd.f32 %v528, %v820
        %v949 = vadd.f32 %v529, %v821
        %v950 = vadd.f32 %v530, %v822
        %v951 = vadd.f32 %v531, %v823
        %v952 = vadd.f32 %v532, %v824
        %v953 = vadd.f32 %v533, %v825
        %v954 = vadd.f32 %v534, %v826
        %v955 = vadd.f32 %v535, %v827
        %v956 = vadd.f32 %v536, %v828
        %v957 = vadd.f32 %v537, %v829
        %v958 = vadd.f32 %v538, %v830
        %v959 = vadd.f32 %v539, %v831
        %v960 = vadd.f32 %v540, %v832
        %v961 = vadd.f32 %v541, %v833
        %v962 = vadd.f32 %v542, %v834
        %v963 = vadd.f32 %v543, %v835
        %v964 = vadd.f32 %v544, %v836
        %v965 = vadd.f32 %v545, %v837
        %v966 = vadd.f32 %v546, %v838
        %v967 = vadd.f32 %v547, %v839
        %v968 = vadd.f32 %v548, %v840
        %v969 = vadd.f32 %v549, %v841
        %v970 = vadd.f32 %v550, %v842
        %v971 = vadd.f32 %v551, %v843
        %v972 = vadd.f32 %v552, %v844
        %v973 = vadd.f32 %v553, %v845
        %v974 = vadd.f32 %v554, %v846
        %v975 = vadd.f32 %v555, %v847
        %v976 = vadd.f32 %v556, %v848
        %v977 = vadd.f32 %v557, %v849
        %v978 = vadd.f32 %v558, %v850
        %v979 = vadd.f32 %v559, %v851
        %v980 = vadd.f32 %v560, %v852
        %v981 = vadd.f32 %v561, %v853
        %v982 = vadd.f32 %v562, %v854
        %v983 = vadd.f32 %v563, %v855
        %v984 = vadd.f32 %v564, %v856
        %v985 = vadd.f32 %v565, %v857
        %v986 = vadd.f32 %v566, %v858
        %v987 = vadd.f32 %v567, %v859
        %v988 = vadd.f32 %v568, %v860
        %v989 = vadd.f32 %v569, %v861
        %v990 = vadd.f32 %v570, %v862
        %v991 = vadd.f32 %v571, %v863
        %v992 = vlaneseq
        %v993 = vshrl.u32 %v992, 7
        %v994 = vsub.s32 2, %v993
        %v995 = vrot.slane %v212, %v994
        %v996 = vlaneseq
        %v997 = vshrl.u32 %v996, 7
        %v998 = vsub.s32 6, %v997
        %v999 = vrot.slane %v212, %v998
        %v1000 = vlaneseq
        %v1001 = vshrl.u32 %v1000, 7
        %v1002 = vsub.s32 2, %v1001
        %v1003 = vrot.slane %v213, %v1002
        %v1004 = vlaneseq
        %v1005 = vshrl.u32 %v1004, 7
        %v1006 = vsub.s32 6, %v1005
        %v1007 = vrot.slane %v213, %v1006
        %v1012 = vlaneseq
        %v1013 = vshrl.u32 %v1012, 7
        %v1014 = vsub.s32 2, %v1013
        %v1015 = vrot.slane %v995, %v1014
        %v1016 = vlaneseq
        %v1017 = vshrl.u32 %v1016, 7
        %v1018 = vsub.s32 2, %v1017
        %v1019 = vrot.slane %v999, %v1018
        %v1020 = vlaneseq
        %v1021 = vshrl.u32 %v1020, 7
        %v1022 = vsub.s32 2, %v1021
        %v1023 = vrot.slane %v1003, %v1022
        %v1024 = vlaneseq
        %v1025 = vshrl.u32 %v1024, 7
        %v1026 = vsub.s32 2, %v1025
        %v1027 = vrot.slane %v1007, %v1026
        %1028 = vset.pattern.permute.xlu0 2
        %1029 = vperm.xlu0 %1028, %v214
        %v1030 = vpop.permute.xlu0 %1029
        %1032 = vset.pattern.permute.xlu0 2
        %1033 = vperm.xlu0 %1032, %v215
        %v1034 = vpop.permute.xlu0 %1033
        %1036 = vset.pattern.permute.xlu0 2
        %1037 = vperm.xlu0 %1036, %v216
        %v1038 = vpop.permute.xlu0 %1037
        %1040 = vset.pattern.permute.xlu0 2
        %1041 = vperm.xlu0 %1040, %v217
        %v1042 = vpop.permute.xlu0 %1041
        %1044 = vset.pattern.permute.xlu0 2
        %1045 = vperm.xlu0 %1044, %v218
        %v1046 = vpop.permute.xlu0 %1045
        %1048 = vset.pattern.permute.xlu0 2
        %1049 = vperm.xlu0 %1048, %v219
        %v1050 = vpop.permute.xlu0 %1049
        %1052 = vset.pattern.permute.xlu0 2
        %1053 = vperm.xlu0 %1052, %v220
        %v1054 = vpop.permute.xlu0 %1053
        %1056 = vset.pattern.permute.xlu0 2
        %1057 = vperm.xlu0 %1056, %v221
        %v1058 = vpop.permute.xlu0 %1057
        %1060 = vset.pattern.permute.xlu0 2
        %1061 = vperm.xlu0 %1060, %v222
        %v1062 = vpop.permute.xlu0 %1061
        %1064 = vset.pattern.permute.xlu0 2
        %1065 = vperm.xlu0 %1064, %v223
        %v1066 = vpop.permute.xlu0 %1065
        %1068 = vset.pattern.permute.xlu0 2
        %1069 = vperm.xlu0 %1068, %v224
        %v1070 = vpop.permute.xlu0 %1069
        %1072 = vset.pattern.permute.xlu0 2
        %1073 = vperm.xlu0 %1072, %v225
        %v1074 = vpop.permute.xlu0 %1073
        %1076 = vset.pattern.permute.xlu0 2
        %1077 = vperm.xlu0 %1076, %v226
        %v1078 = vpop.permute.xlu0 %1077
        %1080 = vset.pattern.permute.xlu0 2
        %1081 = vperm.xlu0 %1080, %v227
        %v1082 = vpop.permute.xlu0 %1081
        %1084 = vset.pattern.permute.xlu0 2
        %1085 = vperm.xlu0 %1084, %v228
        %v1086 = vpop.permute.xlu0 %1085
        %1088 = vset.pattern.permute.xlu0 2
        %1089 = vperm.xlu0 %1088, %v229
        %v1090 = vpop.permute.xlu0 %1089
        %1092 = vset.pattern.permute.xlu0 2
        %1093 = vperm.xlu0 %1092, %v230
        %v1094 = vpop.permute.xlu0 %1093
        %1096 = vset.pattern.permute.xlu0 2
        %1097 = vperm.xlu0 %1096, %v231
        %v1098 = vpop.permute.xlu0 %1097
        %1100 = vset.pattern.permute.xlu0 2
        %1101 = vperm.xlu0 %1100, %v232
        %v1102 = vpop.permute.xlu0 %1101
        %1104 = vset.pattern.permute.xlu0 2
        %1105 = vperm.xlu0 %1104, %v233
        %v1106 = vpop.permute.xlu0 %1105
        %1108 = vset.pattern.permute.xlu0 2
        %1109 = vperm.xlu0 %1108, %v234
        %v1110 = vpop.permute.xlu0 %1109
        %1112 = vset.pattern.permute.xlu0 2
        %1113 = vperm.xlu0 %1112, %v235
        %v1114 = vpop.permute.xlu0 %1113
        %1116 = vset.pattern.permute.xlu0 2
        %1117 = vperm.xlu0 %1116, %v236
        %v1118 = vpop.permute.xlu0 %1117
        %1120 = vset.pattern.permute.xlu0 2
        %1121 = vperm.xlu0 %1120, %v237
        %v1122 = vpop.permute.xlu0 %1121
        %1124 = vset.pattern.permute.xlu0 2
        %1125 = vperm.xlu0 %1124, %v238
        %v1126 = vpop.permute.xlu0 %1125
        %1128 = vset.pattern.permute.xlu0 2
        %1129 = vperm.xlu0 %1128, %v239
        %v1130 = vpop.permute.xlu0 %1129
        %1132 = vset.pattern.permute.xlu0 2
        %1133 = vperm.xlu0 %1132, %v240
        %v1134 = vpop.permute.xlu0 %1133
        %1136 = vset.pattern.permute.xlu0 2
        %1137 = vperm.xlu0 %1136, %v241
        %v1138 = vpop.permute.xlu0 %1137
        %1140 = vset.pattern.permute.xlu0 2
        %1141 = vperm.xlu0 %1140, %v242
        %v1142 = vpop.permute.xlu0 %1141
        %1144 = vset.pattern.permute.xlu0 2
        %1145 = vperm.xlu0 %1144, %v243
        %v1146 = vpop.permute.xlu0 %1145
        %1148 = vset.pattern.permute.xlu0 2
        %1149 = vperm.xlu0 %1148, %v244
        %v1150 = vpop.permute.xlu0 %1149
        %1152 = vset.pattern.permute.xlu0 2
        %1153 = vperm.xlu0 %1152, %v245
        %v1154 = vpop.permute.xlu0 %1153
        %v1156 = vmul.f32 %v1015, %v1030
        %v1157 = vmul.f32 %v1019, %v1030
        %v1158 = vmul.f32 %v1015, %v1034
        %v1159 = vmul.f32 %v1019, %v1034
        %v1160 = vmul.f32 %v1015, %v1038
        %v1161 = vmul.f32 %v1019, %v1038
        %v1162 = vmul.f32 %v1015, %v1042
        %v1163 = vmul.f32 %v1019, %v1042
        %v1164 = vmul.f32 %v1015, %v1046
        %v1165 = vmul.f32 %v1019, %v1046
        %v1166 = vmul.f32 %v1015, %v1050
        %v1167 = vmul.f32 %v1019, %v1050
        %v1168 = vmul.f32 %v1015, %v1054
        %v1169 = vmul.f32 %v1019, %v1054
        %v1170 = vmul.f32 %v1015, %v1058
        %v1171 = vmul.f32 %v1019, %v1058
        %v1172 = vmul.f32 %v1015, %v1062
        %v1173 = vmul.f32 %v1019, %v1062
        %v1174 = vmul.f32 %v1015, %v1066
        %v1175 = vmul.f32 %v1019, %v1066
        %v1176 = vmul.f32 %v1015, %v1070
        %v1177 = vmul.f32 %v1019, %v1070
        %v1178 = vmul.f32 %v1015, %v1074
        %v1179 = vmul.f32 %v1019, %v1074
        %v1180 = vmul.f32 %v1015, %v1078
        %v1181 = vmul.f32 %v1019, %v1078
        %v1182 = vmul.f32 %v1015, %v1082
        %v1183 = vmul.f32 %v1019, %v1082
        %v1184 = vmul.f32 %v1015, %v1086
        %v1185 = vmul.f32 %v1019, %v1086
        %v1186 = vmul.f32 %v1015, %v1090
        %v1187 = vmul.f32 %v1019, %v1090
        %v1188 = vmul.f32 %v1015, %v1094
        %v1189 = vmul.f32 %v1019, %v1094
        %v1190 = vmul.f32 %v1015, %v1098
        %v1191 = vmul.f32 %v1019, %v1098
        %v1192 = vmul.f32 %v1015, %v1102
        %v1193 = vmul.f32 %v1019, %v1102
        %v1194 = vmul.f32 %v1015, %v1106
        %v1195 = vmul.f32 %v1019, %v1106
        %v1196 = vmul.f32 %v1015, %v1110
        %v1197 = vmul.f32 %v1019, %v1110
        %v1198 = vmul.f32 %v1015, %v1114
        %v1199 = vmul.f32 %v1019, %v1114
        %v1200 = vmul.f32 %v1015, %v1118
        %v1201 = vmul.f32 %v1019, %v1118
        %v1202 = vmul.f32 %v1015, %v1122
        %v1203 = vmul.f32 %v1019, %v1122
        %v1204 = vmul.f32 %v1015, %v1126
        %v1205 = vmul.f32 %v1019, %v1126
        %v1206 = vmul.f32 %v1015, %v1130
        %v1207 = vmul.f32 %v1019, %v1130
        %v1208 = vmul.f32 %v1015, %v1134
        %v1209 = vmul.f32 %v1019, %v1134
        %v1210 = vmul.f32 %v1015, %v1138
        %v1211 = vmul.f32 %v1019, %v1138
        %v1212 = vmul.f32 %v1015, %v1142
        %v1213 = vmul.f32 %v1019, %v1142
        %v1214 = vmul.f32 %v1015, %v1146
        %v1215 = vmul.f32 %v1019, %v1146
        %v1216 = vmul.f32 %v1015, %v1150
        %v1217 = vmul.f32 %v1019, %v1150
        %v1218 = vmul.f32 %v1015, %v1154
        %v1219 = vmul.f32 %v1019, %v1154
        %v1220 = vmul.f32 %v1023, %v1030
        %v1221 = vmul.f32 %v1027, %v1030
        %v1222 = vmul.f32 %v1023, %v1034
        %v1223 = vmul.f32 %v1027, %v1034
        %v1224 = vmul.f32 %v1023, %v1038
        %v1225 = vmul.f32 %v1027, %v1038
        %v1226 = vmul.f32 %v1023, %v1042
        %v1227 = vmul.f32 %v1027, %v1042
        %v1228 = vmul.f32 %v1023, %v1046
        %v1229 = vmul.f32 %v1027, %v1046
        %v1230 = vmul.f32 %v1023, %v1050
        %v1231 = vmul.f32 %v1027, %v1050
        %v1232 = vmul.f32 %v1023, %v1054
        %v1233 = vmul.f32 %v1027, %v1054
        %v1234 = vmul.f32 %v1023, %v1058
        %v1235 = vmul.f32 %v1027, %v1058
        %v1236 = vmul.f32 %v1023, %v1062
        %v1237 = vmul.f32 %v1027, %v1062
        %v1238 = vmul.f32 %v1023, %v1066
        %v1239 = vmul.f32 %v1027, %v1066
        %v1240 = vmul.f32 %v1023, %v1070
        %v1241 = vmul.f32 %v1027, %v1070
        %v1242 = vmul.f32 %v1023, %v1074
        %v1243 = vmul.f32 %v1027, %v1074
        %v1244 = vmul.f32 %v1023, %v1078
        %v1245 = vmul.f32 %v1027, %v1078
        %v1246 = vmul.f32 %v1023, %v1082
        %v1247 = vmul.f32 %v1027, %v1082
        %v1248 = vmul.f32 %v1023, %v1086
        %v1249 = vmul.f32 %v1027, %v1086
        %v1250 = vmul.f32 %v1023, %v1090
        %v1251 = vmul.f32 %v1027, %v1090
        %v1252 = vmul.f32 %v1023, %v1094
        %v1253 = vmul.f32 %v1027, %v1094
        %v1254 = vmul.f32 %v1023, %v1098
        %v1255 = vmul.f32 %v1027, %v1098
        %v1256 = vmul.f32 %v1023, %v1102
        %v1257 = vmul.f32 %v1027, %v1102
        %v1258 = vmul.f32 %v1023, %v1106
        %v1259 = vmul.f32 %v1027, %v1106
        %v1260 = vmul.f32 %v1023, %v1110
        %v1261 = vmul.f32 %v1027, %v1110
        %v1262 = vmul.f32 %v1023, %v1114
        %v1263 = vmul.f32 %v1027, %v1114
        %v1264 = vmul.f32 %v1023, %v1118
        %v1265 = vmul.f32 %v1027, %v1118
        %v1266 = vmul.f32 %v1023, %v1122
        %v1267 = vmul.f32 %v1027, %v1122
        %v1268 = vmul.f32 %v1023, %v1126
        %v1269 = vmul.f32 %v1027, %v1126
        %v1270 = vmul.f32 %v1023, %v1130
        %v1271 = vmul.f32 %v1027, %v1130
        %v1272 = vmul.f32 %v1023, %v1134
        %v1273 = vmul.f32 %v1027, %v1134
        %v1274 = vmul.f32 %v1023, %v1138
        %v1275 = vmul.f32 %v1027, %v1138
        %v1276 = vmul.f32 %v1023, %v1142
        %v1277 = vmul.f32 %v1027, %v1142
        %v1278 = vmul.f32 %v1023, %v1146
        %v1279 = vmul.f32 %v1027, %v1146
        %v1280 = vmul.f32 %v1023, %v1150
        %v1281 = vmul.f32 %v1027, %v1150
        %v1282 = vmul.f32 %v1023, %v1154
        %v1283 = vmul.f32 %v1027, %v1154
        %v1284 = vadd.f32 %v864, %v1156
        %v1285 = vadd.f32 %v865, %v1157
        %v1286 = vadd.f32 %v866, %v1158
        %v1287 = vadd.f32 %v867, %v1159
        %v1288 = vadd.f32 %v868, %v1160
        %v1289 = vadd.f32 %v869, %v1161
        %v1290 = vadd.f32 %v870, %v1162
        %v1291 = vadd.f32 %v871, %v1163
        %v1292 = vadd.f32 %v872, %v1164
        %v1293 = vadd.f32 %v873, %v1165
        %v1294 = vadd.f32 %v874, %v1166
        %v1295 = vadd.f32 %v875, %v1167
        %v1296 = vadd.f32 %v876, %v1168
        %v1297 = vadd.f32 %v877, %v1169
        %v1298 = vadd.f32 %v878, %v1170
        %v1299 = vadd.f32 %v879, %v1171
        %v1300 = vadd.f32 %v880, %v1172
        %v1301 = vadd.f32 %v881, %v1173
        %v1302 = vadd.f32 %v882, %v1174
        %v1303 = vadd.f32 %v883, %v1175
        %v1304 = vadd.f32 %v884, %v1176
        %v1305 = vadd.f32 %v885, %v1177
        %v1306 = vadd.f32 %v886, %v1178
        %v1307 = vadd.f32 %v887, %v1179
        %v1308 = vadd.f32 %v888, %v1180
        %v1309 = vadd.f32 %v889, %v1181
        %v1310 = vadd.f32 %v890, %v1182
        %v1311 = vadd.f32 %v891, %v1183
        %v1312 = vadd.f32 %v892, %v1184
        %v1313 = vadd.f32 %v893, %v1185
        %v1314 = vadd.f32 %v894, %v1186
        %v1315 = vadd.f32 %v895, %v1187
        %v1316 = vadd.f32 %v896, %v1188
        %v1317 = vadd.f32 %v897, %v1189
        %v1318 = vadd.f32 %v898, %v1190
        %v1319 = vadd.f32 %v899, %v1191
        %v1320 = vadd.f32 %v900, %v1192
        %v1321 = vadd.f32 %v901, %v1193
        %v1322 = vadd.f32 %v902, %v1194
        %v1323 = vadd.f32 %v903, %v1195
        %v1324 = vadd.f32 %v904, %v1196
        %v1325 = vadd.f32 %v905, %v1197
        %v1326 = vadd.f32 %v906, %v1198
        %v1327 = vadd.f32 %v907, %v1199
        %v1328 = vadd.f32 %v908, %v1200
        %v1329 = vadd.f32 %v909, %v1201
        %v1330 = vadd.f32 %v910, %v1202
        %v1331 = vadd.f32 %v911, %v1203
        %v1332 = vadd.f32 %v912, %v1204
        %v1333 = vadd.f32 %v913, %v1205
        %v1334 = vadd.f32 %v914, %v1206
        %v1335 = vadd.f32 %v915, %v1207
        %v1336 = vadd.f32 %v916, %v1208
        %v1337 = vadd.f32 %v917, %v1209
        %v1338 = vadd.f32 %v918, %v1210
        %v1339 = vadd.f32 %v919, %v1211
        %v1340 = vadd.f32 %v920, %v1212
        %v1341 = vadd.f32 %v921, %v1213
        %v1342 = vadd.f32 %v922, %v1214
        %v1343 = vadd.f32 %v923, %v1215
        %v1344 = vadd.f32 %v924, %v1216
        %v1345 = vadd.f32 %v925, %v1217
        %v1346 = vadd.f32 %v926, %v1218
        %v1347 = vadd.f32 %v927, %v1219
        %v1348 = vadd.f32 %v928, %v1220
        %v1349 = vadd.f32 %v929, %v1221
        %v1350 = vadd.f32 %v930, %v1222
        %v1351 = vadd.f32 %v931, %v1223
        %v1352 = vadd.f32 %v932, %v1224
        %v1353 = vadd.f32 %v933, %v1225
        %v1354 = vadd.f32 %v934, %v1226
        %v1355 = vadd.f32 %v935, %v1227
        %v1356 = vadd.f32 %v936, %v1228
        %v1357 = vadd.f32 %v937, %v1229
        %v1358 = vadd.f32 %v938, %v1230
        %v1359 = vadd.f32 %v939, %v1231
        %v1360 = vadd.f32 %v940, %v1232
        %v1361 = vadd.f32 %v941, %v1233
        %v1362 = vadd.f32 %v942, %v1234
        %v1363 = vadd.f32 %v943, %v1235
        %v1364 = vadd.f32 %v944, %v1236
        %v1365 = vadd.f32 %v945, %v1237
        %v1366 = vadd.f32 %v946, %v1238
        %v1367 = vadd.f32 %v947, %v1239
        %v1368 = vadd.f32 %v948, %v1240
        %v1369 = vadd.f32 %v949, %v1241
        %v1370 = vadd.f32 %v950, %v1242
        %v1371 = vadd.f32 %v951, %v1243
        %v1372 = vadd.f32 %v952, %v1244
        %v1373 = vadd.f32 %v953, %v1245
        %v1374 = vadd.f32 %v954, %v1246
        %v1375 = vadd.f32 %v955, %v1247
        %v1376 = vadd.f32 %v956, %v1248
        %v1377 = vadd.f32 %v957, %v1249
        %v1378 = vadd.f32 %v958, %v1250
        %v1379 = vadd.f32 %v959, %v1251
        %v1380 = vadd.f32 %v960, %v1252
        %v1381 = vadd.f32 %v961, %v1253
        %v1382 = vadd.f32 %v962, %v1254
        %v1383 = vadd.f32 %v963, %v1255
        %v1384 = vadd.f32 %v964, %v1256
        %v1385 = vadd.f32 %v965, %v1257
        %v1386 = vadd.f32 %v966, %v1258
        %v1387 = vadd.f32 %v967, %v1259
        %v1388 = vadd.f32 %v968, %v1260
        %v1389 = vadd.f32 %v969, %v1261
        %v1390 = vadd.f32 %v970, %v1262
        %v1391 = vadd.f32 %v971, %v1263
        %v1392 = vadd.f32 %v972, %v1264
        %v1393 = vadd.f32 %v973, %v1265
        %v1394 = vadd.f32 %v974, %v1266
        %v1395 = vadd.f32 %v975, %v1267
        %v1396 = vadd.f32 %v976, %v1268
        %v1397 = vadd.f32 %v977, %v1269
        %v1398 = vadd.f32 %v978, %v1270
        %v1399 = vadd.f32 %v979, %v1271
        %v1400 = vadd.f32 %v980, %v1272
        %v1401 = vadd.f32 %v981, %v1273
        %v1402 = vadd.f32 %v982, %v1274
        %v1403 = vadd.f32 %v983, %v1275
        %v1404 = vadd.f32 %v984, %v1276
        %v1405 = vadd.f32 %v985, %v1277
        %v1406 = vadd.f32 %v986, %v1278
        %v1407 = vadd.f32 %v987, %v1279
        %v1408 = vadd.f32 %v988, %v1280
        %v1409 = vadd.f32 %v989, %v1281
        %v1410 = vadd.f32 %v990, %v1282
        %v1411 = vadd.f32 %v991, %v1283
        %v1412 = vlaneseq
        %v1413 = vshrl.u32 %v1412, 7
        %v1414 = vsub.s32 3, %v1413
        %v1415 = vrot.slane %v212, %v1414
        %v1416 = vlaneseq
        %v1417 = vshrl.u32 %v1416, 7
        %v1418 = vsub.s32 7, %v1417
        %v1419 = vrot.slane %v212, %v1418
        %v1420 = vlaneseq
        %v1421 = vshrl.u32 %v1420, 7
        %v1422 = vsub.s32 3, %v1421
        %v1423 = vrot.slane %v213, %v1422
        %v1424 = vlaneseq
        %v1425 = vshrl.u32 %v1424, 7
        %v1426 = vsub.s32 7, %v1425
        %v1427 = vrot.slane %v213, %v1426
        %v1432 = vlaneseq
        %v1433 = vshrl.u32 %v1432, 7
        %v1434 = vsub.s32 3, %v1433
        %v1435 = vrot.slane %v1415, %v1434
        %v1436 = vlaneseq
        %v1437 = vshrl.u32 %v1436, 7
        %v1438 = vsub.s32 3, %v1437
        %v1439 = vrot.slane %v1419, %v1438
        %v1440 = vlaneseq
        %v1441 = vshrl.u32 %v1440, 7
        %v1442 = vsub.s32 3, %v1441
        %v1443 = vrot.slane %v1423, %v1442
        %v1444 = vlaneseq
        %v1445 = vshrl.u32 %v1444, 7
        %v1446 = vsub.s32 3, %v1445
        %v1447 = vrot.slane %v1427, %v1446
        %1448 = vset.pattern.permute.xlu0 3
        %1449 = vperm.xlu0 %1448, %v214
        %v1450 = vpop.permute.xlu0 %1449
        %1452 = vset.pattern.permute.xlu0 3
        %1453 = vperm.xlu0 %1452, %v215
        %v1454 = vpop.permute.xlu0 %1453
        %1456 = vset.pattern.permute.xlu0 3
        %1457 = vperm.xlu0 %1456, %v216
        %v1458 = vpop.permute.xlu0 %1457
        %1460 = vset.pattern.permute.xlu0 3
        %1461 = vperm.xlu0 %1460, %v217
        %v1462 = vpop.permute.xlu0 %1461
        %1464 = vset.pattern.permute.xlu0 3
        %1465 = vperm.xlu0 %1464, %v218
        %v1466 = vpop.permute.xlu0 %1465
        %1468 = vset.pattern.permute.xlu0 3
        %1469 = vperm.xlu0 %1468, %v219
        %v1470 = vpop.permute.xlu0 %1469
        %1472 = vset.pattern.permute.xlu0 3
        %1473 = vperm.xlu0 %1472, %v220
        %v1474 = vpop.permute.xlu0 %1473
        %1476 = vset.pattern.permute.xlu0 3
        %1477 = vperm.xlu0 %1476, %v221
        %v1478 = vpop.permute.xlu0 %1477
        %1480 = vset.pattern.permute.xlu0 3
        %1481 = vperm.xlu0 %1480, %v222
        %v1482 = vpop.permute.xlu0 %1481
        %1484 = vset.pattern.permute.xlu0 3
        %1485 = vperm.xlu0 %1484, %v223
        %v1486 = vpop.permute.xlu0 %1485
        %1488 = vset.pattern.permute.xlu0 3
        %1489 = vperm.xlu0 %1488, %v224
        %v1490 = vpop.permute.xlu0 %1489
        %1492 = vset.pattern.permute.xlu0 3
        %1493 = vperm.xlu0 %1492, %v225
        %v1494 = vpop.permute.xlu0 %1493
        %1496 = vset.pattern.permute.xlu0 3
        %1497 = vperm.xlu0 %1496, %v226
        %v1498 = vpop.permute.xlu0 %1497
        %1500 = vset.pattern.permute.xlu0 3
        %1501 = vperm.xlu0 %1500, %v227
        %v1502 = vpop.permute.xlu0 %1501
        %1504 = vset.pattern.permute.xlu0 3
        %1505 = vperm.xlu0 %1504, %v228
        %v1506 = vpop.permute.xlu0 %1505
        %1508 = vset.pattern.permute.xlu0 3
        %1509 = vperm.xlu0 %1508, %v229
        %v1510 = vpop.permute.xlu0 %1509
        %1512 = vset.pattern.permute.xlu0 3
        %1513 = vperm.xlu0 %1512, %v230
        %v1514 = vpop.permute.xlu0 %1513
        %1516 = vset.pattern.permute.xlu0 3
        %1517 = vperm.xlu0 %1516, %v231
        %v1518 = vpop.permute.xlu0 %1517
        %1520 = vset.pattern.permute.xlu0 3
        %1521 = vperm.xlu0 %1520, %v232
        %v1522 = vpop.permute.xlu0 %1521
        %1524 = vset.pattern.permute.xlu0 3
        %1525 = vperm.xlu0 %1524, %v233
        %v1526 = vpop.permute.xlu0 %1525
        %1528 = vset.pattern.permute.xlu0 3
        %1529 = vperm.xlu0 %1528, %v234
        %v1530 = vpop.permute.xlu0 %1529
        %1532 = vset.pattern.permute.xlu0 3
        %1533 = vperm.xlu0 %1532, %v235
        %v1534 = vpop.permute.xlu0 %1533
        %1536 = vset.pattern.permute.xlu0 3
        %1537 = vperm.xlu0 %1536, %v236
        %v1538 = vpop.permute.xlu0 %1537
        %1540 = vset.pattern.permute.xlu0 3
        %1541 = vperm.xlu0 %1540, %v237
        %v1542 = vpop.permute.xlu0 %1541
        %1544 = vset.pattern.permute.xlu0 3
        %1545 = vperm.xlu0 %1544, %v238
        %v1546 = vpop.permute.xlu0 %1545
        %1548 = vset.pattern.permute.xlu0 3
        %1549 = vperm.xlu0 %1548, %v239
        %v1550 = vpop.permute.xlu0 %1549
        %1552 = vset.pattern.permute.xlu0 3
        %1553 = vperm.xlu0 %1552, %v240
        %v1554 = vpop.permute.xlu0 %1553
        %1556 = vset.pattern.permute.xlu0 3
        %1557 = vperm.xlu0 %1556, %v241
        %v1558 = vpop.permute.xlu0 %1557
        %1560 = vset.pattern.permute.xlu0 3
        %1561 = vperm.xlu0 %1560, %v242
        %v1562 = vpop.permute.xlu0 %1561
        %1564 = vset.pattern.permute.xlu0 3
        %1565 = vperm.xlu0 %1564, %v243
        %v1566 = vpop.permute.xlu0 %1565
        %1568 = vset.pattern.permute.xlu0 3
        %1569 = vperm.xlu0 %1568, %v244
        %v1570 = vpop.permute.xlu0 %1569
        %1572 = vset.pattern.permute.xlu0 3
        %1573 = vperm.xlu0 %1572, %v245
        %v1574 = vpop.permute.xlu0 %1573
        %v1576 = vmul.f32 %v1435, %v1450
        %v1577 = vmul.f32 %v1439, %v1450
        %v1578 = vmul.f32 %v1435, %v1454
        %v1579 = vmul.f32 %v1439, %v1454
        %v1580 = vmul.f32 %v1435, %v1458
        %v1581 = vmul.f32 %v1439, %v1458
        %v1582 = vmul.f32 %v1435, %v1462
        %v1583 = vmul.f32 %v1439, %v1462
        %v1584 = vmul.f32 %v1435, %v1466
        %v1585 = vmul.f32 %v1439, %v1466
        %v1586 = vmul.f32 %v1435, %v1470
        %v1587 = vmul.f32 %v1439, %v1470
        %v1588 = vmul.f32 %v1435, %v1474
        %v1589 = vmul.f32 %v1439, %v1474
        %v1590 = vmul.f32 %v1435, %v1478
        %v1591 = vmul.f32 %v1439, %v1478
        %v1592 = vmul.f32 %v1435, %v1482
        %v1593 = vmul.f32 %v1439, %v1482
        %v1594 = vmul.f32 %v1435, %v1486
        %v1595 = vmul.f32 %v1439, %v1486
        %v1596 = vmul.f32 %v1435, %v1490
        %v1597 = vmul.f32 %v1439, %v1490
        %v1598 = vmul.f32 %v1435, %v1494
        %v1599 = vmul.f32 %v1439, %v1494
        %v1600 = vmul.f32 %v1435, %v1498
        %v1601 = vmul.f32 %v1439, %v1498
        %v1602 = vmul.f32 %v1435, %v1502
        %v1603 = vmul.f32 %v1439, %v1502
        %v1604 = vmul.f32 %v1435, %v1506
        %v1605 = vmul.f32 %v1439, %v1506
        %v1606 = vmul.f32 %v1435, %v1510
        %v1607 = vmul.f32 %v1439, %v1510
        %v1608 = vmul.f32 %v1435, %v1514
        %v1609 = vmul.f32 %v1439, %v1514
        %v1610 = vmul.f32 %v1435, %v1518
        %v1611 = vmul.f32 %v1439, %v1518
        %v1612 = vmul.f32 %v1435, %v1522
        %v1613 = vmul.f32 %v1439, %v1522
        %v1614 = vmul.f32 %v1435, %v1526
        %v1615 = vmul.f32 %v1439, %v1526
        %v1616 = vmul.f32 %v1435, %v1530
        %v1617 = vmul.f32 %v1439, %v1530
        %v1618 = vmul.f32 %v1435, %v1534
        %v1619 = vmul.f32 %v1439, %v1534
        %v1620 = vmul.f32 %v1435, %v1538
        %v1621 = vmul.f32 %v1439, %v1538
        %v1622 = vmul.f32 %v1435, %v1542
        %v1623 = vmul.f32 %v1439, %v1542
        %v1624 = vmul.f32 %v1435, %v1546
        %v1625 = vmul.f32 %v1439, %v1546
        %v1626 = vmul.f32 %v1435, %v1550
        %v1627 = vmul.f32 %v1439, %v1550
        %v1628 = vmul.f32 %v1435, %v1554
        %v1629 = vmul.f32 %v1439, %v1554
        %v1630 = vmul.f32 %v1435, %v1558
        %v1631 = vmul.f32 %v1439, %v1558
        %v1632 = vmul.f32 %v1435, %v1562
        %v1633 = vmul.f32 %v1439, %v1562
        %v1634 = vmul.f32 %v1435, %v1566
        %v1635 = vmul.f32 %v1439, %v1566
        %v1636 = vmul.f32 %v1435, %v1570
        %v1637 = vmul.f32 %v1439, %v1570
        %v1638 = vmul.f32 %v1435, %v1574
        %v1639 = vmul.f32 %v1439, %v1574
        %v1640 = vmul.f32 %v1443, %v1450
        %v1641 = vmul.f32 %v1447, %v1450
        %v1642 = vmul.f32 %v1443, %v1454
        %v1643 = vmul.f32 %v1447, %v1454
        %v1644 = vmul.f32 %v1443, %v1458
        %v1645 = vmul.f32 %v1447, %v1458
        %v1646 = vmul.f32 %v1443, %v1462
        %v1647 = vmul.f32 %v1447, %v1462
        %v1648 = vmul.f32 %v1443, %v1466
        %v1649 = vmul.f32 %v1447, %v1466
        %v1650 = vmul.f32 %v1443, %v1470
        %v1651 = vmul.f32 %v1447, %v1470
        %v1652 = vmul.f32 %v1443, %v1474
        %v1653 = vmul.f32 %v1447, %v1474
        %v1654 = vmul.f32 %v1443, %v1478
        %v1655 = vmul.f32 %v1447, %v1478
        %v1656 = vmul.f32 %v1443, %v1482
        %v1657 = vmul.f32 %v1447, %v1482
        %v1658 = vmul.f32 %v1443, %v1486
        %v1659 = vmul.f32 %v1447, %v1486
        %v1660 = vmul.f32 %v1443, %v1490
        %v1661 = vmul.f32 %v1447, %v1490
        %v1662 = vmul.f32 %v1443, %v1494
        %v1663 = vmul.f32 %v1447, %v1494
        %v1664 = vmul.f32 %v1443, %v1498
        %v1665 = vmul.f32 %v1447, %v1498
        %v1666 = vmul.f32 %v1443, %v1502
        %v1667 = vmul.f32 %v1447, %v1502
        %v1668 = vmul.f32 %v1443, %v1506
        %v1669 = vmul.f32 %v1447, %v1506
        %v1670 = vmul.f32 %v1443, %v1510
        %v1671 = vmul.f32 %v1447, %v1510
        %v1672 = vmul.f32 %v1443, %v1514
        %v1673 = vmul.f32 %v1447, %v1514
        %v1674 = vmul.f32 %v1443, %v1518
        %v1675 = vmul.f32 %v1447, %v1518
        %v1676 = vmul.f32 %v1443, %v1522
        %v1677 = vmul.f32 %v1447, %v1522
        %v1678 = vmul.f32 %v1443, %v1526
        %v1679 = vmul.f32 %v1447, %v1526
        %v1680 = vmul.f32 %v1443, %v1530
        %v1681 = vmul.f32 %v1447, %v1530
        %v1682 = vmul.f32 %v1443, %v1534
        %v1683 = vmul.f32 %v1447, %v1534
        %v1684 = vmul.f32 %v1443, %v1538
        %v1685 = vmul.f32 %v1447, %v1538
        %v1686 = vmul.f32 %v1443, %v1542
        %v1687 = vmul.f32 %v1447, %v1542
        %v1688 = vmul.f32 %v1443, %v1546
        %v1689 = vmul.f32 %v1447, %v1546
        %v1690 = vmul.f32 %v1443, %v1550
        %v1691 = vmul.f32 %v1447, %v1550
        %v1692 = vmul.f32 %v1443, %v1554
        %v1693 = vmul.f32 %v1447, %v1554
        %v1694 = vmul.f32 %v1443, %v1558
        %v1695 = vmul.f32 %v1447, %v1558
        %v1696 = vmul.f32 %v1443, %v1562
        %v1697 = vmul.f32 %v1447, %v1562
        %v1698 = vmul.f32 %v1443, %v1566
        %v1699 = vmul.f32 %v1447, %v1566
        %v1700 = vmul.f32 %v1443, %v1570
        %v1701 = vmul.f32 %v1447, %v1570
        %v1702 = vmul.f32 %v1443, %v1574
        %v1703 = vmul.f32 %v1447, %v1574
        %v1704 = vadd.f32 %v1284, %v1576
        %v1705 = vadd.f32 %v1285, %v1577
        %v1706 = vadd.f32 %v1286, %v1578
        %v1707 = vadd.f32 %v1287, %v1579
        %v1708 = vadd.f32 %v1288, %v1580
        %v1709 = vadd.f32 %v1289, %v1581
        %v1710 = vadd.f32 %v1290, %v1582
        %v1711 = vadd.f32 %v1291, %v1583
        %v1712 = vadd.f32 %v1292, %v1584
        %v1713 = vadd.f32 %v1293, %v1585
        %v1714 = vadd.f32 %v1294, %v1586
        %v1715 = vadd.f32 %v1295, %v1587
        %v1716 = vadd.f32 %v1296, %v1588
        %v1717 = vadd.f32 %v1297, %v1589
        %v1718 = vadd.f32 %v1298, %v1590
        %v1719 = vadd.f32 %v1299, %v1591
        %v1720 = vadd.f32 %v1300, %v1592
        %v1721 = vadd.f32 %v1301, %v1593
        %v1722 = vadd.f32 %v1302, %v1594
        %v1723 = vadd.f32 %v1303, %v1595
        %v1724 = vadd.f32 %v1304, %v1596
        %v1725 = vadd.f32 %v1305, %v1597
        %v1726 = vadd.f32 %v1306, %v1598
        %v1727 = vadd.f32 %v1307, %v1599
        %v1728 = vadd.f32 %v1308, %v1600
        %v1729 = vadd.f32 %v1309, %v1601
        %v1730 = vadd.f32 %v1310, %v1602
        %v1731 = vadd.f32 %v1311, %v1603
        %v1732 = vadd.f32 %v1312, %v1604
        %v1733 = vadd.f32 %v1313, %v1605
        %v1734 = vadd.f32 %v1314, %v1606
        %v1735 = vadd.f32 %v1315, %v1607
        %v1736 = vadd.f32 %v1316, %v1608
        %v1737 = vadd.f32 %v1317, %v1609
        %v1738 = vadd.f32 %v1318, %v1610
        %v1739 = vadd.f32 %v1319, %v1611
        %v1740 = vadd.f32 %v1320, %v1612
        %v1741 = vadd.f32 %v1321, %v1613
        %v1742 = vadd.f32 %v1322, %v1614
        %v1743 = vadd.f32 %v1323, %v1615
        %v1744 = vadd.f32 %v1324, %v1616
        %v1745 = vadd.f32 %v1325, %v1617
        %v1746 = vadd.f32 %v1326, %v1618
        %v1747 = vadd.f32 %v1327, %v1619
        %v1748 = vadd.f32 %v1328, %v1620
        %v1749 = vadd.f32 %v1329, %v1621
        %v1750 = vadd.f32 %v1330, %v1622
        %v1751 = vadd.f32 %v1331, %v1623
        %v1752 = vadd.f32 %v1332, %v1624
        %v1753 = vadd.f32 %v1333, %v1625
        %v1754 = vadd.f32 %v1334, %v1626
        %v1755 = vadd.f32 %v1335, %v1627
        %v1756 = vadd.f32 %v1336, %v1628
        %v1757 = vadd.f32 %v1337, %v1629
        %v1758 = vadd.f32 %v1338, %v1630
        %v1759 = vadd.f32 %v1339, %v1631
        %v1760 = vadd.f32 %v1340, %v1632
        %v1761 = vadd.f32 %v1341, %v1633
        %v1762 = vadd.f32 %v1342, %v1634
        %v1763 = vadd.f32 %v1343, %v1635
        %v1764 = vadd.f32 %v1344, %v1636
        %v1765 = vadd.f32 %v1345, %v1637
        %v1766 = vadd.f32 %v1346, %v1638
        %v1767 = vadd.f32 %v1347, %v1639
        %v1768 = vadd.f32 %v1348, %v1640
        %v1769 = vadd.f32 %v1349, %v1641
        %v1770 = vadd.f32 %v1350, %v1642
        %v1771 = vadd.f32 %v1351, %v1643
        %v1772 = vadd.f32 %v1352, %v1644
        %v1773 = vadd.f32 %v1353, %v1645
        %v1774 = vadd.f32 %v1354, %v1646
        %v1775 = vadd.f32 %v1355, %v1647
        %v1776 = vadd.f32 %v1356, %v1648
        %v1777 = vadd.f32 %v1357, %v1649
        %v1778 = vadd.f32 %v1358, %v1650
        %v1779 = vadd.f32 %v1359, %v1651
        %v1780 = vadd.f32 %v1360, %v1652
        %v1781 = vadd.f32 %v1361, %v1653
        %v1782 = vadd.f32 %v1362, %v1654
        %v1783 = vadd.f32 %v1363, %v1655
        %v1784 = vadd.f32 %v1364, %v1656
        %v1785 = vadd.f32 %v1365, %v1657
        %v1786 = vadd.f32 %v1366, %v1658
        %v1787 = vadd.f32 %v1367, %v1659
        %v1788 = vadd.f32 %v1368, %v1660
        %v1789 = vadd.f32 %v1369, %v1661
        %v1790 = vadd.f32 %v1370, %v1662
        %v1791 = vadd.f32 %v1371, %v1663
        %v1792 = vadd.f32 %v1372, %v1664
        %v1793 = vadd.f32 %v1373, %v1665
        %v1794 = vadd.f32 %v1374, %v1666
        %v1795 = vadd.f32 %v1375, %v1667
        %v1796 = vadd.f32 %v1376, %v1668
        %v1797 = vadd.f32 %v1377, %v1669
        %v1798 = vadd.f32 %v1378, %v1670
        %v1799 = vadd.f32 %v1379, %v1671
        %v1800 = vadd.f32 %v1380, %v1672
        %v1801 = vadd.f32 %v1381, %v1673
        %v1802 = vadd.f32 %v1382, %v1674
        %v1803 = vadd.f32 %v1383, %v1675
        %v1804 = vadd.f32 %v1384, %v1676
        %v1805 = vadd.f32 %v1385, %v1677
        %v1806 = vadd.f32 %v1386, %v1678
        %v1807 = vadd.f32 %v1387, %v1679
        %v1808 = vadd.f32 %v1388, %v1680
        %v1809 = vadd.f32 %v1389, %v1681
        %v1810 = vadd.f32 %v1390, %v1682
        %v1811 = vadd.f32 %v1391, %v1683
        %v1812 = vadd.f32 %v1392, %v1684
        %v1813 = vadd.f32 %v1393, %v1685
        %v1814 = vadd.f32 %v1394, %v1686
        %v1815 = vadd.f32 %v1395, %v1687
        %v1816 = vadd.f32 %v1396, %v1688
        %v1817 = vadd.f32 %v1397, %v1689
        %v1818 = vadd.f32 %v1398, %v1690
        %v1819 = vadd.f32 %v1399, %v1691
        %v1820 = vadd.f32 %v1400, %v1692
        %v1821 = vadd.f32 %v1401, %v1693
        %v1822 = vadd.f32 %v1402, %v1694
        %v1823 = vadd.f32 %v1403, %v1695
        %v1824 = vadd.f32 %v1404, %v1696
        %v1825 = vadd.f32 %v1405, %v1697
        %v1826 = vadd.f32 %v1406, %v1698
        %v1827 = vadd.f32 %v1407, %v1699
        %v1828 = vadd.f32 %v1408, %v1700
        %v1829 = vadd.f32 %v1409, %v1701
        %v1830 = vadd.f32 %v1410, %v1702
        %v1831 = vadd.f32 %v1411, %v1703
        %v1832 = vmax.f32 %v1704, 0.0
        %v1833 = vmax.f32 %v1705, 0.0
        %v1834 = vmax.f32 %v1706, 0.0
        %v1835 = vmax.f32 %v1707, 0.0
        %v1836 = vmax.f32 %v1708, 0.0
        %v1837 = vmax.f32 %v1709, 0.0
        %v1838 = vmax.f32 %v1710, 0.0
        %v1839 = vmax.f32 %v1711, 0.0
        %v1840 = vmax.f32 %v1712, 0.0
        %v1841 = vmax.f32 %v1713, 0.0
        %v1842 = vmax.f32 %v1714, 0.0
        %v1843 = vmax.f32 %v1715, 0.0
        %v1844 = vmax.f32 %v1716, 0.0
        %v1845 = vmax.f32 %v1717, 0.0
        %v1846 = vmax.f32 %v1718, 0.0
        %v1847 = vmax.f32 %v1719, 0.0
        %v1848 = vmax.f32 %v1720, 0.0
        %v1849 = vmax.f32 %v1721, 0.0
        %v1850 = vmax.f32 %v1722, 0.0
        %v1851 = vmax.f32 %v1723, 0.0
        %v1852 = vmax.f32 %v1724, 0.0
        %v1853 = vmax.f32 %v1725, 0.0
        %v1854 = vmax.f32 %v1726, 0.0
        %v1855 = vmax.f32 %v1727, 0.0
        %v1856 = vmax.f32 %v1728, 0.0
        %v1857 = vmax.f32 %v1729, 0.0
        %v1858 = vmax.f32 %v1730, 0.0
        %v1859 = vmax.f32 %v1731, 0.0
        %v1860 = vmax.f32 %v1732, 0.0
        %v1861 = vmax.f32 %v1733, 0.0
        %v1862 = vmax.f32 %v1734, 0.0
        %v1863 = vmax.f32 %v1735, 0.0
        %v1864 = vmax.f32 %v1736, 0.0
        %v1865 = vmax.f32 %v1737, 0.0
        %v1866 = vmax.f32 %v1738, 0.0
        %v1867 = vmax.f32 %v1739, 0.0
        %v1868 = vmax.f32 %v1740, 0.0
        %v1869 = vmax.f32 %v1741, 0.0
        %v1870 = vmax.f32 %v1742, 0.0
        %v1871 = vmax.f32 %v1743, 0.0
        %v1872 = vmax.f32 %v1744, 0.0
        %v1873 = vmax.f32 %v1745, 0.0
        %v1874 = vmax.f32 %v1746, 0.0
        %v1875 = vmax.f32 %v1747, 0.0
        %v1876 = vmax.f32 %v1748, 0.0
        %v1877 = vmax.f32 %v1749, 0.0
        %v1878 = vmax.f32 %v1750, 0.0
        %v1879 = vmax.f32 %v1751, 0.0
        %v1880 = vmax.f32 %v1752, 0.0
        %v1881 = vmax.f32 %v1753, 0.0
        %v1882 = vmax.f32 %v1754, 0.0
        %v1883 = vmax.f32 %v1755, 0.0
        %v1884 = vmax.f32 %v1756, 0.0
        %v1885 = vmax.f32 %v1757, 0.0
        %v1886 = vmax.f32 %v1758, 0.0
        %v1887 = vmax.f32 %v1759, 0.0
        %v1888 = vmax.f32 %v1760, 0.0
        %v1889 = vmax.f32 %v1761, 0.0
        %v1890 = vmax.f32 %v1762, 0.0
        %v1891 = vmax.f32 %v1763, 0.0
        %v1892 = vmax.f32 %v1764, 0.0
        %v1893 = vmax.f32 %v1765, 0.0
        %v1894 = vmax.f32 %v1766, 0.0
        %v1895 = vmax.f32 %v1767, 0.0
        %v1896 = vmax.f32 %v1768, 0.0
        %v1897 = vmax.f32 %v1769, 0.0
        %v1898 = vmax.f32 %v1770, 0.0
        %v1899 = vmax.f32 %v1771, 0.0
        %v1900 = vmax.f32 %v1772, 0.0
        %v1901 = vmax.f32 %v1773, 0.0
        %v1902 = vmax.f32 %v1774, 0.0
        %v1903 = vmax.f32 %v1775, 0.0
        %v1904 = vmax.f32 %v1776, 0.0
        %v1905 = vmax.f32 %v1777, 0.0
        %v1906 = vmax.f32 %v1778, 0.0
        %v1907 = vmax.f32 %v1779, 0.0
        %v1908 = vmax.f32 %v1780, 0.0
        %v1909 = vmax.f32 %v1781, 0.0
        %v1910 = vmax.f32 %v1782, 0.0
        %v1911 = vmax.f32 %v1783, 0.0
        %v1912 = vmax.f32 %v1784, 0.0
        %v1913 = vmax.f32 %v1785, 0.0
        %v1914 = vmax.f32 %v1786, 0.0
        %v1915 = vmax.f32 %v1787, 0.0
        %v1916 = vmax.f32 %v1788, 0.0
        %v1917 = vmax.f32 %v1789, 0.0
        %v1918 = vmax.f32 %v1790, 0.0
        %v1919 = vmax.f32 %v1791, 0.0
        %v1920 = vmax.f32 %v1792, 0.0
        %v1921 = vmax.f32 %v1793, 0.0
        %v1922 = vmax.f32 %v1794, 0.0
        %v1923 = vmax.f32 %v1795, 0.0
        %v1924 = vmax.f32 %v1796, 0.0
        %v1925 = vmax.f32 %v1797, 0.0
        %v1926 = vmax.f32 %v1798, 0.0
        %v1927 = vmax.f32 %v1799, 0.0
        %v1928 = vmax.f32 %v1800, 0.0
        %v1929 = vmax.f32 %v1801, 0.0
        %v1930 = vmax.f32 %v1802, 0.0
        %v1931 = vmax.f32 %v1803, 0.0
        %v1932 = vmax.f32 %v1804, 0.0
        %v1933 = vmax.f32 %v1805, 0.0
        %v1934 = vmax.f32 %v1806, 0.0
        %v1935 = vmax.f32 %v1807, 0.0
        %v1936 = vmax.f32 %v1808, 0.0
        %v1937 = vmax.f32 %v1809, 0.0
        %v1938 = vmax.f32 %v1810, 0.0
        %v1939 = vmax.f32 %v1811, 0.0
        %v1940 = vmax.f32 %v1812, 0.0
        %v1941 = vmax.f32 %v1813, 0.0
        %v1942 = vmax.f32 %v1814, 0.0
        %v1943 = vmax.f32 %v1815, 0.0
        %v1944 = vmax.f32 %v1816, 0.0
        %v1945 = vmax.f32 %v1817, 0.0
        %v1946 = vmax.f32 %v1818, 0.0
        %v1947 = vmax.f32 %v1819, 0.0
        %v1948 = vmax.f32 %v1820, 0.0
        %v1949 = vmax.f32 %v1821, 0.0
        %v1950 = vmax.f32 %v1822, 0.0
        %v1951 = vmax.f32 %v1823, 0.0
        %v1952 = vmax.f32 %v1824, 0.0
        %v1953 = vmax.f32 %v1825, 0.0
        %v1954 = vmax.f32 %v1826, 0.0
        %v1955 = vmax.f32 %v1827, 0.0
        %v1956 = vmax.f32 %v1828, 0.0
        %v1957 = vmax.f32 %v1829, 0.0
        %v1958 = vmax.f32 %v1830, 0.0
        %v1959 = vmax.f32 %v1831, 0.0
        %v1960 = vadd.f32 %v1832, %v1833
        %1961 = vadd.xlane.f32.xlu0 %v1960
        %v1962 = vpop.xlane.xlu0 %1961
        %v1963 = vadd.f32 %v1834, %v1835
        %1964 = vadd.xlane.f32.xlu0 %v1963
        %v1965 = vpop.xlane.xlu0 %1964
        %v1966 = vadd.f32 %v1836, %v1837
        %1967 = vadd.xlane.f32.xlu0 %v1966
        %v1968 = vpop.xlane.xlu0 %1967
        %v1969 = vadd.f32 %v1838, %v1839
        %1970 = vadd.xlane.f32.xlu0 %v1969
        %v1971 = vpop.xlane.xlu0 %1970
        %v1972 = vadd.f32 %v1840, %v1841
        %1973 = vadd.xlane.f32.xlu0 %v1972
        %v1974 = vpop.xlane.xlu0 %1973
        %v1975 = vadd.f32 %v1842, %v1843
        %1976 = vadd.xlane.f32.xlu0 %v1975
        %v1977 = vpop.xlane.xlu0 %1976
        %v1978 = vadd.f32 %v1844, %v1845
        %1979 = vadd.xlane.f32.xlu0 %v1978
        %v1980 = vpop.xlane.xlu0 %1979
        %v1981 = vadd.f32 %v1846, %v1847
        %1982 = vadd.xlane.f32.xlu0 %v1981
        %v1983 = vpop.xlane.xlu0 %1982
        %v1984 = vadd.f32 %v1848, %v1849
        %1985 = vadd.xlane.f32.xlu0 %v1984
        %v1986 = vpop.xlane.xlu0 %1985
        %v1987 = vadd.f32 %v1850, %v1851
        %1988 = vadd.xlane.f32.xlu0 %v1987
        %v1989 = vpop.xlane.xlu0 %1988
        %v1990 = vadd.f32 %v1852, %v1853
        %1991 = vadd.xlane.f32.xlu0 %v1990
        %v1992 = vpop.xlane.xlu0 %1991
        %v1993 = vadd.f32 %v1854, %v1855
        %1994 = vadd.xlane.f32.xlu0 %v1993
        %v1995 = vpop.xlane.xlu0 %1994
        %v1996 = vadd.f32 %v1856, %v1857
        %1997 = vadd.xlane.f32.xlu0 %v1996
        %v1998 = vpop.xlane.xlu0 %1997
        %v1999 = vadd.f32 %v1858, %v1859
        %2000 = vadd.xlane.f32.xlu0 %v1999
        %v2001 = vpop.xlane.xlu0 %2000
        %v2002 = vadd.f32 %v1860, %v1861
        %2003 = vadd.xlane.f32.xlu0 %v2002
        %v2004 = vpop.xlane.xlu0 %2003
        %v2005 = vadd.f32 %v1862, %v1863
        %2006 = vadd.xlane.f32.xlu0 %v2005
        %v2007 = vpop.xlane.xlu0 %2006
        %v2008 = vadd.f32 %v1864, %v1865
        %2009 = vadd.xlane.f32.xlu0 %v2008
        %v2010 = vpop.xlane.xlu0 %2009
        %v2011 = vadd.f32 %v1866, %v1867
        %2012 = vadd.xlane.f32.xlu0 %v2011
        %v2013 = vpop.xlane.xlu0 %2012
        %v2014 = vadd.f32 %v1868, %v1869
        %2015 = vadd.xlane.f32.xlu0 %v2014
        %v2016 = vpop.xlane.xlu0 %2015
        %v2017 = vadd.f32 %v1870, %v1871
        %2018 = vadd.xlane.f32.xlu0 %v2017
        %v2019 = vpop.xlane.xlu0 %2018
        %v2020 = vadd.f32 %v1872, %v1873
        %2021 = vadd.xlane.f32.xlu0 %v2020
        %v2022 = vpop.xlane.xlu0 %2021
        %v2023 = vadd.f32 %v1874, %v1875
        %2024 = vadd.xlane.f32.xlu0 %v2023
        %v2025 = vpop.xlane.xlu0 %2024
        %v2026 = vadd.f32 %v1876, %v1877
        %2027 = vadd.xlane.f32.xlu0 %v2026
        %v2028 = vpop.xlane.xlu0 %2027
        %v2029 = vadd.f32 %v1878, %v1879
        %2030 = vadd.xlane.f32.xlu0 %v2029
        %v2031 = vpop.xlane.xlu0 %2030
        %v2032 = vadd.f32 %v1880, %v1881
        %2033 = vadd.xlane.f32.xlu0 %v2032
        %v2034 = vpop.xlane.xlu0 %2033
        %v2035 = vadd.f32 %v1882, %v1883
        %2036 = vadd.xlane.f32.xlu0 %v2035
        %v2037 = vpop.xlane.xlu0 %2036
        %v2038 = vadd.f32 %v1884, %v1885
        %2039 = vadd.xlane.f32.xlu0 %v2038
        %v2040 = vpop.xlane.xlu0 %2039
        %v2041 = vadd.f32 %v1886, %v1887
        %2042 = vadd.xlane.f32.xlu0 %v2041
        %v2043 = vpop.xlane.xlu0 %2042
        %v2044 = vadd.f32 %v1888, %v1889
        %2045 = vadd.xlane.f32.xlu0 %v2044
        %v2046 = vpop.xlane.xlu0 %2045
        %v2047 = vadd.f32 %v1890, %v1891
        %2048 = vadd.xlane.f32.xlu0 %v2047
        %v2049 = vpop.xlane.xlu0 %2048
        %v2050 = vadd.f32 %v1892, %v1893
        %2051 = vadd.xlane.f32.xlu0 %v2050
        %v2052 = vpop.xlane.xlu0 %2051
        %v2053 = vadd.f32 %v1894, %v1895
        %2054 = vadd.xlane.f32.xlu0 %v2053
        %v2055 = vpop.xlane.xlu0 %2054
        %v2056 = vadd.f32 %v1896, %v1897
        %2057 = vadd.xlane.f32.xlu0 %v2056
        %v2058 = vpop.xlane.xlu0 %2057
        %v2059 = vadd.f32 %v1898, %v1899
        %2060 = vadd.xlane.f32.xlu0 %v2059
        %v2061 = vpop.xlane.xlu0 %2060
        %v2062 = vadd.f32 %v1900, %v1901
        %2063 = vadd.xlane.f32.xlu0 %v2062
        %v2064 = vpop.xlane.xlu0 %2063
        %v2065 = vadd.f32 %v1902, %v1903
        %2066 = vadd.xlane.f32.xlu0 %v2065
        %v2067 = vpop.xlane.xlu0 %2066
        %v2068 = vadd.f32 %v1904, %v1905
        %2069 = vadd.xlane.f32.xlu0 %v2068
        %v2070 = vpop.xlane.xlu0 %2069
        %v2071 = vadd.f32 %v1906, %v1907
        %2072 = vadd.xlane.f32.xlu0 %v2071
        %v2073 = vpop.xlane.xlu0 %2072
        %v2074 = vadd.f32 %v1908, %v1909
        %2075 = vadd.xlane.f32.xlu0 %v2074
        %v2076 = vpop.xlane.xlu0 %2075
        %v2077 = vadd.f32 %v1910, %v1911
        %2078 = vadd.xlane.f32.xlu0 %v2077
        %v2079 = vpop.xlane.xlu0 %2078
        %v2080 = vadd.f32 %v1912, %v1913
        %2081 = vadd.xlane.f32.xlu0 %v2080
        %v2082 = vpop.xlane.xlu0 %2081
        %v2083 = vadd.f32 %v1914, %v1915
        %2084 = vadd.xlane.f32.xlu0 %v2083
        %v2085 = vpop.xlane.xlu0 %2084
        %v2086 = vadd.f32 %v1916, %v1917
        %2087 = vadd.xlane.f32.xlu0 %v2086
        %v2088 = vpop.xlane.xlu0 %2087
        %v2089 = vadd.f32 %v1918, %v1919
        %2090 = vadd.xlane.f32.xlu0 %v2089
        %v2091 = vpop.xlane.xlu0 %2090
        %v2092 = vadd.f32 %v1920, %v1921
        %2093 = vadd.xlane.f32.xlu0 %v2092
        %v2094 = vpop.xlane.xlu0 %2093
        %v2095 = vadd.f32 %v1922, %v1923
        %2096 = vadd.xlane.f32.xlu0 %v2095
        %v2097 = vpop.xlane.xlu0 %2096
        %v2098 = vadd.f32 %v1924, %v1925
        %2099 = vadd.xlane.f32.xlu0 %v2098
        %v2100 = vpop.xlane.xlu0 %2099
        %v2101 = vadd.f32 %v1926, %v1927
        %2102 = vadd.xlane.f32.xlu0 %v2101
        %v2103 = vpop.xlane.xlu0 %2102
        %v2104 = vadd.f32 %v1928, %v1929
        %2105 = vadd.xlane.f32.xlu0 %v2104
        %v2106 = vpop.xlane.xlu0 %2105
        %v2107 = vadd.f32 %v1930, %v1931
        %2108 = vadd.xlane.f32.xlu0 %v2107
        %v2109 = vpop.xlane.xlu0 %2108
        %v2110 = vadd.f32 %v1932, %v1933
        %2111 = vadd.xlane.f32.xlu0 %v2110
        %v2112 = vpop.xlane.xlu0 %2111
        %v2113 = vadd.f32 %v1934, %v1935
        %2114 = vadd.xlane.f32.xlu0 %v2113
        %v2115 = vpop.xlane.xlu0 %2114
        %v2116 = vadd.f32 %v1936, %v1937
        %2117 = vadd.xlane.f32.xlu0 %v2116
        %v2118 = vpop.xlane.xlu0 %2117
        %v2119 = vadd.f32 %v1938, %v1939
        %2120 = vadd.xlane.f32.xlu0 %v2119
        %v2121 = vpop.xlane.xlu0 %2120
        %v2122 = vadd.f32 %v1940, %v1941
        %2123 = vadd.xlane.f32.xlu0 %v2122
        %v2124 = vpop.xlane.xlu0 %2123
        %v2125 = vadd.f32 %v1942, %v1943
        %2126 = vadd.xlane.f32.xlu0 %v2125
        %v2127 = vpop.xlane.xlu0 %2126
        %v2128 = vadd.f32 %v1944, %v1945
        %2129 = vadd.xlane.f32.xlu0 %v2128
        %v2130 = vpop.xlane.xlu0 %2129
        %v2131 = vadd.f32 %v1946, %v1947
        %2132 = vadd.xlane.f32.xlu0 %v2131
        %v2133 = vpop.xlane.xlu0 %2132
        %v2134 = vadd.f32 %v1948, %v1949
        %2135 = vadd.xlane.f32.xlu0 %v2134
        %v2136 = vpop.xlane.xlu0 %2135
        %v2137 = vadd.f32 %v1950, %v1951
        %2138 = vadd.xlane.f32.xlu0 %v2137
        %v2139 = vpop.xlane.xlu0 %2138
        %v2140 = vadd.f32 %v1952, %v1953
        %2141 = vadd.xlane.f32.xlu0 %v2140
        %v2142 = vpop.xlane.xlu0 %2141
        %v2143 = vadd.f32 %v1954, %v1955
        %2144 = vadd.xlane.f32.xlu0 %v2143
        %v2145 = vpop.xlane.xlu0 %2144
        %v2146 = vadd.f32 %v1956, %v1957
        %2147 = vadd.xlane.f32.xlu0 %v2146
        %v2148 = vpop.xlane.xlu0 %2147
        %v2149 = vadd.f32 %v1958, %v1959
        %2150 = vadd.xlane.f32.xlu0 %v2149
        %v2151 = vpop.xlane.xlu0 %2150
        %v2152 = vld [vmem:[#allocation2] sm:$0xf]
        %v2218 = vunpack.c.l.s4 269488144
        %v2219 = vunpack.c.0.s8 %v2218
        %v2220 = vlaneseq
        %v2221 = vshrl.u32 %v2220, 7
        %v2222 = vsub.s32 %v2219, %v2221
        %v2223 = vrot.slane %v1962, %v2222
        %v2225 = vunpack.c.l.s4 842150450
        %v2226 = vunpack.c.0.s8 %v2225
        %v2227 = vlaneseq
        %v2228 = vshrl.u32 %v2227, 7
        %v2229 = vsub.s32 %v2226, %v2228
        %v2230 = vrot.slane %v1962, %v2229
        %v2232 = vunpack.c.l.s4 1414812756
        %v2233 = vunpack.c.0.s8 %v2232
        %v2234 = vlaneseq
        %v2235 = vshrl.u32 %v2234, 7
        %v2236 = vsub.s32 %v2233, %v2235
        %v2237 = vrot.slane %v1962, %v2236
        %v2239 = vunpack.c.l.s4 1987475062
        %v2240 = vunpack.c.0.s8 %v2239
        %v2241 = vlaneseq
        %v2242 = vshrl.u32 %v2241, 7
        %v2243 = vsub.s32 %v2240, %v2242
        %v2244 = vrot.slane %v1962, %v2243
        %v2246 = vunpack.c.l.s4 269488144
        %v2247 = vunpack.c.0.s8 %v2246
        %v2248 = vlaneseq
        %v2249 = vshrl.u32 %v2248, 7
        %v2250 = vsub.s32 %v2247, %v2249
        %v2251 = vrot.slane %v1965, %v2250
        %v2253 = vunpack.c.l.s4 842150450
        %v2254 = vunpack.c.0.s8 %v2253
        %v2255 = vlaneseq
        %v2256 = vshrl.u32 %v2255, 7
        %v2257 = vsub.s32 %v2254, %v2256
        %v2258 = vrot.slane %v1965, %v2257
        %v2260 = vunpack.c.l.s4 1414812756
        %v2261 = vunpack.c.0.s8 %v2260
        %v2262 = vlaneseq
        %v2263 = vshrl.u32 %v2262, 7
        %v2264 = vsub.s32 %v2261, %v2263
        %v2265 = vrot.slane %v1965, %v2264
        %v2267 = vunpack.c.l.s4 1987475062
        %v2268 = vunpack.c.0.s8 %v2267
        %v2269 = vlaneseq
        %v2270 = vshrl.u32 %v2269, 7
        %v2271 = vsub.s32 %v2268, %v2270
        %v2272 = vrot.slane %v1965, %v2271
        %v2274 = vunpack.c.l.s4 269488144
        %v2275 = vunpack.c.0.s8 %v2274
        %v2276 = vlaneseq
        %v2277 = vshrl.u32 %v2276, 7
        %v2278 = vsub.s32 %v2275, %v2277
        %v2279 = vrot.slane %v1968, %v2278
        %v2281 = vunpack.c.l.s4 842150450
        %v2282 = vunpack.c.0.s8 %v2281
        %v2283 = vlaneseq
        %v2284 = vshrl.u32 %v2283, 7
        %v2285 = vsub.s32 %v2282, %v2284
        %v2286 = vrot.slane %v1968, %v2285
        %v2288 = vunpack.c.l.s4 1414812756
        %v2289 = vunpack.c.0.s8 %v2288
        %v2290 = vlaneseq
        %v2291 = vshrl.u32 %v2290, 7
        %v2292 = vsub.s32 %v2289, %v2291
        %v2293 = vrot.slane %v1968, %v2292
        %v2295 = vunpack.c.l.s4 1987475062
        %v2296 = vunpack.c.0.s8 %v2295
        %v2297 = vlaneseq
        %v2298 = vshrl.u32 %v2297, 7
        %v2299 = vsub.s32 %v2296, %v2298
        %v2300 = vrot.slane %v1968, %v2299
        %v2302 = vunpack.c.l.s4 269488144
        %v2303 = vunpack.c.0.s8 %v2302
        %v2304 = vlaneseq
        %v2305 = vshrl.u32 %v2304, 7
        %v2306 = vsub.s32 %v2303, %v2305
        %v2307 = vrot.slane %v1971, %v2306
        %v2309 = vunpack.c.l.s4 842150450
        %v2310 = vunpack.c.0.s8 %v2309
        %v2311 = vlaneseq
        %v2312 = vshrl.u32 %v2311, 7
        %v2313 = vsub.s32 %v2310, %v2312
        %v2314 = vrot.slane %v1971, %v2313
        %v2316 = vunpack.c.l.s4 1414812756
        %v2317 = vunpack.c.0.s8 %v2316
        %v2318 = vlaneseq
        %v2319 = vshrl.u32 %v2318, 7
        %v2320 = vsub.s32 %v2317, %v2319
        %v2321 = vrot.slane %v1971, %v2320
        %v2323 = vunpack.c.l.s4 1987475062
        %v2324 = vunpack.c.0.s8 %v2323
        %v2325 = vlaneseq
        %v2326 = vshrl.u32 %v2325, 7
        %v2327 = vsub.s32 %v2324, %v2326
        %v2328 = vrot.slane %v1971, %v2327
        %v2330 = vunpack.c.l.s4 269488144
        %v2331 = vunpack.c.0.s8 %v2330
        %v2332 = vlaneseq
        %v2333 = vshrl.u32 %v2332, 7
        %v2334 = vsub.s32 %v2331, %v2333
        %v2335 = vrot.slane %v1974, %v2334
        %v2337 = vunpack.c.l.s4 842150450
        %v2338 = vunpack.c.0.s8 %v2337
        %v2339 = vlaneseq
        %v2340 = vshrl.u32 %v2339, 7
        %v2341 = vsub.s32 %v2338, %v2340
        %v2342 = vrot.slane %v1974, %v2341
        %v2344 = vunpack.c.l.s4 1414812756
        %v2345 = vunpack.c.0.s8 %v2344
        %v2346 = vlaneseq
        %v2347 = vshrl.u32 %v2346, 7
        %v2348 = vsub.s32 %v2345, %v2347
        %v2349 = vrot.slane %v1974, %v2348
        %v2351 = vunpack.c.l.s4 1987475062
        %v2352 = vunpack.c.0.s8 %v2351
        %v2353 = vlaneseq
        %v2354 = vshrl.u32 %v2353, 7
        %v2355 = vsub.s32 %v2352, %v2354
        %v2356 = vrot.slane %v1974, %v2355
        %v2358 = vunpack.c.l.s4 269488144
        %v2359 = vunpack.c.0.s8 %v2358
        %v2360 = vlaneseq
        %v2361 = vshrl.u32 %v2360, 7
        %v2362 = vsub.s32 %v2359, %v2361
        %v2363 = vrot.slane %v1977, %v2362
        %v2365 = vunpack.c.l.s4 842150450
        %v2366 = vunpack.c.0.s8 %v2365
        %v2367 = vlaneseq
        %v2368 = vshrl.u32 %v2367, 7
        %v2369 = vsub.s32 %v2366, %v2368
        %v2370 = vrot.slane %v1977, %v2369
        %v2372 = vunpack.c.l.s4 1414812756
        %v2373 = vunpack.c.0.s8 %v2372
        %v2374 = vlaneseq
        %v2375 = vshrl.u32 %v2374, 7
        %v2376 = vsub.s32 %v2373, %v2375
        %v2377 = vrot.slane %v1977, %v2376
        %v2379 = vunpack.c.l.s4 1987475062
        %v2380 = vunpack.c.0.s8 %v2379
        %v2381 = vlaneseq
        %v2382 = vshrl.u32 %v2381, 7
        %v2383 = vsub.s32 %v2380, %v2382
        %v2384 = vrot.slane %v1977, %v2383
        %v2386 = vunpack.c.l.s4 269488144
        %v2387 = vunpack.c.0.s8 %v2386
        %v2388 = vlaneseq
        %v2389 = vshrl.u32 %v2388, 7
        %v2390 = vsub.s32 %v2387, %v2389
        %v2391 = vrot.slane %v1980, %v2390
        %v2393 = vunpack.c.l.s4 842150450
        %v2394 = vunpack.c.0.s8 %v2393
        %v2395 = vlaneseq
        %v2396 = vshrl.u32 %v2395, 7
        %v2397 = vsub.s32 %v2394, %v2396
        %v2398 = vrot.slane %v1980, %v2397
        %v2400 = vunpack.c.l.s4 1414812756
        %v2401 = vunpack.c.0.s8 %v2400
        %v2402 = vlaneseq
        %v2403 = vshrl.u32 %v2402, 7
        %v2404 = vsub.s32 %v2401, %v2403
        %v2405 = vrot.slane %v1980, %v2404
        %v2407 = vunpack.c.l.s4 1987475062
        %v2408 = vunpack.c.0.s8 %v2407
        %v2409 = vlaneseq
        %v2410 = vshrl.u32 %v2409, 7
        %v2411 = vsub.s32 %v2408, %v2410
        %v2412 = vrot.slane %v1980, %v2411
        %v2414 = vunpack.c.l.s4 269488144
        %v2415 = vunpack.c.0.s8 %v2414
        %v2416 = vlaneseq
        %v2417 = vshrl.u32 %v2416, 7
        %v2418 = vsub.s32 %v2415, %v2417
        %v2419 = vrot.slane %v1983, %v2418
        %v2421 = vunpack.c.l.s4 842150450
        %v2422 = vunpack.c.0.s8 %v2421
        %v2423 = vlaneseq
        %v2424 = vshrl.u32 %v2423, 7
        %v2425 = vsub.s32 %v2422, %v2424
        %v2426 = vrot.slane %v1983, %v2425
        %v2428 = vunpack.c.l.s4 1414812756
        %v2429 = vunpack.c.0.s8 %v2428
        %v2430 = vlaneseq
        %v2431 = vshrl.u32 %v2430, 7
        %v2432 = vsub.s32 %v2429, %v2431
        %v2433 = vrot.slane %v1983, %v2432
        %v2435 = vunpack.c.l.s4 1987475062
        %v2436 = vunpack.c.0.s8 %v2435
        %v2437 = vlaneseq
        %v2438 = vshrl.u32 %v2437, 7
        %v2439 = vsub.s32 %v2436, %v2438
        %v2440 = vrot.slane %v1983, %v2439
        %v2442 = vunpack.c.l.s4 269488144
        %v2443 = vunpack.c.0.s8 %v2442
        %v2444 = vlaneseq
        %v2445 = vshrl.u32 %v2444, 7
        %v2446 = vsub.s32 %v2443, %v2445
        %v2447 = vrot.slane %v1986, %v2446
        %v2449 = vunpack.c.l.s4 842150450
        %v2450 = vunpack.c.0.s8 %v2449
        %v2451 = vlaneseq
        %v2452 = vshrl.u32 %v2451, 7
        %v2453 = vsub.s32 %v2450, %v2452
        %v2454 = vrot.slane %v1986, %v2453
        %v2456 = vunpack.c.l.s4 1414812756
        %v2457 = vunpack.c.0.s8 %v2456
        %v2458 = vlaneseq
        %v2459 = vshrl.u32 %v2458, 7
        %v2460 = vsub.s32 %v2457, %v2459
        %v2461 = vrot.slane %v1986, %v2460
        %v2463 = vunpack.c.l.s4 1987475062
        %v2464 = vunpack.c.0.s8 %v2463
        %v2465 = vlaneseq
        %v2466 = vshrl.u32 %v2465, 7
        %v2467 = vsub.s32 %v2464, %v2466
        %v2468 = vrot.slane %v1986, %v2467
        %v2470 = vunpack.c.l.s4 269488144
        %v2471 = vunpack.c.0.s8 %v2470
        %v2472 = vlaneseq
        %v2473 = vshrl.u32 %v2472, 7
        %v2474 = vsub.s32 %v2471, %v2473
        %v2475 = vrot.slane %v1989, %v2474
        %v2477 = vunpack.c.l.s4 842150450
        %v2478 = vunpack.c.0.s8 %v2477
        %v2479 = vlaneseq
        %v2480 = vshrl.u32 %v2479, 7
        %v2481 = vsub.s32 %v2478, %v2480
        %v2482 = vrot.slane %v1989, %v2481
        %v2484 = vunpack.c.l.s4 1414812756
        %v2485 = vunpack.c.0.s8 %v2484
        %v2486 = vlaneseq
        %v2487 = vshrl.u32 %v2486, 7
        %v2488 = vsub.s32 %v2485, %v2487
        %v2489 = vrot.slane %v1989, %v2488
        %v2491 = vunpack.c.l.s4 1987475062
        %v2492 = vunpack.c.0.s8 %v2491
        %v2493 = vlaneseq
        %v2494 = vshrl.u32 %v2493, 7
        %v2495 = vsub.s32 %v2492, %v2494
        %v2496 = vrot.slane %v1989, %v2495
        %v2498 = vunpack.c.l.s4 269488144
        %v2499 = vunpack.c.0.s8 %v2498
        %v2500 = vlaneseq
        %v2501 = vshrl.u32 %v2500, 7
        %v2502 = vsub.s32 %v2499, %v2501
        %v2503 = vrot.slane %v1992, %v2502
        %v2505 = vunpack.c.l.s4 842150450
        %v2506 = vunpack.c.0.s8 %v2505
        %v2507 = vlaneseq
        %v2508 = vshrl.u32 %v2507, 7
        %v2509 = vsub.s32 %v2506, %v2508
        %v2510 = vrot.slane %v1992, %v2509
        %v2512 = vunpack.c.l.s4 1414812756
        %v2513 = vunpack.c.0.s8 %v2512
        %v2514 = vlaneseq
        %v2515 = vshrl.u32 %v2514, 7
        %v2516 = vsub.s32 %v2513, %v2515
        %v2517 = vrot.slane %v1992, %v2516
        %v2519 = vunpack.c.l.s4 1987475062
        %v2520 = vunpack.c.0.s8 %v2519
        %v2521 = vlaneseq
        %v2522 = vshrl.u32 %v2521, 7
        %v2523 = vsub.s32 %v2520, %v2522
        %v2524 = vrot.slane %v1992, %v2523
        %v2526 = vunpack.c.l.s4 269488144
        %v2527 = vunpack.c.0.s8 %v2526
        %v2528 = vlaneseq
        %v2529 = vshrl.u32 %v2528, 7
        %v2530 = vsub.s32 %v2527, %v2529
        %v2531 = vrot.slane %v1995, %v2530
        %v2533 = vunpack.c.l.s4 842150450
        %v2534 = vunpack.c.0.s8 %v2533
        %v2535 = vlaneseq
        %v2536 = vshrl.u32 %v2535, 7
        %v2537 = vsub.s32 %v2534, %v2536
        %v2538 = vrot.slane %v1995, %v2537
        %v2540 = vunpack.c.l.s4 1414812756
        %v2541 = vunpack.c.0.s8 %v2540
        %v2542 = vlaneseq
        %v2543 = vshrl.u32 %v2542, 7
        %v2544 = vsub.s32 %v2541, %v2543
        %v2545 = vrot.slane %v1995, %v2544
        %v2547 = vunpack.c.l.s4 1987475062
        %v2548 = vunpack.c.0.s8 %v2547
        %v2549 = vlaneseq
        %v2550 = vshrl.u32 %v2549, 7
        %v2551 = vsub.s32 %v2548, %v2550
        %v2552 = vrot.slane %v1995, %v2551
        %v2554 = vunpack.c.l.s4 269488144
        %v2555 = vunpack.c.0.s8 %v2554
        %v2556 = vlaneseq
        %v2557 = vshrl.u32 %v2556, 7
        %v2558 = vsub.s32 %v2555, %v2557
        %v2559 = vrot.slane %v1998, %v2558
        %v2561 = vunpack.c.l.s4 842150450
        %v2562 = vunpack.c.0.s8 %v2561
        %v2563 = vlaneseq
        %v2564 = vshrl.u32 %v2563, 7
        %v2565 = vsub.s32 %v2562, %v2564
        %v2566 = vrot.slane %v1998, %v2565
        %v2568 = vunpack.c.l.s4 1414812756
        %v2569 = vunpack.c.0.s8 %v2568
        %v2570 = vlaneseq
        %v2571 = vshrl.u32 %v2570, 7
        %v2572 = vsub.s32 %v2569, %v2571
        %v2573 = vrot.slane %v1998, %v2572
        %v2575 = vunpack.c.l.s4 1987475062
        %v2576 = vunpack.c.0.s8 %v2575
        %v2577 = vlaneseq
        %v2578 = vshrl.u32 %v2577, 7
        %v2579 = vsub.s32 %v2576, %v2578
        %v2580 = vrot.slane %v1998, %v2579
        %v2582 = vunpack.c.l.s4 269488144
        %v2583 = vunpack.c.0.s8 %v2582
        %v2584 = vlaneseq
        %v2585 = vshrl.u32 %v2584, 7
        %v2586 = vsub.s32 %v2583, %v2585
        %v2587 = vrot.slane %v2001, %v2586
        %v2589 = vunpack.c.l.s4 842150450
        %v2590 = vunpack.c.0.s8 %v2589
        %v2591 = vlaneseq
        %v2592 = vshrl.u32 %v2591, 7
        %v2593 = vsub.s32 %v2590, %v2592
        %v2594 = vrot.slane %v2001, %v2593
        %v2596 = vunpack.c.l.s4 1414812756
        %v2597 = vunpack.c.0.s8 %v2596
        %v2598 = vlaneseq
        %v2599 = vshrl.u32 %v2598, 7
        %v2600 = vsub.s32 %v2597, %v2599
        %v2601 = vrot.slane %v2001, %v2600
        %v2603 = vunpack.c.l.s4 1987475062
        %v2604 = vunpack.c.0.s8 %v2603
        %v2605 = vlaneseq
        %v2606 = vshrl.u32 %v2605, 7
        %v2607 = vsub.s32 %v2604, %v2606
        %v2608 = vrot.slane %v2001, %v2607
        %v2610 = vunpack.c.l.s4 269488144
        %v2611 = vunpack.c.0.s8 %v2610
        %v2612 = vlaneseq
        %v2613 = vshrl.u32 %v2612, 7
        %v2614 = vsub.s32 %v2611, %v2613
        %v2615 = vrot.slane %v2004, %v2614
        %v2617 = vunpack.c.l.s4 842150450
        %v2618 = vunpack.c.0.s8 %v2617
        %v2619 = vlaneseq
        %v2620 = vshrl.u32 %v2619, 7
        %v2621 = vsub.s32 %v2618, %v2620
        %v2622 = vrot.slane %v2004, %v2621
        %v2624 = vunpack.c.l.s4 1414812756
        %v2625 = vunpack.c.0.s8 %v2624
        %v2626 = vlaneseq
        %v2627 = vshrl.u32 %v2626, 7
        %v2628 = vsub.s32 %v2625, %v2627
        %v2629 = vrot.slane %v2004, %v2628
        %v2631 = vunpack.c.l.s4 1987475062
        %v2632 = vunpack.c.0.s8 %v2631
        %v2633 = vlaneseq
        %v2634 = vshrl.u32 %v2633, 7
        %v2635 = vsub.s32 %v2632, %v2634
        %v2636 = vrot.slane %v2004, %v2635
        %v2638 = vunpack.c.l.s4 269488144
        %v2639 = vunpack.c.0.s8 %v2638
        %v2640 = vlaneseq
        %v2641 = vshrl.u32 %v2640, 7
        %v2642 = vsub.s32 %v2639, %v2641
        %v2643 = vrot.slane %v2007, %v2642
        %v2645 = vunpack.c.l.s4 842150450
        %v2646 = vunpack.c.0.s8 %v2645
        %v2647 = vlaneseq
        %v2648 = vshrl.u32 %v2647, 7
        %v2649 = vsub.s32 %v2646, %v2648
        %v2650 = vrot.slane %v2007, %v2649
        %v2652 = vunpack.c.l.s4 1414812756
        %v2653 = vunpack.c.0.s8 %v2652
        %v2654 = vlaneseq
        %v2655 = vshrl.u32 %v2654, 7
        %v2656 = vsub.s32 %v2653, %v2655
        %v2657 = vrot.slane %v2007, %v2656
        %v2659 = vunpack.c.l.s4 1987475062
        %v2660 = vunpack.c.0.s8 %v2659
        %v2661 = vlaneseq
        %v2662 = vshrl.u32 %v2661, 7
        %v2663 = vsub.s32 %v2660, %v2662
        %v2664 = vrot.slane %v2007, %v2663
        %v2666 = vunpack.c.l.s4 269488144
        %v2667 = vunpack.c.0.s8 %v2666
        %v2668 = vlaneseq
        %v2669 = vshrl.u32 %v2668, 7
        %v2670 = vsub.s32 %v2667, %v2669
        %v2671 = vrot.slane %v2010, %v2670
        %v2673 = vunpack.c.l.s4 842150450
        %v2674 = vunpack.c.0.s8 %v2673
        %v2675 = vlaneseq
        %v2676 = vshrl.u32 %v2675, 7
        %v2677 = vsub.s32 %v2674, %v2676
        %v2678 = vrot.slane %v2010, %v2677
        %v2680 = vunpack.c.l.s4 1414812756
        %v2681 = vunpack.c.0.s8 %v2680
        %v2682 = vlaneseq
        %v2683 = vshrl.u32 %v2682, 7
        %v2684 = vsub.s32 %v2681, %v2683
        %v2685 = vrot.slane %v2010, %v2684
        %v2687 = vunpack.c.l.s4 1987475062
        %v2688 = vunpack.c.0.s8 %v2687
        %v2689 = vlaneseq
        %v2690 = vshrl.u32 %v2689, 7
        %v2691 = vsub.s32 %v2688, %v2690
        %v2692 = vrot.slane %v2010, %v2691
        %v2694 = vunpack.c.l.s4 269488144
        %v2695 = vunpack.c.0.s8 %v2694
        %v2696 = vlaneseq
        %v2697 = vshrl.u32 %v2696, 7
        %v2698 = vsub.s32 %v2695, %v2697
        %v2699 = vrot.slane %v2013, %v2698
        %v2701 = vunpack.c.l.s4 842150450
        %v2702 = vunpack.c.0.s8 %v2701
        %v2703 = vlaneseq
        %v2704 = vshrl.u32 %v2703, 7
        %v2705 = vsub.s32 %v2702, %v2704
        %v2706 = vrot.slane %v2013, %v2705
        %v2708 = vunpack.c.l.s4 1414812756
        %v2709 = vunpack.c.0.s8 %v2708
        %v2710 = vlaneseq
        %v2711 = vshrl.u32 %v2710, 7
        %v2712 = vsub.s32 %v2709, %v2711
        %v2713 = vrot.slane %v2013, %v2712
        %v2715 = vunpack.c.l.s4 1987475062
        %v2716 = vunpack.c.0.s8 %v2715
        %v2717 = vlaneseq
        %v2718 = vshrl.u32 %v2717, 7
        %v2719 = vsub.s32 %v2716, %v2718
        %v2720 = vrot.slane %v2013, %v2719
        %v2722 = vunpack.c.l.s4 269488144
        %v2723 = vunpack.c.0.s8 %v2722
        %v2724 = vlaneseq
        %v2725 = vshrl.u32 %v2724, 7
        %v2726 = vsub.s32 %v2723, %v2725
        %v2727 = vrot.slane %v2016, %v2726
        %v2729 = vunpack.c.l.s4 842150450
        %v2730 = vunpack.c.0.s8 %v2729
        %v2731 = vlaneseq
        %v2732 = vshrl.u32 %v2731, 7
        %v2733 = vsub.s32 %v2730, %v2732
        %v2734 = vrot.slane %v2016, %v2733
        %v2736 = vunpack.c.l.s4 1414812756
        %v2737 = vunpack.c.0.s8 %v2736
        %v2738 = vlaneseq
        %v2739 = vshrl.u32 %v2738, 7
        %v2740 = vsub.s32 %v2737, %v2739
        %v2741 = vrot.slane %v2016, %v2740
        %v2743 = vunpack.c.l.s4 1987475062
        %v2744 = vunpack.c.0.s8 %v2743
        %v2745 = vlaneseq
        %v2746 = vshrl.u32 %v2745, 7
        %v2747 = vsub.s32 %v2744, %v2746
        %v2748 = vrot.slane %v2016, %v2747
        %v2750 = vunpack.c.l.s4 269488144
        %v2751 = vunpack.c.0.s8 %v2750
        %v2752 = vlaneseq
        %v2753 = vshrl.u32 %v2752, 7
        %v2754 = vsub.s32 %v2751, %v2753
        %v2755 = vrot.slane %v2019, %v2754
        %v2757 = vunpack.c.l.s4 842150450
        %v2758 = vunpack.c.0.s8 %v2757
        %v2759 = vlaneseq
        %v2760 = vshrl.u32 %v2759, 7
        %v2761 = vsub.s32 %v2758, %v2760
        %v2762 = vrot.slane %v2019, %v2761
        %v2764 = vunpack.c.l.s4 1414812756
        %v2765 = vunpack.c.0.s8 %v2764
        %v2766 = vlaneseq
        %v2767 = vshrl.u32 %v2766, 7
        %v2768 = vsub.s32 %v2765, %v2767
        %v2769 = vrot.slane %v2019, %v2768
        %v2771 = vunpack.c.l.s4 1987475062
        %v2772 = vunpack.c.0.s8 %v2771
        %v2773 = vlaneseq
        %v2774 = vshrl.u32 %v2773, 7
        %v2775 = vsub.s32 %v2772, %v2774
        %v2776 = vrot.slane %v2019, %v2775
        %v2778 = vunpack.c.l.s4 269488144
        %v2779 = vunpack.c.0.s8 %v2778
        %v2780 = vlaneseq
        %v2781 = vshrl.u32 %v2780, 7
        %v2782 = vsub.s32 %v2779, %v2781
        %v2783 = vrot.slane %v2022, %v2782
        %v2785 = vunpack.c.l.s4 842150450
        %v2786 = vunpack.c.0.s8 %v2785
        %v2787 = vlaneseq
        %v2788 = vshrl.u32 %v2787, 7
        %v2789 = vsub.s32 %v2786, %v2788
        %v2790 = vrot.slane %v2022, %v2789
        %v2792 = vunpack.c.l.s4 1414812756
        %v2793 = vunpack.c.0.s8 %v2792
        %v2794 = vlaneseq
        %v2795 = vshrl.u32 %v2794, 7
        %v2796 = vsub.s32 %v2793, %v2795
        %v2797 = vrot.slane %v2022, %v2796
        %v2799 = vunpack.c.l.s4 1987475062
        %v2800 = vunpack.c.0.s8 %v2799
        %v2801 = vlaneseq
        %v2802 = vshrl.u32 %v2801, 7
        %v2803 = vsub.s32 %v2800, %v2802
        %v2804 = vrot.slane %v2022, %v2803
        %v2806 = vunpack.c.l.s4 269488144
        %v2807 = vunpack.c.0.s8 %v2806
        %v2808 = vlaneseq
        %v2809 = vshrl.u32 %v2808, 7
        %v2810 = vsub.s32 %v2807, %v2809
        %v2811 = vrot.slane %v2025, %v2810
        %v2813 = vunpack.c.l.s4 842150450
        %v2814 = vunpack.c.0.s8 %v2813
        %v2815 = vlaneseq
        %v2816 = vshrl.u32 %v2815, 7
        %v2817 = vsub.s32 %v2814, %v2816
        %v2818 = vrot.slane %v2025, %v2817
        %v2820 = vunpack.c.l.s4 1414812756
        %v2821 = vunpack.c.0.s8 %v2820
        %v2822 = vlaneseq
        %v2823 = vshrl.u32 %v2822, 7
        %v2824 = vsub.s32 %v2821, %v2823
        %v2825 = vrot.slane %v2025, %v2824
        %v2827 = vunpack.c.l.s4 1987475062
        %v2828 = vunpack.c.0.s8 %v2827
        %v2829 = vlaneseq
        %v2830 = vshrl.u32 %v2829, 7
        %v2831 = vsub.s32 %v2828, %v2830
        %v2832 = vrot.slane %v2025, %v2831
        %v2834 = vunpack.c.l.s4 269488144
        %v2835 = vunpack.c.0.s8 %v2834
        %v2836 = vlaneseq
        %v2837 = vshrl.u32 %v2836, 7
        %v2838 = vsub.s32 %v2835, %v2837
        %v2839 = vrot.slane %v2028, %v2838
        %v2841 = vunpack.c.l.s4 842150450
        %v2842 = vunpack.c.0.s8 %v2841
        %v2843 = vlaneseq
        %v2844 = vshrl.u32 %v2843, 7
        %v2845 = vsub.s32 %v2842, %v2844
        %v2846 = vrot.slane %v2028, %v2845
        %v2848 = vunpack.c.l.s4 1414812756
        %v2849 = vunpack.c.0.s8 %v2848
        %v2850 = vlaneseq
        %v2851 = vshrl.u32 %v2850, 7
        %v2852 = vsub.s32 %v2849, %v2851
        %v2853 = vrot.slane %v2028, %v2852
        %v2855 = vunpack.c.l.s4 1987475062
        %v2856 = vunpack.c.0.s8 %v2855
        %v2857 = vlaneseq
        %v2858 = vshrl.u32 %v2857, 7
        %v2859 = vsub.s32 %v2856, %v2858
        %v2860 = vrot.slane %v2028, %v2859
        %v2862 = vunpack.c.l.s4 269488144
        %v2863 = vunpack.c.0.s8 %v2862
        %v2864 = vlaneseq
        %v2865 = vshrl.u32 %v2864, 7
        %v2866 = vsub.s32 %v2863, %v2865
        %v2867 = vrot.slane %v2031, %v2866
        %v2869 = vunpack.c.l.s4 842150450
        %v2870 = vunpack.c.0.s8 %v2869
        %v2871 = vlaneseq
        %v2872 = vshrl.u32 %v2871, 7
        %v2873 = vsub.s32 %v2870, %v2872
        %v2874 = vrot.slane %v2031, %v2873
        %v2876 = vunpack.c.l.s4 1414812756
        %v2877 = vunpack.c.0.s8 %v2876
        %v2878 = vlaneseq
        %v2879 = vshrl.u32 %v2878, 7
        %v2880 = vsub.s32 %v2877, %v2879
        %v2881 = vrot.slane %v2031, %v2880
        %v2883 = vunpack.c.l.s4 1987475062
        %v2884 = vunpack.c.0.s8 %v2883
        %v2885 = vlaneseq
        %v2886 = vshrl.u32 %v2885, 7
        %v2887 = vsub.s32 %v2884, %v2886
        %v2888 = vrot.slane %v2031, %v2887
        %v2890 = vunpack.c.l.s4 269488144
        %v2891 = vunpack.c.0.s8 %v2890
        %v2892 = vlaneseq
        %v2893 = vshrl.u32 %v2892, 7
        %v2894 = vsub.s32 %v2891, %v2893
        %v2895 = vrot.slane %v2034, %v2894
        %v2897 = vunpack.c.l.s4 842150450
        %v2898 = vunpack.c.0.s8 %v2897
        %v2899 = vlaneseq
        %v2900 = vshrl.u32 %v2899, 7
        %v2901 = vsub.s32 %v2898, %v2900
        %v2902 = vrot.slane %v2034, %v2901
        %v2904 = vunpack.c.l.s4 1414812756
        %v2905 = vunpack.c.0.s8 %v2904
        %v2906 = vlaneseq
        %v2907 = vshrl.u32 %v2906, 7
        %v2908 = vsub.s32 %v2905, %v2907
        %v2909 = vrot.slane %v2034, %v2908
        %v2911 = vunpack.c.l.s4 1987475062
        %v2912 = vunpack.c.0.s8 %v2911
        %v2913 = vlaneseq
        %v2914 = vshrl.u32 %v2913, 7
        %v2915 = vsub.s32 %v2912, %v2914
        %v2916 = vrot.slane %v2034, %v2915
        %v2918 = vunpack.c.l.s4 269488144
        %v2919 = vunpack.c.0.s8 %v2918
        %v2920 = vlaneseq
        %v2921 = vshrl.u32 %v2920, 7
        %v2922 = vsub.s32 %v2919, %v2921
        %v2923 = vrot.slane %v2037, %v2922
        %v2925 = vunpack.c.l.s4 842150450
        %v2926 = vunpack.c.0.s8 %v2925
        %v2927 = vlaneseq
        %v2928 = vshrl.u32 %v2927, 7
        %v2929 = vsub.s32 %v2926, %v2928
        %v2930 = vrot.slane %v2037, %v2929
        %v2932 = vunpack.c.l.s4 1414812756
        %v2933 = vunpack.c.0.s8 %v2932
        %v2934 = vlaneseq
        %v2935 = vshrl.u32 %v2934, 7
        %v2936 = vsub.s32 %v2933, %v2935
        %v2937 = vrot.slane %v2037, %v2936
        %v2939 = vunpack.c.l.s4 1987475062
        %v2940 = vunpack.c.0.s8 %v2939
        %v2941 = vlaneseq
        %v2942 = vshrl.u32 %v2941, 7
        %v2943 = vsub.s32 %v2940, %v2942
        %v2944 = vrot.slane %v2037, %v2943
        %v2946 = vunpack.c.l.s4 269488144
        %v2947 = vunpack.c.0.s8 %v2946
        %v2948 = vlaneseq
        %v2949 = vshrl.u32 %v2948, 7
        %v2950 = vsub.s32 %v2947, %v2949
        %v2951 = vrot.slane %v2040, %v2950
        %v2953 = vunpack.c.l.s4 842150450
        %v2954 = vunpack.c.0.s8 %v2953
        %v2955 = vlaneseq
        %v2956 = vshrl.u32 %v2955, 7
        %v2957 = vsub.s32 %v2954, %v2956
        %v2958 = vrot.slane %v2040, %v2957
        %v2960 = vunpack.c.l.s4 1414812756
        %v2961 = vunpack.c.0.s8 %v2960
        %v2962 = vlaneseq
        %v2963 = vshrl.u32 %v2962, 7
        %v2964 = vsub.s32 %v2961, %v2963
        %v2965 = vrot.slane %v2040, %v2964
        %v2967 = vunpack.c.l.s4 1987475062
        %v2968 = vunpack.c.0.s8 %v2967
        %v2969 = vlaneseq
        %v2970 = vshrl.u32 %v2969, 7
        %v2971 = vsub.s32 %v2968, %v2970
        %v2972 = vrot.slane %v2040, %v2971
        %v2974 = vunpack.c.l.s4 269488144
        %v2975 = vunpack.c.0.s8 %v2974
        %v2976 = vlaneseq
        %v2977 = vshrl.u32 %v2976, 7
        %v2978 = vsub.s32 %v2975, %v2977
        %v2979 = vrot.slane %v2043, %v2978
        %v2981 = vunpack.c.l.s4 842150450
        %v2982 = vunpack.c.0.s8 %v2981
        %v2983 = vlaneseq
        %v2984 = vshrl.u32 %v2983, 7
        %v2985 = vsub.s32 %v2982, %v2984
        %v2986 = vrot.slane %v2043, %v2985
        %v2988 = vunpack.c.l.s4 1414812756
        %v2989 = vunpack.c.0.s8 %v2988
        %v2990 = vlaneseq
        %v2991 = vshrl.u32 %v2990, 7
        %v2992 = vsub.s32 %v2989, %v2991
        %v2993 = vrot.slane %v2043, %v2992
        %v2995 = vunpack.c.l.s4 1987475062
        %v2996 = vunpack.c.0.s8 %v2995
        %v2997 = vlaneseq
        %v2998 = vshrl.u32 %v2997, 7
        %v2999 = vsub.s32 %v2996, %v2998
        %v3000 = vrot.slane %v2043, %v2999
        %v3002 = vunpack.c.l.s4 269488144
        %v3003 = vunpack.c.0.s8 %v3002
        %v3004 = vlaneseq
        %v3005 = vshrl.u32 %v3004, 7
        %v3006 = vsub.s32 %v3003, %v3005
        %v3007 = vrot.slane %v2046, %v3006
        %v3009 = vunpack.c.l.s4 842150450
        %v3010 = vunpack.c.0.s8 %v3009
        %v3011 = vlaneseq
        %v3012 = vshrl.u32 %v3011, 7
        %v3013 = vsub.s32 %v3010, %v3012
        %v3014 = vrot.slane %v2046, %v3013
        %v3016 = vunpack.c.l.s4 1414812756
        %v3017 = vunpack.c.0.s8 %v3016
        %v3018 = vlaneseq
        %v3019 = vshrl.u32 %v3018, 7
        %v3020 = vsub.s32 %v3017, %v3019
        %v3021 = vrot.slane %v2046, %v3020
        %v3023 = vunpack.c.l.s4 1987475062
        %v3024 = vunpack.c.0.s8 %v3023
        %v3025 = vlaneseq
        %v3026 = vshrl.u32 %v3025, 7
        %v3027 = vsub.s32 %v3024, %v3026
        %v3028 = vrot.slane %v2046, %v3027
        %v3030 = vunpack.c.l.s4 269488144
        %v3031 = vunpack.c.0.s8 %v3030
        %v3032 = vlaneseq
        %v3033 = vshrl.u32 %v3032, 7
        %v3034 = vsub.s32 %v3031, %v3033
        %v3035 = vrot.slane %v2049, %v3034
        %v3037 = vunpack.c.l.s4 842150450
        %v3038 = vunpack.c.0.s8 %v3037
        %v3039 = vlaneseq
        %v3040 = vshrl.u32 %v3039, 7
        %v3041 = vsub.s32 %v3038, %v3040
        %v3042 = vrot.slane %v2049, %v3041
        %v3044 = vunpack.c.l.s4 1414812756
        %v3045 = vunpack.c.0.s8 %v3044
        %v3046 = vlaneseq
        %v3047 = vshrl.u32 %v3046, 7
        %v3048 = vsub.s32 %v3045, %v3047
        %v3049 = vrot.slane %v2049, %v3048
        %v3051 = vunpack.c.l.s4 1987475062
        %v3052 = vunpack.c.0.s8 %v3051
        %v3053 = vlaneseq
        %v3054 = vshrl.u32 %v3053, 7
        %v3055 = vsub.s32 %v3052, %v3054
        %v3056 = vrot.slane %v2049, %v3055
        %v3058 = vunpack.c.l.s4 269488144
        %v3059 = vunpack.c.0.s8 %v3058
        %v3060 = vlaneseq
        %v3061 = vshrl.u32 %v3060, 7
        %v3062 = vsub.s32 %v3059, %v3061
        %v3063 = vrot.slane %v2052, %v3062
        %v3065 = vunpack.c.l.s4 842150450
        %v3066 = vunpack.c.0.s8 %v3065
        %v3067 = vlaneseq
        %v3068 = vshrl.u32 %v3067, 7
        %v3069 = vsub.s32 %v3066, %v3068
        %v3070 = vrot.slane %v2052, %v3069
        %v3072 = vunpack.c.l.s4 1414812756
        %v3073 = vunpack.c.0.s8 %v3072
        %v3074 = vlaneseq
        %v3075 = vshrl.u32 %v3074, 7
        %v3076 = vsub.s32 %v3073, %v3075
        %v3077 = vrot.slane %v2052, %v3076
        %v3079 = vunpack.c.l.s4 1987475062
        %v3080 = vunpack.c.0.s8 %v3079
        %v3081 = vlaneseq
        %v3082 = vshrl.u32 %v3081, 7
        %v3083 = vsub.s32 %v3080, %v3082
        %v3084 = vrot.slane %v2052, %v3083
        %v3086 = vunpack.c.l.s4 269488144
        %v3087 = vunpack.c.0.s8 %v3086
        %v3088 = vlaneseq
        %v3089 = vshrl.u32 %v3088, 7
        %v3090 = vsub.s32 %v3087, %v3089
        %v3091 = vrot.slane %v2055, %v3090
        %v3093 = vunpack.c.l.s4 842150450
        %v3094 = vunpack.c.0.s8 %v3093
        %v3095 = vlaneseq
        %v3096 = vshrl.u32 %v3095, 7
        %v3097 = vsub.s32 %v3094, %v3096
        %v3098 = vrot.slane %v2055, %v3097
        %v3100 = vunpack.c.l.s4 1414812756
        %v3101 = vunpack.c.0.s8 %v3100
        %v3102 = vlaneseq
        %v3103 = vshrl.u32 %v3102, 7
        %v3104 = vsub.s32 %v3101, %v3103
        %v3105 = vrot.slane %v2055, %v3104
        %v3107 = vunpack.c.l.s4 1987475062
        %v3108 = vunpack.c.0.s8 %v3107
        %v3109 = vlaneseq
        %v3110 = vshrl.u32 %v3109, 7
        %v3111 = vsub.s32 %v3108, %v3110
        %v3112 = vrot.slane %v2055, %v3111
        %v3114 = vunpack.c.l.s4 269488144
        %v3115 = vunpack.c.0.s8 %v3114
        %v3116 = vlaneseq
        %v3117 = vshrl.u32 %v3116, 7
        %v3118 = vsub.s32 %v3115, %v3117
        %v3119 = vrot.slane %v2058, %v3118
        %v3121 = vunpack.c.l.s4 842150450
        %v3122 = vunpack.c.0.s8 %v3121
        %v3123 = vlaneseq
        %v3124 = vshrl.u32 %v3123, 7
        %v3125 = vsub.s32 %v3122, %v3124
        %v3126 = vrot.slane %v2058, %v3125
        %v3128 = vunpack.c.l.s4 1414812756
        %v3129 = vunpack.c.0.s8 %v3128
        %v3130 = vlaneseq
        %v3131 = vshrl.u32 %v3130, 7
        %v3132 = vsub.s32 %v3129, %v3131
        %v3133 = vrot.slane %v2058, %v3132
        %v3135 = vunpack.c.l.s4 1987475062
        %v3136 = vunpack.c.0.s8 %v3135
        %v3137 = vlaneseq
        %v3138 = vshrl.u32 %v3137, 7
        %v3139 = vsub.s32 %v3136, %v3138
        %v3140 = vrot.slane %v2058, %v3139
        %v3142 = vunpack.c.l.s4 269488144
        %v3143 = vunpack.c.0.s8 %v3142
        %v3144 = vlaneseq
        %v3145 = vshrl.u32 %v3144, 7
        %v3146 = vsub.s32 %v3143, %v3145
        %v3147 = vrot.slane %v2061, %v3146
        %v3149 = vunpack.c.l.s4 842150450
        %v3150 = vunpack.c.0.s8 %v3149
        %v3151 = vlaneseq
        %v3152 = vshrl.u32 %v3151, 7
        %v3153 = vsub.s32 %v3150, %v3152
        %v3154 = vrot.slane %v2061, %v3153
        %v3156 = vunpack.c.l.s4 1414812756
        %v3157 = vunpack.c.0.s8 %v3156
        %v3158 = vlaneseq
        %v3159 = vshrl.u32 %v3158, 7
        %v3160 = vsub.s32 %v3157, %v3159
        %v3161 = vrot.slane %v2061, %v3160
        %v3163 = vunpack.c.l.s4 1987475062
        %v3164 = vunpack.c.0.s8 %v3163
        %v3165 = vlaneseq
        %v3166 = vshrl.u32 %v3165, 7
        %v3167 = vsub.s32 %v3164, %v3166
        %v3168 = vrot.slane %v2061, %v3167
        %v3170 = vunpack.c.l.s4 269488144
        %v3171 = vunpack.c.0.s8 %v3170
        %v3172 = vlaneseq
        %v3173 = vshrl.u32 %v3172, 7
        %v3174 = vsub.s32 %v3171, %v3173
        %v3175 = vrot.slane %v2064, %v3174
        %v3177 = vunpack.c.l.s4 842150450
        %v3178 = vunpack.c.0.s8 %v3177
        %v3179 = vlaneseq
        %v3180 = vshrl.u32 %v3179, 7
        %v3181 = vsub.s32 %v3178, %v3180
        %v3182 = vrot.slane %v2064, %v3181
        %v3184 = vunpack.c.l.s4 1414812756
        %v3185 = vunpack.c.0.s8 %v3184
        %v3186 = vlaneseq
        %v3187 = vshrl.u32 %v3186, 7
        %v3188 = vsub.s32 %v3185, %v3187
        %v3189 = vrot.slane %v2064, %v3188
        %v3191 = vunpack.c.l.s4 1987475062
        %v3192 = vunpack.c.0.s8 %v3191
        %v3193 = vlaneseq
        %v3194 = vshrl.u32 %v3193, 7
        %v3195 = vsub.s32 %v3192, %v3194
        %v3196 = vrot.slane %v2064, %v3195
        %v3198 = vunpack.c.l.s4 269488144
        %v3199 = vunpack.c.0.s8 %v3198
        %v3200 = vlaneseq
        %v3201 = vshrl.u32 %v3200, 7
        %v3202 = vsub.s32 %v3199, %v3201
        %v3203 = vrot.slane %v2067, %v3202
        %v3205 = vunpack.c.l.s4 842150450
        %v3206 = vunpack.c.0.s8 %v3205
        %v3207 = vlaneseq
        %v3208 = vshrl.u32 %v3207, 7
        %v3209 = vsub.s32 %v3206, %v3208
        %v3210 = vrot.slane %v2067, %v3209
        %v3212 = vunpack.c.l.s4 1414812756
        %v3213 = vunpack.c.0.s8 %v3212
        %v3214 = vlaneseq
        %v3215 = vshrl.u32 %v3214, 7
        %v3216 = vsub.s32 %v3213, %v3215
        %v3217 = vrot.slane %v2067, %v3216
        %v3219 = vunpack.c.l.s4 1987475062
        %v3220 = vunpack.c.0.s8 %v3219
        %v3221 = vlaneseq
        %v3222 = vshrl.u32 %v3221, 7
        %v3223 = vsub.s32 %v3220, %v3222
        %v3224 = vrot.slane %v2067, %v3223
        %v3226 = vunpack.c.l.s4 269488144
        %v3227 = vunpack.c.0.s8 %v3226
        %v3228 = vlaneseq
        %v3229 = vshrl.u32 %v3228, 7
        %v3230 = vsub.s32 %v3227, %v3229
        %v3231 = vrot.slane %v2070, %v3230
        %v3233 = vunpack.c.l.s4 842150450
        %v3234 = vunpack.c.0.s8 %v3233
        %v3235 = vlaneseq
        %v3236 = vshrl.u32 %v3235, 7
        %v3237 = vsub.s32 %v3234, %v3236
        %v3238 = vrot.slane %v2070, %v3237
        %v3240 = vunpack.c.l.s4 1414812756
        %v3241 = vunpack.c.0.s8 %v3240
        %v3242 = vlaneseq
        %v3243 = vshrl.u32 %v3242, 7
        %v3244 = vsub.s32 %v3241, %v3243
        %v3245 = vrot.slane %v2070, %v3244
        %v3247 = vunpack.c.l.s4 1987475062
        %v3248 = vunpack.c.0.s8 %v3247
        %v3249 = vlaneseq
        %v3250 = vshrl.u32 %v3249, 7
        %v3251 = vsub.s32 %v3248, %v3250
        %v3252 = vrot.slane %v2070, %v3251
        %v3254 = vunpack.c.l.s4 269488144
        %v3255 = vunpack.c.0.s8 %v3254
        %v3256 = vlaneseq
        %v3257 = vshrl.u32 %v3256, 7
        %v3258 = vsub.s32 %v3255, %v3257
        %v3259 = vrot.slane %v2073, %v3258
        %v3261 = vunpack.c.l.s4 842150450
        %v3262 = vunpack.c.0.s8 %v3261
        %v3263 = vlaneseq
        %v3264 = vshrl.u32 %v3263, 7
        %v3265 = vsub.s32 %v3262, %v3264
        %v3266 = vrot.slane %v2073, %v3265
        %v3268 = vunpack.c.l.s4 1414812756
        %v3269 = vunpack.c.0.s8 %v3268
        %v3270 = vlaneseq
        %v3271 = vshrl.u32 %v3270, 7
        %v3272 = vsub.s32 %v3269, %v3271
        %v3273 = vrot.slane %v2073, %v3272
        %v3275 = vunpack.c.l.s4 1987475062
        %v3276 = vunpack.c.0.s8 %v3275
        %v3277 = vlaneseq
        %v3278 = vshrl.u32 %v3277, 7
        %v3279 = vsub.s32 %v3276, %v3278
        %v3280 = vrot.slane %v2073, %v3279
        %v3282 = vunpack.c.l.s4 269488144
        %v3283 = vunpack.c.0.s8 %v3282
        %v3284 = vlaneseq
        %v3285 = vshrl.u32 %v3284, 7
        %v3286 = vsub.s32 %v3283, %v3285
        %v3287 = vrot.slane %v2076, %v3286
        %v3289 = vunpack.c.l.s4 842150450
        %v3290 = vunpack.c.0.s8 %v3289
        %v3291 = vlaneseq
        %v3292 = vshrl.u32 %v3291, 7
        %v3293 = vsub.s32 %v3290, %v3292
        %v3294 = vrot.slane %v2076, %v3293
        %v3296 = vunpack.c.l.s4 1414812756
        %v3297 = vunpack.c.0.s8 %v3296
        %v3298 = vlaneseq
        %v3299 = vshrl.u32 %v3298, 7
        %v3300 = vsub.s32 %v3297, %v3299
        %v3301 = vrot.slane %v2076, %v3300
        %v3303 = vunpack.c.l.s4 1987475062
        %v3304 = vunpack.c.0.s8 %v3303
        %v3305 = vlaneseq
        %v3306 = vshrl.u32 %v3305, 7
        %v3307 = vsub.s32 %v3304, %v3306
        %v3308 = vrot.slane %v2076, %v3307
        %v3310 = vunpack.c.l.s4 269488144
        %v3311 = vunpack.c.0.s8 %v3310
        %v3312 = vlaneseq
        %v3313 = vshrl.u32 %v3312, 7
        %v3314 = vsub.s32 %v3311, %v3313
        %v3315 = vrot.slane %v2079, %v3314
        %v3317 = vunpack.c.l.s4 842150450
        %v3318 = vunpack.c.0.s8 %v3317
        %v3319 = vlaneseq
        %v3320 = vshrl.u32 %v3319, 7
        %v3321 = vsub.s32 %v3318, %v3320
        %v3322 = vrot.slane %v2079, %v3321
        %v3324 = vunpack.c.l.s4 1414812756
        %v3325 = vunpack.c.0.s8 %v3324
        %v3326 = vlaneseq
        %v3327 = vshrl.u32 %v3326, 7
        %v3328 = vsub.s32 %v3325, %v3327
        %v3329 = vrot.slane %v2079, %v3328
        %v3331 = vunpack.c.l.s4 1987475062
        %v3332 = vunpack.c.0.s8 %v3331
        %v3333 = vlaneseq
        %v3334 = vshrl.u32 %v3333, 7
        %v3335 = vsub.s32 %v3332, %v3334
        %v3336 = vrot.slane %v2079, %v3335
        %v3338 = vunpack.c.l.s4 269488144
        %v3339 = vunpack.c.0.s8 %v3338
        %v3340 = vlaneseq
        %v3341 = vshrl.u32 %v3340, 7
        %v3342 = vsub.s32 %v3339, %v3341
        %v3343 = vrot.slane %v2082, %v3342
        %v3345 = vunpack.c.l.s4 842150450
        %v3346 = vunpack.c.0.s8 %v3345
        %v3347 = vlaneseq
        %v3348 = vshrl.u32 %v3347, 7
        %v3349 = vsub.s32 %v3346, %v3348
        %v3350 = vrot.slane %v2082, %v3349
        %v3352 = vunpack.c.l.s4 1414812756
        %v3353 = vunpack.c.0.s8 %v3352
        %v3354 = vlaneseq
        %v3355 = vshrl.u32 %v3354, 7
        %v3356 = vsub.s32 %v3353, %v3355
        %v3357 = vrot.slane %v2082, %v3356
        %v3359 = vunpack.c.l.s4 1987475062
        %v3360 = vunpack.c.0.s8 %v3359
        %v3361 = vlaneseq
        %v3362 = vshrl.u32 %v3361, 7
        %v3363 = vsub.s32 %v3360, %v3362
        %v3364 = vrot.slane %v2082, %v3363
        %v3366 = vunpack.c.l.s4 269488144
        %v3367 = vunpack.c.0.s8 %v3366
        %v3368 = vlaneseq
        %v3369 = vshrl.u32 %v3368, 7
        %v3370 = vsub.s32 %v3367, %v3369
        %v3371 = vrot.slane %v2085, %v3370
        %v3373 = vunpack.c.l.s4 842150450
        %v3374 = vunpack.c.0.s8 %v3373
        %v3375 = vlaneseq
        %v3376 = vshrl.u32 %v3375, 7
        %v3377 = vsub.s32 %v3374, %v3376
        %v3378 = vrot.slane %v2085, %v3377
        %v3380 = vunpack.c.l.s4 1414812756
        %v3381 = vunpack.c.0.s8 %v3380
        %v3382 = vlaneseq
        %v3383 = vshrl.u32 %v3382, 7
        %v3384 = vsub.s32 %v3381, %v3383
        %v3385 = vrot.slane %v2085, %v3384
        %v3387 = vunpack.c.l.s4 1987475062
        %v3388 = vunpack.c.0.s8 %v3387
        %v3389 = vlaneseq
        %v3390 = vshrl.u32 %v3389, 7
        %v3391 = vsub.s32 %v3388, %v3390
        %v3392 = vrot.slane %v2085, %v3391
        %v3394 = vunpack.c.l.s4 269488144
        %v3395 = vunpack.c.0.s8 %v3394
        %v3396 = vlaneseq
        %v3397 = vshrl.u32 %v3396, 7
        %v3398 = vsub.s32 %v3395, %v3397
        %v3399 = vrot.slane %v2088, %v3398
        %v3401 = vunpack.c.l.s4 842150450
        %v3402 = vunpack.c.0.s8 %v3401
        %v3403 = vlaneseq
        %v3404 = vshrl.u32 %v3403, 7
        %v3405 = vsub.s32 %v3402, %v3404
        %v3406 = vrot.slane %v2088, %v3405
        %v3408 = vunpack.c.l.s4 1414812756
        %v3409 = vunpack.c.0.s8 %v3408
        %v3410 = vlaneseq
        %v3411 = vshrl.u32 %v3410, 7
        %v3412 = vsub.s32 %v3409, %v3411
        %v3413 = vrot.slane %v2088, %v3412
        %v3415 = vunpack.c.l.s4 1987475062
        %v3416 = vunpack.c.0.s8 %v3415
        %v3417 = vlaneseq
        %v3418 = vshrl.u32 %v3417, 7
        %v3419 = vsub.s32 %v3416, %v3418
        %v3420 = vrot.slane %v2088, %v3419
        %v3422 = vunpack.c.l.s4 269488144
        %v3423 = vunpack.c.0.s8 %v3422
        %v3424 = vlaneseq
        %v3425 = vshrl.u32 %v3424, 7
        %v3426 = vsub.s32 %v3423, %v3425
        %v3427 = vrot.slane %v2091, %v3426
        %v3429 = vunpack.c.l.s4 842150450
        %v3430 = vunpack.c.0.s8 %v3429
        %v3431 = vlaneseq
        %v3432 = vshrl.u32 %v3431, 7
        %v3433 = vsub.s32 %v3430, %v3432
        %v3434 = vrot.slane %v2091, %v3433
        %v3436 = vunpack.c.l.s4 1414812756
        %v3437 = vunpack.c.0.s8 %v3436
        %v3438 = vlaneseq
        %v3439 = vshrl.u32 %v3438, 7
        %v3440 = vsub.s32 %v3437, %v3439
        %v3441 = vrot.slane %v2091, %v3440
        %v3443 = vunpack.c.l.s4 1987475062
        %v3444 = vunpack.c.0.s8 %v3443
        %v3445 = vlaneseq
        %v3446 = vshrl.u32 %v3445, 7
        %v3447 = vsub.s32 %v3444, %v3446
        %v3448 = vrot.slane %v2091, %v3447
        %v3450 = vunpack.c.l.s4 269488144
        %v3451 = vunpack.c.0.s8 %v3450
        %v3452 = vlaneseq
        %v3453 = vshrl.u32 %v3452, 7
        %v3454 = vsub.s32 %v3451, %v3453
        %v3455 = vrot.slane %v2094, %v3454
        %v3457 = vunpack.c.l.s4 842150450
        %v3458 = vunpack.c.0.s8 %v3457
        %v3459 = vlaneseq
        %v3460 = vshrl.u32 %v3459, 7
        %v3461 = vsub.s32 %v3458, %v3460
        %v3462 = vrot.slane %v2094, %v3461
        %v3464 = vunpack.c.l.s4 1414812756
        %v3465 = vunpack.c.0.s8 %v3464
        %v3466 = vlaneseq
        %v3467 = vshrl.u32 %v3466, 7
        %v3468 = vsub.s32 %v3465, %v3467
        %v3469 = vrot.slane %v2094, %v3468
        %v3471 = vunpack.c.l.s4 1987475062
        %v3472 = vunpack.c.0.s8 %v3471
        %v3473 = vlaneseq
        %v3474 = vshrl.u32 %v3473, 7
        %v3475 = vsub.s32 %v3472, %v3474
        %v3476 = vrot.slane %v2094, %v3475
        %v3478 = vunpack.c.l.s4 269488144
        %v3479 = vunpack.c.0.s8 %v3478
        %v3480 = vlaneseq
        %v3481 = vshrl.u32 %v3480, 7
        %v3482 = vsub.s32 %v3479, %v3481
        %v3483 = vrot.slane %v2097, %v3482
        %v3485 = vunpack.c.l.s4 842150450
        %v3486 = vunpack.c.0.s8 %v3485
        %v3487 = vlaneseq
        %v3488 = vshrl.u32 %v3487, 7
        %v3489 = vsub.s32 %v3486, %v3488
        %v3490 = vrot.slane %v2097, %v3489
        %v3492 = vunpack.c.l.s4 1414812756
        %v3493 = vunpack.c.0.s8 %v3492
        %v3494 = vlaneseq
        %v3495 = vshrl.u32 %v3494, 7
        %v3496 = vsub.s32 %v3493, %v3495
        %v3497 = vrot.slane %v2097, %v3496
        %v3499 = vunpack.c.l.s4 1987475062
        %v3500 = vunpack.c.0.s8 %v3499
        %v3501 = vlaneseq
        %v3502 = vshrl.u32 %v3501, 7
        %v3503 = vsub.s32 %v3500, %v3502
        %v3504 = vrot.slane %v2097, %v3503
        %v3506 = vunpack.c.l.s4 269488144
        %v3507 = vunpack.c.0.s8 %v3506
        %v3508 = vlaneseq
        %v3509 = vshrl.u32 %v3508, 7
        %v3510 = vsub.s32 %v3507, %v3509
        %v3511 = vrot.slane %v2100, %v3510
        %v3513 = vunpack.c.l.s4 842150450
        %v3514 = vunpack.c.0.s8 %v3513
        %v3515 = vlaneseq
        %v3516 = vshrl.u32 %v3515, 7
        %v3517 = vsub.s32 %v3514, %v3516
        %v3518 = vrot.slane %v2100, %v3517
        %v3520 = vunpack.c.l.s4 1414812756
        %v3521 = vunpack.c.0.s8 %v3520
        %v3522 = vlaneseq
        %v3523 = vshrl.u32 %v3522, 7
        %v3524 = vsub.s32 %v3521, %v3523
        %v3525 = vrot.slane %v2100, %v3524
        %v3527 = vunpack.c.l.s4 1987475062
        %v3528 = vunpack.c.0.s8 %v3527
        %v3529 = vlaneseq
        %v3530 = vshrl.u32 %v3529, 7
        %v3531 = vsub.s32 %v3528, %v3530
        %v3532 = vrot.slane %v2100, %v3531
        %v3534 = vunpack.c.l.s4 269488144
        %v3535 = vunpack.c.0.s8 %v3534
        %v3536 = vlaneseq
        %v3537 = vshrl.u32 %v3536, 7
        %v3538 = vsub.s32 %v3535, %v3537
        %v3539 = vrot.slane %v2103, %v3538
        %v3541 = vunpack.c.l.s4 842150450
        %v3542 = vunpack.c.0.s8 %v3541
        %v3543 = vlaneseq
        %v3544 = vshrl.u32 %v3543, 7
        %v3545 = vsub.s32 %v3542, %v3544
        %v3546 = vrot.slane %v2103, %v3545
        %v3548 = vunpack.c.l.s4 1414812756
        %v3549 = vunpack.c.0.s8 %v3548
        %v3550 = vlaneseq
        %v3551 = vshrl.u32 %v3550, 7
        %v3552 = vsub.s32 %v3549, %v3551
        %v3553 = vrot.slane %v2103, %v3552
        %v3555 = vunpack.c.l.s4 1987475062
        %v3556 = vunpack.c.0.s8 %v3555
        %v3557 = vlaneseq
        %v3558 = vshrl.u32 %v3557, 7
        %v3559 = vsub.s32 %v3556, %v3558
        %v3560 = vrot.slane %v2103, %v3559
        %v3562 = vunpack.c.l.s4 269488144
        %v3563 = vunpack.c.0.s8 %v3562
        %v3564 = vlaneseq
        %v3565 = vshrl.u32 %v3564, 7
        %v3566 = vsub.s32 %v3563, %v3565
        %v3567 = vrot.slane %v2106, %v3566
        %v3569 = vunpack.c.l.s4 842150450
        %v3570 = vunpack.c.0.s8 %v3569
        %v3571 = vlaneseq
        %v3572 = vshrl.u32 %v3571, 7
        %v3573 = vsub.s32 %v3570, %v3572
        %v3574 = vrot.slane %v2106, %v3573
        %v3576 = vunpack.c.l.s4 1414812756
        %v3577 = vunpack.c.0.s8 %v3576
        %v3578 = vlaneseq
        %v3579 = vshrl.u32 %v3578, 7
        %v3580 = vsub.s32 %v3577, %v3579
        %v3581 = vrot.slane %v2106, %v3580
        %v3583 = vunpack.c.l.s4 1987475062
        %v3584 = vunpack.c.0.s8 %v3583
        %v3585 = vlaneseq
        %v3586 = vshrl.u32 %v3585, 7
        %v3587 = vsub.s32 %v3584, %v3586
        %v3588 = vrot.slane %v2106, %v3587
        %v3590 = vunpack.c.l.s4 269488144
        %v3591 = vunpack.c.0.s8 %v3590
        %v3592 = vlaneseq
        %v3593 = vshrl.u32 %v3592, 7
        %v3594 = vsub.s32 %v3591, %v3593
        %v3595 = vrot.slane %v2109, %v3594
        %v3597 = vunpack.c.l.s4 842150450
        %v3598 = vunpack.c.0.s8 %v3597
        %v3599 = vlaneseq
        %v3600 = vshrl.u32 %v3599, 7
        %v3601 = vsub.s32 %v3598, %v3600
        %v3602 = vrot.slane %v2109, %v3601
        %v3604 = vunpack.c.l.s4 1414812756
        %v3605 = vunpack.c.0.s8 %v3604
        %v3606 = vlaneseq
        %v3607 = vshrl.u32 %v3606, 7
        %v3608 = vsub.s32 %v3605, %v3607
        %v3609 = vrot.slane %v2109, %v3608
        %v3611 = vunpack.c.l.s4 1987475062
        %v3612 = vunpack.c.0.s8 %v3611
        %v3613 = vlaneseq
        %v3614 = vshrl.u32 %v3613, 7
        %v3615 = vsub.s32 %v3612, %v3614
        %v3616 = vrot.slane %v2109, %v3615
        %v3618 = vunpack.c.l.s4 269488144
        %v3619 = vunpack.c.0.s8 %v3618
        %v3620 = vlaneseq
        %v3621 = vshrl.u32 %v3620, 7
        %v3622 = vsub.s32 %v3619, %v3621
        %v3623 = vrot.slane %v2112, %v3622
        %v3625 = vunpack.c.l.s4 842150450
        %v3626 = vunpack.c.0.s8 %v3625
        %v3627 = vlaneseq
        %v3628 = vshrl.u32 %v3627, 7
        %v3629 = vsub.s32 %v3626, %v3628
        %v3630 = vrot.slane %v2112, %v3629
        %v3632 = vunpack.c.l.s4 1414812756
        %v3633 = vunpack.c.0.s8 %v3632
        %v3634 = vlaneseq
        %v3635 = vshrl.u32 %v3634, 7
        %v3636 = vsub.s32 %v3633, %v3635
        %v3637 = vrot.slane %v2112, %v3636
        %v3639 = vunpack.c.l.s4 1987475062
        %v3640 = vunpack.c.0.s8 %v3639
        %v3641 = vlaneseq
        %v3642 = vshrl.u32 %v3641, 7
        %v3643 = vsub.s32 %v3640, %v3642
        %v3644 = vrot.slane %v2112, %v3643
        %v3646 = vunpack.c.l.s4 269488144
        %v3647 = vunpack.c.0.s8 %v3646
        %v3648 = vlaneseq
        %v3649 = vshrl.u32 %v3648, 7
        %v3650 = vsub.s32 %v3647, %v3649
        %v3651 = vrot.slane %v2115, %v3650
        %v3653 = vunpack.c.l.s4 842150450
        %v3654 = vunpack.c.0.s8 %v3653
        %v3655 = vlaneseq
        %v3656 = vshrl.u32 %v3655, 7
        %v3657 = vsub.s32 %v3654, %v3656
        %v3658 = vrot.slane %v2115, %v3657
        %v3660 = vunpack.c.l.s4 1414812756
        %v3661 = vunpack.c.0.s8 %v3660
        %v3662 = vlaneseq
        %v3663 = vshrl.u32 %v3662, 7
        %v3664 = vsub.s32 %v3661, %v3663
        %v3665 = vrot.slane %v2115, %v3664
        %v3667 = vunpack.c.l.s4 1987475062
        %v3668 = vunpack.c.0.s8 %v3667
        %v3669 = vlaneseq
        %v3670 = vshrl.u32 %v3669, 7
        %v3671 = vsub.s32 %v3668, %v3670
        %v3672 = vrot.slane %v2115, %v3671
        %v3674 = vunpack.c.l.s4 269488144
        %v3675 = vunpack.c.0.s8 %v3674
        %v3676 = vlaneseq
        %v3677 = vshrl.u32 %v3676, 7
        %v3678 = vsub.s32 %v3675, %v3677
        %v3679 = vrot.slane %v2118, %v3678
        %v3681 = vunpack.c.l.s4 842150450
        %v3682 = vunpack.c.0.s8 %v3681
        %v3683 = vlaneseq
        %v3684 = vshrl.u32 %v3683, 7
        %v3685 = vsub.s32 %v3682, %v3684
        %v3686 = vrot.slane %v2118, %v3685
        %v3688 = vunpack.c.l.s4 1414812756
        %v3689 = vunpack.c.0.s8 %v3688
        %v3690 = vlaneseq
        %v3691 = vshrl.u32 %v3690, 7
        %v3692 = vsub.s32 %v3689, %v3691
        %v3693 = vrot.slane %v2118, %v3692
        %v3695 = vunpack.c.l.s4 1987475062
        %v3696 = vunpack.c.0.s8 %v3695
        %v3697 = vlaneseq
        %v3698 = vshrl.u32 %v3697, 7
        %v3699 = vsub.s32 %v3696, %v3698
        %v3700 = vrot.slane %v2118, %v3699
        %v3702 = vunpack.c.l.s4 269488144
        %v3703 = vunpack.c.0.s8 %v3702
        %v3704 = vlaneseq
        %v3705 = vshrl.u32 %v3704, 7
        %v3706 = vsub.s32 %v3703, %v3705
        %v3707 = vrot.slane %v2121, %v3706
        %v3709 = vunpack.c.l.s4 842150450
        %v3710 = vunpack.c.0.s8 %v3709
        %v3711 = vlaneseq
        %v3712 = vshrl.u32 %v3711, 7
        %v3713 = vsub.s32 %v3710, %v3712
        %v3714 = vrot.slane %v2121, %v3713
        %v3716 = vunpack.c.l.s4 1414812756
        %v3717 = vunpack.c.0.s8 %v3716
        %v3718 = vlaneseq
        %v3719 = vshrl.u32 %v3718, 7
        %v3720 = vsub.s32 %v3717, %v3719
        %v3721 = vrot.slane %v2121, %v3720
        %v3723 = vunpack.c.l.s4 1987475062
        %v3724 = vunpack.c.0.s8 %v3723
        %v3725 = vlaneseq
        %v3726 = vshrl.u32 %v3725, 7
        %v3727 = vsub.s32 %v3724, %v3726
        %v3728 = vrot.slane %v2121, %v3727
        %v3730 = vunpack.c.l.s4 269488144
        %v3731 = vunpack.c.0.s8 %v3730
        %v3732 = vlaneseq
        %v3733 = vshrl.u32 %v3732, 7
        %v3734 = vsub.s32 %v3731, %v3733
        %v3735 = vrot.slane %v2124, %v3734
        %v3737 = vunpack.c.l.s4 842150450
        %v3738 = vunpack.c.0.s8 %v3737
        %v3739 = vlaneseq
        %v3740 = vshrl.u32 %v3739, 7
        %v3741 = vsub.s32 %v3738, %v3740
        %v3742 = vrot.slane %v2124, %v3741
        %v3744 = vunpack.c.l.s4 1414812756
        %v3745 = vunpack.c.0.s8 %v3744
        %v3746 = vlaneseq
        %v3747 = vshrl.u32 %v3746, 7
        %v3748 = vsub.s32 %v3745, %v3747
        %v3749 = vrot.slane %v2124, %v3748
        %v3751 = vunpack.c.l.s4 1987475062
        %v3752 = vunpack.c.0.s8 %v3751
        %v3753 = vlaneseq
        %v3754 = vshrl.u32 %v3753, 7
        %v3755 = vsub.s32 %v3752, %v3754
        %v3756 = vrot.slane %v2124, %v3755
        %v3758 = vunpack.c.l.s4 269488144
        %v3759 = vunpack.c.0.s8 %v3758
        %v3760 = vlaneseq
        %v3761 = vshrl.u32 %v3760, 7
        %v3762 = vsub.s32 %v3759, %v3761
        %v3763 = vrot.slane %v2127, %v3762
        %v3765 = vunpack.c.l.s4 842150450
        %v3766 = vunpack.c.0.s8 %v3765
        %v3767 = vlaneseq
        %v3768 = vshrl.u32 %v3767, 7
        %v3769 = vsub.s32 %v3766, %v3768
        %v3770 = vrot.slane %v2127, %v3769
        %v3772 = vunpack.c.l.s4 1414812756
        %v3773 = vunpack.c.0.s8 %v3772
        %v3774 = vlaneseq
        %v3775 = vshrl.u32 %v3774, 7
        %v3776 = vsub.s32 %v3773, %v3775
        %v3777 = vrot.slane %v2127, %v3776
        %v3779 = vunpack.c.l.s4 1987475062
        %v3780 = vunpack.c.0.s8 %v3779
        %v3781 = vlaneseq
        %v3782 = vshrl.u32 %v3781, 7
        %v3783 = vsub.s32 %v3780, %v3782
        %v3784 = vrot.slane %v2127, %v3783
        %v3786 = vunpack.c.l.s4 269488144
        %v3787 = vunpack.c.0.s8 %v3786
        %v3788 = vlaneseq
        %v3789 = vshrl.u32 %v3788, 7
        %v3790 = vsub.s32 %v3787, %v3789
        %v3791 = vrot.slane %v2130, %v3790
        %v3793 = vunpack.c.l.s4 842150450
        %v3794 = vunpack.c.0.s8 %v3793
        %v3795 = vlaneseq
        %v3796 = vshrl.u32 %v3795, 7
        %v3797 = vsub.s32 %v3794, %v3796
        %v3798 = vrot.slane %v2130, %v3797
        %v3800 = vunpack.c.l.s4 1414812756
        %v3801 = vunpack.c.0.s8 %v3800
        %v3802 = vlaneseq
        %v3803 = vshrl.u32 %v3802, 7
        %v3804 = vsub.s32 %v3801, %v3803
        %v3805 = vrot.slane %v2130, %v3804
        %v3807 = vunpack.c.l.s4 1987475062
        %v3808 = vunpack.c.0.s8 %v3807
        %v3809 = vlaneseq
        %v3810 = vshrl.u32 %v3809, 7
        %v3811 = vsub.s32 %v3808, %v3810
        %v3812 = vrot.slane %v2130, %v3811
        %v3814 = vunpack.c.l.s4 269488144
        %v3815 = vunpack.c.0.s8 %v3814
        %v3816 = vlaneseq
        %v3817 = vshrl.u32 %v3816, 7
        %v3818 = vsub.s32 %v3815, %v3817
        %v3819 = vrot.slane %v2133, %v3818
        %v3821 = vunpack.c.l.s4 842150450
        %v3822 = vunpack.c.0.s8 %v3821
        %v3823 = vlaneseq
        %v3824 = vshrl.u32 %v3823, 7
        %v3825 = vsub.s32 %v3822, %v3824
        %v3826 = vrot.slane %v2133, %v3825
        %v3828 = vunpack.c.l.s4 1414812756
        %v3829 = vunpack.c.0.s8 %v3828
        %v3830 = vlaneseq
        %v3831 = vshrl.u32 %v3830, 7
        %v3832 = vsub.s32 %v3829, %v3831
        %v3833 = vrot.slane %v2133, %v3832
        %v3835 = vunpack.c.l.s4 1987475062
        %v3836 = vunpack.c.0.s8 %v3835
        %v3837 = vlaneseq
        %v3838 = vshrl.u32 %v3837, 7
        %v3839 = vsub.s32 %v3836, %v3838
        %v3840 = vrot.slane %v2133, %v3839
        %v3842 = vunpack.c.l.s4 269488144
        %v3843 = vunpack.c.0.s8 %v3842
        %v3844 = vlaneseq
        %v3845 = vshrl.u32 %v3844, 7
        %v3846 = vsub.s32 %v3843, %v3845
        %v3847 = vrot.slane %v2136, %v3846
        %v3849 = vunpack.c.l.s4 842150450
        %v3850 = vunpack.c.0.s8 %v3849
        %v3851 = vlaneseq
        %v3852 = vshrl.u32 %v3851, 7
        %v3853 = vsub.s32 %v3850, %v3852
        %v3854 = vrot.slane %v2136, %v3853
        %v3856 = vunpack.c.l.s4 1414812756
        %v3857 = vunpack.c.0.s8 %v3856
        %v3858 = vlaneseq
        %v3859 = vshrl.u32 %v3858, 7
        %v3860 = vsub.s32 %v3857, %v3859
        %v3861 = vrot.slane %v2136, %v3860
        %v3863 = vunpack.c.l.s4 1987475062
        %v3864 = vunpack.c.0.s8 %v3863
        %v3865 = vlaneseq
        %v3866 = vshrl.u32 %v3865, 7
        %v3867 = vsub.s32 %v3864, %v3866
        %v3868 = vrot.slane %v2136, %v3867
        %v3870 = vunpack.c.l.s4 269488144
        %v3871 = vunpack.c.0.s8 %v3870
        %v3872 = vlaneseq
        %v3873 = vshrl.u32 %v3872, 7
        %v3874 = vsub.s32 %v3871, %v3873
        %v3875 = vrot.slane %v2139, %v3874
        %v3877 = vunpack.c.l.s4 842150450
        %v3878 = vunpack.c.0.s8 %v3877
        %v3879 = vlaneseq
        %v3880 = vshrl.u32 %v3879, 7
        %v3881 = vsub.s32 %v3878, %v3880
        %v3882 = vrot.slane %v2139, %v3881
        %v3884 = vunpack.c.l.s4 1414812756
        %v3885 = vunpack.c.0.s8 %v3884
        %v3886 = vlaneseq
        %v3887 = vshrl.u32 %v3886, 7
        %v3888 = vsub.s32 %v3885, %v3887
        %v3889 = vrot.slane %v2139, %v3888
        %v3891 = vunpack.c.l.s4 1987475062
        %v3892 = vunpack.c.0.s8 %v3891
        %v3893 = vlaneseq
        %v3894 = vshrl.u32 %v3893, 7
        %v3895 = vsub.s32 %v3892, %v3894
        %v3896 = vrot.slane %v2139, %v3895
        %v3898 = vunpack.c.l.s4 269488144
        %v3899 = vunpack.c.0.s8 %v3898
        %v3900 = vlaneseq
        %v3901 = vshrl.u32 %v3900, 7
        %v3902 = vsub.s32 %v3899, %v3901
        %v3903 = vrot.slane %v2142, %v3902
        %v3905 = vunpack.c.l.s4 842150450
        %v3906 = vunpack.c.0.s8 %v3905
        %v3907 = vlaneseq
        %v3908 = vshrl.u32 %v3907, 7
        %v3909 = vsub.s32 %v3906, %v3908
        %v3910 = vrot.slane %v2142, %v3909
        %v3912 = vunpack.c.l.s4 1414812756
        %v3913 = vunpack.c.0.s8 %v3912
        %v3914 = vlaneseq
        %v3915 = vshrl.u32 %v3914, 7
        %v3916 = vsub.s32 %v3913, %v3915
        %v3917 = vrot.slane %v2142, %v3916
        %v3919 = vunpack.c.l.s4 1987475062
        %v3920 = vunpack.c.0.s8 %v3919
        %v3921 = vlaneseq
        %v3922 = vshrl.u32 %v3921, 7
        %v3923 = vsub.s32 %v3920, %v3922
        %v3924 = vrot.slane %v2142, %v3923
        %v3926 = vunpack.c.l.s4 269488144
        %v3927 = vunpack.c.0.s8 %v3926
        %v3928 = vlaneseq
        %v3929 = vshrl.u32 %v3928, 7
        %v3930 = vsub.s32 %v3927, %v3929
        %v3931 = vrot.slane %v2145, %v3930
        %v3933 = vunpack.c.l.s4 842150450
        %v3934 = vunpack.c.0.s8 %v3933
        %v3935 = vlaneseq
        %v3936 = vshrl.u32 %v3935, 7
        %v3937 = vsub.s32 %v3934, %v3936
        %v3938 = vrot.slane %v2145, %v3937
        %v3940 = vunpack.c.l.s4 1414812756
        %v3941 = vunpack.c.0.s8 %v3940
        %v3942 = vlaneseq
        %v3943 = vshrl.u32 %v3942, 7
        %v3944 = vsub.s32 %v3941, %v3943
        %v3945 = vrot.slane %v2145, %v3944
        %v3947 = vunpack.c.l.s4 1987475062
        %v3948 = vunpack.c.0.s8 %v3947
        %v3949 = vlaneseq
        %v3950 = vshrl.u32 %v3949, 7
        %v3951 = vsub.s32 %v3948, %v3950
        %v3952 = vrot.slane %v2145, %v3951
        %v3954 = vunpack.c.l.s4 269488144
        %v3955 = vunpack.c.0.s8 %v3954
        %v3956 = vlaneseq
        %v3957 = vshrl.u32 %v3956, 7
        %v3958 = vsub.s32 %v3955, %v3957
        %v3959 = vrot.slane %v2148, %v3958
        %v3961 = vunpack.c.l.s4 842150450
        %v3962 = vunpack.c.0.s8 %v3961
        %v3963 = vlaneseq
        %v3964 = vshrl.u32 %v3963, 7
        %v3965 = vsub.s32 %v3962, %v3964
        %v3966 = vrot.slane %v2148, %v3965
        %v3968 = vunpack.c.l.s4 1414812756
        %v3969 = vunpack.c.0.s8 %v3968
        %v3970 = vlaneseq
        %v3971 = vshrl.u32 %v3970, 7
        %v3972 = vsub.s32 %v3969, %v3971
        %v3973 = vrot.slane %v2148, %v3972
        %v3975 = vunpack.c.l.s4 1987475062
        %v3976 = vunpack.c.0.s8 %v3975
        %v3977 = vlaneseq
        %v3978 = vshrl.u32 %v3977, 7
        %v3979 = vsub.s32 %v3976, %v3978
        %v3980 = vrot.slane %v2148, %v3979
        %v3982 = vunpack.c.l.s4 269488144
        %v3983 = vunpack.c.0.s8 %v3982
        %v3984 = vlaneseq
        %v3985 = vshrl.u32 %v3984, 7
        %v3986 = vsub.s32 %v3983, %v3985
        %v3987 = vrot.slane %v2151, %v3986
        %v3989 = vunpack.c.l.s4 842150450
        %v3990 = vunpack.c.0.s8 %v3989
        %v3991 = vlaneseq
        %v3992 = vshrl.u32 %v3991, 7
        %v3993 = vsub.s32 %v3990, %v3992
        %v3994 = vrot.slane %v2151, %v3993
        %v3996 = vunpack.c.l.s4 1414812756
        %v3997 = vunpack.c.0.s8 %v3996
        %v3998 = vlaneseq
        %v3999 = vshrl.u32 %v3998, 7
        %v4000 = vsub.s32 %v3997, %v3999
        %v4001 = vrot.slane %v2151, %v4000
        %v4003 = vunpack.c.l.s4 1987475062
        %v4004 = vunpack.c.0.s8 %v4003
        %v4005 = vlaneseq
        %v4006 = vshrl.u32 %v4005, 7
        %v4007 = vsub.s32 %v4004, %v4006
        %v4008 = vrot.slane %v2151, %v4007
        %v4009 = vcombine.low %v2223, %v2230
        %v4010 = vcombine.low %v2237, %v2244
        %v4012 = vunpack.c.l.s4 1983009808
        %v4013 = vunpack.c.0.s8 %v4012
        %v4014 = vlaneseq
        %v4015 = vshrl.u32 %v4014, 7
        %v4016 = vsub.s32 %v4013, %v4015
        %v4017 = vrot.slane %v4009, %v4016
        %v4019 = vunpack.c.l.s4 1983009808
        %v4020 = vunpack.c.0.s8 %v4019
        %v4021 = vlaneseq
        %v4022 = vshrl.u32 %v4021, 7
        %v4023 = vsub.s32 %v4020, %v4022
        %v4024 = vrot.slane %v4010, %v4023
        %v4025 = vcombine.low %v4017, %v4024
        %v4026 = vcombine.low %v2251, %v2258
        %v4027 = vcombine.low %v2265, %v2272
        %v4029 = vunpack.c.l.s4 1983009808
        %v4030 = vunpack.c.0.s8 %v4029
        %v4031 = vlaneseq
        %v4032 = vshrl.u32 %v4031, 7
        %v4033 = vsub.s32 %v4030, %v4032
        %v4034 = vrot.slane %v4026, %v4033
        %v4036 = vunpack.c.l.s4 1983009808
        %v4037 = vunpack.c.0.s8 %v4036
        %v4038 = vlaneseq
        %v4039 = vshrl.u32 %v4038, 7
        %v4040 = vsub.s32 %v4037, %v4039
        %v4041 = vrot.slane %v4027, %v4040
        %v4042 = vcombine.low %v4034, %v4041
        %v4043 = vcombine.low %v2279, %v2286
        %v4044 = vcombine.low %v2293, %v2300
        %v4046 = vunpack.c.l.s4 1983009808
        %v4047 = vunpack.c.0.s8 %v4046
        %v4048 = vlaneseq
        %v4049 = vshrl.u32 %v4048, 7
        %v4050 = vsub.s32 %v4047, %v4049
        %v4051 = vrot.slane %v4043, %v4050
        %v4053 = vunpack.c.l.s4 1983009808
        %v4054 = vunpack.c.0.s8 %v4053
        %v4055 = vlaneseq
        %v4056 = vshrl.u32 %v4055, 7
        %v4057 = vsub.s32 %v4054, %v4056
        %v4058 = vrot.slane %v4044, %v4057
        %v4059 = vcombine.low %v4051, %v4058
        %v4060 = vcombine.low %v2307, %v2314
        %v4061 = vcombine.low %v2321, %v2328
        %v4063 = vunpack.c.l.s4 1983009808
        %v4064 = vunpack.c.0.s8 %v4063
        %v4065 = vlaneseq
        %v4066 = vshrl.u32 %v4065, 7
        %v4067 = vsub.s32 %v4064, %v4066
        %v4068 = vrot.slane %v4060, %v4067
        %v4070 = vunpack.c.l.s4 1983009808
        %v4071 = vunpack.c.0.s8 %v4070
        %v4072 = vlaneseq
        %v4073 = vshrl.u32 %v4072, 7
        %v4074 = vsub.s32 %v4071, %v4073
        %v4075 = vrot.slane %v4061, %v4074
        %v4076 = vcombine.low %v4068, %v4075
        %v4077 = vcombine.low %v2335, %v2342
        %v4078 = vcombine.low %v2349, %v2356
        %v4080 = vunpack.c.l.s4 1983009808
        %v4081 = vunpack.c.0.s8 %v4080
        %v4082 = vlaneseq
        %v4083 = vshrl.u32 %v4082, 7
        %v4084 = vsub.s32 %v4081, %v4083
        %v4085 = vrot.slane %v4077, %v4084
        %v4087 = vunpack.c.l.s4 1983009808
        %v4088 = vunpack.c.0.s8 %v4087
        %v4089 = vlaneseq
        %v4090 = vshrl.u32 %v4089, 7
        %v4091 = vsub.s32 %v4088, %v4090
        %v4092 = vrot.slane %v4078, %v4091
        %v4093 = vcombine.low %v4085, %v4092
        %v4094 = vcombine.low %v2363, %v2370
        %v4095 = vcombine.low %v2377, %v2384
        %v4097 = vunpack.c.l.s4 1983009808
        %v4098 = vunpack.c.0.s8 %v4097
        %v4099 = vlaneseq
        %v4100 = vshrl.u32 %v4099, 7
        %v4101 = vsub.s32 %v4098, %v4100
        %v4102 = vrot.slane %v4094, %v4101
        %v4104 = vunpack.c.l.s4 1983009808
        %v4105 = vunpack.c.0.s8 %v4104
        %v4106 = vlaneseq
        %v4107 = vshrl.u32 %v4106, 7
        %v4108 = vsub.s32 %v4105, %v4107
        %v4109 = vrot.slane %v4095, %v4108
        %v4110 = vcombine.low %v4102, %v4109
        %v4111 = vcombine.low %v2391, %v2398
        %v4112 = vcombine.low %v2405, %v2412
        %v4114 = vunpack.c.l.s4 1983009808
        %v4115 = vunpack.c.0.s8 %v4114
        %v4116 = vlaneseq
        %v4117 = vshrl.u32 %v4116, 7
        %v4118 = vsub.s32 %v4115, %v4117
        %v4119 = vrot.slane %v4111, %v4118
        %v4121 = vunpack.c.l.s4 1983009808
        %v4122 = vunpack.c.0.s8 %v4121
        %v4123 = vlaneseq
        %v4124 = vshrl.u32 %v4123, 7
        %v4125 = vsub.s32 %v4122, %v4124
        %v4126 = vrot.slane %v4112, %v4125
        %v4127 = vcombine.low %v4119, %v4126
        %v4128 = vcombine.low %v2419, %v2426
        %v4129 = vcombine.low %v2433, %v2440
        %v4131 = vunpack.c.l.s4 1983009808
        %v4132 = vunpack.c.0.s8 %v4131
        %v4133 = vlaneseq
        %v4134 = vshrl.u32 %v4133, 7
        %v4135 = vsub.s32 %v4132, %v4134
        %v4136 = vrot.slane %v4128, %v4135
        %v4138 = vunpack.c.l.s4 1983009808
        %v4139 = vunpack.c.0.s8 %v4138
        %v4140 = vlaneseq
        %v4141 = vshrl.u32 %v4140, 7
        %v4142 = vsub.s32 %v4139, %v4141
        %v4143 = vrot.slane %v4129, %v4142
        %v4144 = vcombine.low %v4136, %v4143
        %v4145 = vcombine.low %v2447, %v2454
        %v4146 = vcombine.low %v2461, %v2468
        %v4148 = vunpack.c.l.s4 1983009808
        %v4149 = vunpack.c.0.s8 %v4148
        %v4150 = vlaneseq
        %v4151 = vshrl.u32 %v4150, 7
        %v4152 = vsub.s32 %v4149, %v4151
        %v4153 = vrot.slane %v4145, %v4152
        %v4155 = vunpack.c.l.s4 1983009808
        %v4156 = vunpack.c.0.s8 %v4155
        %v4157 = vlaneseq
        %v4158 = vshrl.u32 %v4157, 7
        %v4159 = vsub.s32 %v4156, %v4158
        %v4160 = vrot.slane %v4146, %v4159
        %v4161 = vcombine.low %v4153, %v4160
        %v4162 = vcombine.low %v2475, %v2482
        %v4163 = vcombine.low %v2489, %v2496
        %v4165 = vunpack.c.l.s4 1983009808
        %v4166 = vunpack.c.0.s8 %v4165
        %v4167 = vlaneseq
        %v4168 = vshrl.u32 %v4167, 7
        %v4169 = vsub.s32 %v4166, %v4168
        %v4170 = vrot.slane %v4162, %v4169
        %v4172 = vunpack.c.l.s4 1983009808
        %v4173 = vunpack.c.0.s8 %v4172
        %v4174 = vlaneseq
        %v4175 = vshrl.u32 %v4174, 7
        %v4176 = vsub.s32 %v4173, %v4175
        %v4177 = vrot.slane %v4163, %v4176
        %v4178 = vcombine.low %v4170, %v4177
        %v4179 = vcombine.low %v2503, %v2510
        %v4180 = vcombine.low %v2517, %v2524
        %v4182 = vunpack.c.l.s4 1983009808
        %v4183 = vunpack.c.0.s8 %v4182
        %v4184 = vlaneseq
        %v4185 = vshrl.u32 %v4184, 7
        %v4186 = vsub.s32 %v4183, %v4185
        %v4187 = vrot.slane %v4179, %v4186
        %v4189 = vunpack.c.l.s4 1983009808
        %v4190 = vunpack.c.0.s8 %v4189
        %v4191 = vlaneseq
        %v4192 = vshrl.u32 %v4191, 7
        %v4193 = vsub.s32 %v4190, %v4192
        %v4194 = vrot.slane %v4180, %v4193
        %v4195 = vcombine.low %v4187, %v4194
        %v4196 = vcombine.low %v2531, %v2538
        %v4197 = vcombine.low %v2545, %v2552
        %v4199 = vunpack.c.l.s4 1983009808
        %v4200 = vunpack.c.0.s8 %v4199
        %v4201 = vlaneseq
        %v4202 = vshrl.u32 %v4201, 7
        %v4203 = vsub.s32 %v4200, %v4202
        %v4204 = vrot.slane %v4196, %v4203
        %v4206 = vunpack.c.l.s4 1983009808
        %v4207 = vunpack.c.0.s8 %v4206
        %v4208 = vlaneseq
        %v4209 = vshrl.u32 %v4208, 7
        %v4210 = vsub.s32 %v4207, %v4209
        %v4211 = vrot.slane %v4197, %v4210
        %v4212 = vcombine.low %v4204, %v4211
        %v4213 = vcombine.low %v2559, %v2566
        %v4214 = vcombine.low %v2573, %v2580
        %v4216 = vunpack.c.l.s4 1983009808
        %v4217 = vunpack.c.0.s8 %v4216
        %v4218 = vlaneseq
        %v4219 = vshrl.u32 %v4218, 7
        %v4220 = vsub.s32 %v4217, %v4219
        %v4221 = vrot.slane %v4213, %v4220
        %v4223 = vunpack.c.l.s4 1983009808
        %v4224 = vunpack.c.0.s8 %v4223
        %v4225 = vlaneseq
        %v4226 = vshrl.u32 %v4225, 7
        %v4227 = vsub.s32 %v4224, %v4226
        %v4228 = vrot.slane %v4214, %v4227
        %v4229 = vcombine.low %v4221, %v4228
        %v4230 = vcombine.low %v2587, %v2594
        %v4231 = vcombine.low %v2601, %v2608
        %v4233 = vunpack.c.l.s4 1983009808
        %v4234 = vunpack.c.0.s8 %v4233
        %v4235 = vlaneseq
        %v4236 = vshrl.u32 %v4235, 7
        %v4237 = vsub.s32 %v4234, %v4236
        %v4238 = vrot.slane %v4230, %v4237
        %v4240 = vunpack.c.l.s4 1983009808
        %v4241 = vunpack.c.0.s8 %v4240
        %v4242 = vlaneseq
        %v4243 = vshrl.u32 %v4242, 7
        %v4244 = vsub.s32 %v4241, %v4243
        %v4245 = vrot.slane %v4231, %v4244
        %v4246 = vcombine.low %v4238, %v4245
        %v4247 = vcombine.low %v2615, %v2622
        %v4248 = vcombine.low %v2629, %v2636
        %v4250 = vunpack.c.l.s4 1983009808
        %v4251 = vunpack.c.0.s8 %v4250
        %v4252 = vlaneseq
        %v4253 = vshrl.u32 %v4252, 7
        %v4254 = vsub.s32 %v4251, %v4253
        %v4255 = vrot.slane %v4247, %v4254
        %v4257 = vunpack.c.l.s4 1983009808
        %v4258 = vunpack.c.0.s8 %v4257
        %v4259 = vlaneseq
        %v4260 = vshrl.u32 %v4259, 7
        %v4261 = vsub.s32 %v4258, %v4260
        %v4262 = vrot.slane %v4248, %v4261
        %v4263 = vcombine.low %v4255, %v4262
        %v4264 = vcombine.low %v2643, %v2650
        %v4265 = vcombine.low %v2657, %v2664
        %v4267 = vunpack.c.l.s4 1983009808
        %v4268 = vunpack.c.0.s8 %v4267
        %v4269 = vlaneseq
        %v4270 = vshrl.u32 %v4269, 7
        %v4271 = vsub.s32 %v4268, %v4270
        %v4272 = vrot.slane %v4264, %v4271
        %v4274 = vunpack.c.l.s4 1983009808
        %v4275 = vunpack.c.0.s8 %v4274
        %v4276 = vlaneseq
        %v4277 = vshrl.u32 %v4276, 7
        %v4278 = vsub.s32 %v4275, %v4277
        %v4279 = vrot.slane %v4265, %v4278
        %v4280 = vcombine.low %v4272, %v4279
        %v4281 = vcombine.low %v2671, %v2678
        %v4282 = vcombine.low %v2685, %v2692
        %v4284 = vunpack.c.l.s4 1983009808
        %v4285 = vunpack.c.0.s8 %v4284
        %v4286 = vlaneseq
        %v4287 = vshrl.u32 %v4286, 7
        %v4288 = vsub.s32 %v4285, %v4287
        %v4289 = vrot.slane %v4281, %v4288
        %v4291 = vunpack.c.l.s4 1983009808
        %v4292 = vunpack.c.0.s8 %v4291
        %v4293 = vlaneseq
        %v4294 = vshrl.u32 %v4293, 7
        %v4295 = vsub.s32 %v4292, %v4294
        %v4296 = vrot.slane %v4282, %v4295
        %v4297 = vcombine.low %v4289, %v4296
        %v4298 = vcombine.low %v2699, %v2706
        %v4299 = vcombine.low %v2713, %v2720
        %v4301 = vunpack.c.l.s4 1983009808
        %v4302 = vunpack.c.0.s8 %v4301
        %v4303 = vlaneseq
        %v4304 = vshrl.u32 %v4303, 7
        %v4305 = vsub.s32 %v4302, %v4304
        %v4306 = vrot.slane %v4298, %v4305
        %v4308 = vunpack.c.l.s4 1983009808
        %v4309 = vunpack.c.0.s8 %v4308
        %v4310 = vlaneseq
        %v4311 = vshrl.u32 %v4310, 7
        %v4312 = vsub.s32 %v4309, %v4311
        %v4313 = vrot.slane %v4299, %v4312
        %v4314 = vcombine.low %v4306, %v4313
        %v4315 = vcombine.low %v2727, %v2734
        %v4316 = vcombine.low %v2741, %v2748
        %v4318 = vunpack.c.l.s4 1983009808
        %v4319 = vunpack.c.0.s8 %v4318
        %v4320 = vlaneseq
        %v4321 = vshrl.u32 %v4320, 7
        %v4322 = vsub.s32 %v4319, %v4321
        %v4323 = vrot.slane %v4315, %v4322
        %v4325 = vunpack.c.l.s4 1983009808
        %v4326 = vunpack.c.0.s8 %v4325
        %v4327 = vlaneseq
        %v4328 = vshrl.u32 %v4327, 7
        %v4329 = vsub.s32 %v4326, %v4328
        %v4330 = vrot.slane %v4316, %v4329
        %v4331 = vcombine.low %v4323, %v4330
        %v4332 = vcombine.low %v2755, %v2762
        %v4333 = vcombine.low %v2769, %v2776
        %v4335 = vunpack.c.l.s4 1983009808
        %v4336 = vunpack.c.0.s8 %v4335
        %v4337 = vlaneseq
        %v4338 = vshrl.u32 %v4337, 7
        %v4339 = vsub.s32 %v4336, %v4338
        %v4340 = vrot.slane %v4332, %v4339
        %v4342 = vunpack.c.l.s4 1983009808
        %v4343 = vunpack.c.0.s8 %v4342
        %v4344 = vlaneseq
        %v4345 = vshrl.u32 %v4344, 7
        %v4346 = vsub.s32 %v4343, %v4345
        %v4347 = vrot.slane %v4333, %v4346
        %v4348 = vcombine.low %v4340, %v4347
        %v4349 = vcombine.low %v2783, %v2790
        %v4350 = vcombine.low %v2797, %v2804
        %v4352 = vunpack.c.l.s4 1983009808
        %v4353 = vunpack.c.0.s8 %v4352
        %v4354 = vlaneseq
        %v4355 = vshrl.u32 %v4354, 7
        %v4356 = vsub.s32 %v4353, %v4355
        %v4357 = vrot.slane %v4349, %v4356
        %v4359 = vunpack.c.l.s4 1983009808
        %v4360 = vunpack.c.0.s8 %v4359
        %v4361 = vlaneseq
        %v4362 = vshrl.u32 %v4361, 7
        %v4363 = vsub.s32 %v4360, %v4362
        %v4364 = vrot.slane %v4350, %v4363
        %v4365 = vcombine.low %v4357, %v4364
        %v4366 = vcombine.low %v2811, %v2818
        %v4367 = vcombine.low %v2825, %v2832
        %v4369 = vunpack.c.l.s4 1983009808
        %v4370 = vunpack.c.0.s8 %v4369
        %v4371 = vlaneseq
        %v4372 = vshrl.u32 %v4371, 7
        %v4373 = vsub.s32 %v4370, %v4372
        %v4374 = vrot.slane %v4366, %v4373
        %v4376 = vunpack.c.l.s4 1983009808
        %v4377 = vunpack.c.0.s8 %v4376
        %v4378 = vlaneseq
        %v4379 = vshrl.u32 %v4378, 7
        %v4380 = vsub.s32 %v4377, %v4379
        %v4381 = vrot.slane %v4367, %v4380
        %v4382 = vcombine.low %v4374, %v4381
        %v4383 = vcombine.low %v2839, %v2846
        %v4384 = vcombine.low %v2853, %v2860
        %v4386 = vunpack.c.l.s4 1983009808
        %v4387 = vunpack.c.0.s8 %v4386
        %v4388 = vlaneseq
        %v4389 = vshrl.u32 %v4388, 7
        %v4390 = vsub.s32 %v4387, %v4389
        %v4391 = vrot.slane %v4383, %v4390
        %v4393 = vunpack.c.l.s4 1983009808
        %v4394 = vunpack.c.0.s8 %v4393
        %v4395 = vlaneseq
        %v4396 = vshrl.u32 %v4395, 7
        %v4397 = vsub.s32 %v4394, %v4396
        %v4398 = vrot.slane %v4384, %v4397
        %v4399 = vcombine.low %v4391, %v4398
        %v4400 = vcombine.low %v2867, %v2874
        %v4401 = vcombine.low %v2881, %v2888
        %v4403 = vunpack.c.l.s4 1983009808
        %v4404 = vunpack.c.0.s8 %v4403
        %v4405 = vlaneseq
        %v4406 = vshrl.u32 %v4405, 7
        %v4407 = vsub.s32 %v4404, %v4406
        %v4408 = vrot.slane %v4400, %v4407
        %v4410 = vunpack.c.l.s4 1983009808
        %v4411 = vunpack.c.0.s8 %v4410
        %v4412 = vlaneseq
        %v4413 = vshrl.u32 %v4412, 7
        %v4414 = vsub.s32 %v4411, %v4413
        %v4415 = vrot.slane %v4401, %v4414
        %v4416 = vcombine.low %v4408, %v4415
        %v4417 = vcombine.low %v2895, %v2902
        %v4418 = vcombine.low %v2909, %v2916
        %v4420 = vunpack.c.l.s4 1983009808
        %v4421 = vunpack.c.0.s8 %v4420
        %v4422 = vlaneseq
        %v4423 = vshrl.u32 %v4422, 7
        %v4424 = vsub.s32 %v4421, %v4423
        %v4425 = vrot.slane %v4417, %v4424
        %v4427 = vunpack.c.l.s4 1983009808
        %v4428 = vunpack.c.0.s8 %v4427
        %v4429 = vlaneseq
        %v4430 = vshrl.u32 %v4429, 7
        %v4431 = vsub.s32 %v4428, %v4430
        %v4432 = vrot.slane %v4418, %v4431
        %v4433 = vcombine.low %v4425, %v4432
        %v4434 = vcombine.low %v2923, %v2930
        %v4435 = vcombine.low %v2937, %v2944
        %v4437 = vunpack.c.l.s4 1983009808
        %v4438 = vunpack.c.0.s8 %v4437
        %v4439 = vlaneseq
        %v4440 = vshrl.u32 %v4439, 7
        %v4441 = vsub.s32 %v4438, %v4440
        %v4442 = vrot.slane %v4434, %v4441
        %v4444 = vunpack.c.l.s4 1983009808
        %v4445 = vunpack.c.0.s8 %v4444
        %v4446 = vlaneseq
        %v4447 = vshrl.u32 %v4446, 7
        %v4448 = vsub.s32 %v4445, %v4447
        %v4449 = vrot.slane %v4435, %v4448
        %v4450 = vcombine.low %v4442, %v4449
        %v4451 = vcombine.low %v2951, %v2958
        %v4452 = vcombine.low %v2965, %v2972
        %v4454 = vunpack.c.l.s4 1983009808
        %v4455 = vunpack.c.0.s8 %v4454
        %v4456 = vlaneseq
        %v4457 = vshrl.u32 %v4456, 7
        %v4458 = vsub.s32 %v4455, %v4457
        %v4459 = vrot.slane %v4451, %v4458
        %v4461 = vunpack.c.l.s4 1983009808
        %v4462 = vunpack.c.0.s8 %v4461
        %v4463 = vlaneseq
        %v4464 = vshrl.u32 %v4463, 7
        %v4465 = vsub.s32 %v4462, %v4464
        %v4466 = vrot.slane %v4452, %v4465
        %v4467 = vcombine.low %v4459, %v4466
        %v4468 = vcombine.low %v2979, %v2986
        %v4469 = vcombine.low %v2993, %v3000
        %v4471 = vunpack.c.l.s4 1983009808
        %v4472 = vunpack.c.0.s8 %v4471
        %v4473 = vlaneseq
        %v4474 = vshrl.u32 %v4473, 7
        %v4475 = vsub.s32 %v4472, %v4474
        %v4476 = vrot.slane %v4468, %v4475
        %v4478 = vunpack.c.l.s4 1983009808
        %v4479 = vunpack.c.0.s8 %v4478
        %v4480 = vlaneseq
        %v4481 = vshrl.u32 %v4480, 7
        %v4482 = vsub.s32 %v4479, %v4481
        %v4483 = vrot.slane %v4469, %v4482
        %v4484 = vcombine.low %v4476, %v4483
        %v4485 = vcombine.low %v3007, %v3014
        %v4486 = vcombine.low %v3021, %v3028
        %v4488 = vunpack.c.l.s4 1983009808
        %v4489 = vunpack.c.0.s8 %v4488
        %v4490 = vlaneseq
        %v4491 = vshrl.u32 %v4490, 7
        %v4492 = vsub.s32 %v4489, %v4491
        %v4493 = vrot.slane %v4485, %v4492
        %v4495 = vunpack.c.l.s4 1983009808
        %v4496 = vunpack.c.0.s8 %v4495
        %v4497 = vlaneseq
        %v4498 = vshrl.u32 %v4497, 7
        %v4499 = vsub.s32 %v4496, %v4498
        %v4500 = vrot.slane %v4486, %v4499
        %v4501 = vcombine.low %v4493, %v4500
        %v4502 = vcombine.low %v3035, %v3042
        %v4503 = vcombine.low %v3049, %v3056
        %v4505 = vunpack.c.l.s4 1983009808
        %v4506 = vunpack.c.0.s8 %v4505
        %v4507 = vlaneseq
        %v4508 = vshrl.u32 %v4507, 7
        %v4509 = vsub.s32 %v4506, %v4508
        %v4510 = vrot.slane %v4502, %v4509
        %v4512 = vunpack.c.l.s4 1983009808
        %v4513 = vunpack.c.0.s8 %v4512
        %v4514 = vlaneseq
        %v4515 = vshrl.u32 %v4514, 7
        %v4516 = vsub.s32 %v4513, %v4515
        %v4517 = vrot.slane %v4503, %v4516
        %v4518 = vcombine.low %v4510, %v4517
        %v4519 = vcombine.low %v3063, %v3070
        %v4520 = vcombine.low %v3077, %v3084
        %v4522 = vunpack.c.l.s4 1983009808
        %v4523 = vunpack.c.0.s8 %v4522
        %v4524 = vlaneseq
        %v4525 = vshrl.u32 %v4524, 7
        %v4526 = vsub.s32 %v4523, %v4525
        %v4527 = vrot.slane %v4519, %v4526
        %v4529 = vunpack.c.l.s4 1983009808
        %v4530 = vunpack.c.0.s8 %v4529
        %v4531 = vlaneseq
        %v4532 = vshrl.u32 %v4531, 7
        %v4533 = vsub.s32 %v4530, %v4532
        %v4534 = vrot.slane %v4520, %v4533
        %v4535 = vcombine.low %v4527, %v4534
        %v4536 = vcombine.low %v3091, %v3098
        %v4537 = vcombine.low %v3105, %v3112
        %v4539 = vunpack.c.l.s4 1983009808
        %v4540 = vunpack.c.0.s8 %v4539
        %v4541 = vlaneseq
        %v4542 = vshrl.u32 %v4541, 7
        %v4543 = vsub.s32 %v4540, %v4542
        %v4544 = vrot.slane %v4536, %v4543
        %v4546 = vunpack.c.l.s4 1983009808
        %v4547 = vunpack.c.0.s8 %v4546
        %v4548 = vlaneseq
        %v4549 = vshrl.u32 %v4548, 7
        %v4550 = vsub.s32 %v4547, %v4549
        %v4551 = vrot.slane %v4537, %v4550
        %v4552 = vcombine.low %v4544, %v4551
        %v4553 = vcombine.low %v3119, %v3126
        %v4554 = vcombine.low %v3133, %v3140
        %v4556 = vunpack.c.l.s4 1983009808
        %v4557 = vunpack.c.0.s8 %v4556
        %v4558 = vlaneseq
        %v4559 = vshrl.u32 %v4558, 7
        %v4560 = vsub.s32 %v4557, %v4559
        %v4561 = vrot.slane %v4553, %v4560
        %v4563 = vunpack.c.l.s4 1983009808
        %v4564 = vunpack.c.0.s8 %v4563
        %v4565 = vlaneseq
        %v4566 = vshrl.u32 %v4565, 7
        %v4567 = vsub.s32 %v4564, %v4566
        %v4568 = vrot.slane %v4554, %v4567
        %v4569 = vcombine.low %v4561, %v4568
        %v4570 = vcombine.low %v3147, %v3154
        %v4571 = vcombine.low %v3161, %v3168
        %v4573 = vunpack.c.l.s4 1983009808
        %v4574 = vunpack.c.0.s8 %v4573
        %v4575 = vlaneseq
        %v4576 = vshrl.u32 %v4575, 7
        %v4577 = vsub.s32 %v4574, %v4576
        %v4578 = vrot.slane %v4570, %v4577
        %v4580 = vunpack.c.l.s4 1983009808
        %v4581 = vunpack.c.0.s8 %v4580
        %v4582 = vlaneseq
        %v4583 = vshrl.u32 %v4582, 7
        %v4584 = vsub.s32 %v4581, %v4583
        %v4585 = vrot.slane %v4571, %v4584
        %v4586 = vcombine.low %v4578, %v4585
        %v4587 = vcombine.low %v3175, %v3182
        %v4588 = vcombine.low %v3189, %v3196
        %v4590 = vunpack.c.l.s4 1983009808
        %v4591 = vunpack.c.0.s8 %v4590
        %v4592 = vlaneseq
        %v4593 = vshrl.u32 %v4592, 7
        %v4594 = vsub.s32 %v4591, %v4593
        %v4595 = vrot.slane %v4587, %v4594
        %v4597 = vunpack.c.l.s4 1983009808
        %v4598 = vunpack.c.0.s8 %v4597
        %v4599 = vlaneseq
        %v4600 = vshrl.u32 %v4599, 7
        %v4601 = vsub.s32 %v4598, %v4600
        %v4602 = vrot.slane %v4588, %v4601
        %v4603 = vcombine.low %v4595, %v4602
        %v4604 = vcombine.low %v3203, %v3210
        %v4605 = vcombine.low %v3217, %v3224
        %v4607 = vunpack.c.l.s4 1983009808
        %v4608 = vunpack.c.0.s8 %v4607
        %v4609 = vlaneseq
        %v4610 = vshrl.u32 %v4609, 7
        %v4611 = vsub.s32 %v4608, %v4610
        %v4612 = vrot.slane %v4604, %v4611
        %v4614 = vunpack.c.l.s4 1983009808
        %v4615 = vunpack.c.0.s8 %v4614
        %v4616 = vlaneseq
        %v4617 = vshrl.u32 %v4616, 7
        %v4618 = vsub.s32 %v4615, %v4617
        %v4619 = vrot.slane %v4605, %v4618
        %v4620 = vcombine.low %v4612, %v4619
        %v4621 = vcombine.low %v3231, %v3238
        %v4622 = vcombine.low %v3245, %v3252
        %v4624 = vunpack.c.l.s4 1983009808
        %v4625 = vunpack.c.0.s8 %v4624
        %v4626 = vlaneseq
        %v4627 = vshrl.u32 %v4626, 7
        %v4628 = vsub.s32 %v4625, %v4627
        %v4629 = vrot.slane %v4621, %v4628
        %v4631 = vunpack.c.l.s4 1983009808
        %v4632 = vunpack.c.0.s8 %v4631
        %v4633 = vlaneseq
        %v4634 = vshrl.u32 %v4633, 7
        %v4635 = vsub.s32 %v4632, %v4634
        %v4636 = vrot.slane %v4622, %v4635
        %v4637 = vcombine.low %v4629, %v4636
        %v4638 = vcombine.low %v3259, %v3266
        %v4639 = vcombine.low %v3273, %v3280
        %v4641 = vunpack.c.l.s4 1983009808
        %v4642 = vunpack.c.0.s8 %v4641
        %v4643 = vlaneseq
        %v4644 = vshrl.u32 %v4643, 7
        %v4645 = vsub.s32 %v4642, %v4644
        %v4646 = vrot.slane %v4638, %v4645
        %v4648 = vunpack.c.l.s4 1983009808
        %v4649 = vunpack.c.0.s8 %v4648
        %v4650 = vlaneseq
        %v4651 = vshrl.u32 %v4650, 7
        %v4652 = vsub.s32 %v4649, %v4651
        %v4653 = vrot.slane %v4639, %v4652
        %v4654 = vcombine.low %v4646, %v4653
        %v4655 = vcombine.low %v3287, %v3294
        %v4656 = vcombine.low %v3301, %v3308
        %v4658 = vunpack.c.l.s4 1983009808
        %v4659 = vunpack.c.0.s8 %v4658
        %v4660 = vlaneseq
        %v4661 = vshrl.u32 %v4660, 7
        %v4662 = vsub.s32 %v4659, %v4661
        %v4663 = vrot.slane %v4655, %v4662
        %v4665 = vunpack.c.l.s4 1983009808
        %v4666 = vunpack.c.0.s8 %v4665
        %v4667 = vlaneseq
        %v4668 = vshrl.u32 %v4667, 7
        %v4669 = vsub.s32 %v4666, %v4668
        %v4670 = vrot.slane %v4656, %v4669
        %v4671 = vcombine.low %v4663, %v4670
        %v4672 = vcombine.low %v3315, %v3322
        %v4673 = vcombine.low %v3329, %v3336
        %v4675 = vunpack.c.l.s4 1983009808
        %v4676 = vunpack.c.0.s8 %v4675
        %v4677 = vlaneseq
        %v4678 = vshrl.u32 %v4677, 7
        %v4679 = vsub.s32 %v4676, %v4678
        %v4680 = vrot.slane %v4672, %v4679
        %v4682 = vunpack.c.l.s4 1983009808
        %v4683 = vunpack.c.0.s8 %v4682
        %v4684 = vlaneseq
        %v4685 = vshrl.u32 %v4684, 7
        %v4686 = vsub.s32 %v4683, %v4685
        %v4687 = vrot.slane %v4673, %v4686
        %v4688 = vcombine.low %v4680, %v4687
        %v4689 = vcombine.low %v3343, %v3350
        %v4690 = vcombine.low %v3357, %v3364
        %v4692 = vunpack.c.l.s4 1983009808
        %v4693 = vunpack.c.0.s8 %v4692
        %v4694 = vlaneseq
        %v4695 = vshrl.u32 %v4694, 7
        %v4696 = vsub.s32 %v4693, %v4695
        %v4697 = vrot.slane %v4689, %v4696
        %v4699 = vunpack.c.l.s4 1983009808
        %v4700 = vunpack.c.0.s8 %v4699
        %v4701 = vlaneseq
        %v4702 = vshrl.u32 %v4701, 7
        %v4703 = vsub.s32 %v4700, %v4702
        %v4704 = vrot.slane %v4690, %v4703
        %v4705 = vcombine.low %v4697, %v4704
        %v4706 = vcombine.low %v3371, %v3378
        %v4707 = vcombine.low %v3385, %v3392
        %v4709 = vunpack.c.l.s4 1983009808
        %v4710 = vunpack.c.0.s8 %v4709
        %v4711 = vlaneseq
        %v4712 = vshrl.u32 %v4711, 7
        %v4713 = vsub.s32 %v4710, %v4712
        %v4714 = vrot.slane %v4706, %v4713
        %v4716 = vunpack.c.l.s4 1983009808
        %v4717 = vunpack.c.0.s8 %v4716
        %v4718 = vlaneseq
        %v4719 = vshrl.u32 %v4718, 7
        %v4720 = vsub.s32 %v4717, %v4719
        %v4721 = vrot.slane %v4707, %v4720
        %v4722 = vcombine.low %v4714, %v4721
        %v4723 = vcombine.low %v3399, %v3406
        %v4724 = vcombine.low %v3413, %v3420
        %v4726 = vunpack.c.l.s4 1983009808
        %v4727 = vunpack.c.0.s8 %v4726
        %v4728 = vlaneseq
        %v4729 = vshrl.u32 %v4728, 7
        %v4730 = vsub.s32 %v4727, %v4729
        %v4731 = vrot.slane %v4723, %v4730
        %v4733 = vunpack.c.l.s4 1983009808
        %v4734 = vunpack.c.0.s8 %v4733
        %v4735 = vlaneseq
        %v4736 = vshrl.u32 %v4735, 7
        %v4737 = vsub.s32 %v4734, %v4736
        %v4738 = vrot.slane %v4724, %v4737
        %v4739 = vcombine.low %v4731, %v4738
        %v4740 = vcombine.low %v3427, %v3434
        %v4741 = vcombine.low %v3441, %v3448
        %v4743 = vunpack.c.l.s4 1983009808
        %v4744 = vunpack.c.0.s8 %v4743
        %v4745 = vlaneseq
        %v4746 = vshrl.u32 %v4745, 7
        %v4747 = vsub.s32 %v4744, %v4746
        %v4748 = vrot.slane %v4740, %v4747
        %v4750 = vunpack.c.l.s4 1983009808
        %v4751 = vunpack.c.0.s8 %v4750
        %v4752 = vlaneseq
        %v4753 = vshrl.u32 %v4752, 7
        %v4754 = vsub.s32 %v4751, %v4753
        %v4755 = vrot.slane %v4741, %v4754
        %v4756 = vcombine.low %v4748, %v4755
        %v4757 = vcombine.low %v3455, %v3462
        %v4758 = vcombine.low %v3469, %v3476
        %v4760 = vunpack.c.l.s4 1983009808
        %v4761 = vunpack.c.0.s8 %v4760
        %v4762 = vlaneseq
        %v4763 = vshrl.u32 %v4762, 7
        %v4764 = vsub.s32 %v4761, %v4763
        %v4765 = vrot.slane %v4757, %v4764
        %v4767 = vunpack.c.l.s4 1983009808
        %v4768 = vunpack.c.0.s8 %v4767
        %v4769 = vlaneseq
        %v4770 = vshrl.u32 %v4769, 7
        %v4771 = vsub.s32 %v4768, %v4770
        %v4772 = vrot.slane %v4758, %v4771
        %v4773 = vcombine.low %v4765, %v4772
        %v4774 = vcombine.low %v3483, %v3490
        %v4775 = vcombine.low %v3497, %v3504
        %v4777 = vunpack.c.l.s4 1983009808
        %v4778 = vunpack.c.0.s8 %v4777
        %v4779 = vlaneseq
        %v4780 = vshrl.u32 %v4779, 7
        %v4781 = vsub.s32 %v4778, %v4780
        %v4782 = vrot.slane %v4774, %v4781
        %v4784 = vunpack.c.l.s4 1983009808
        %v4785 = vunpack.c.0.s8 %v4784
        %v4786 = vlaneseq
        %v4787 = vshrl.u32 %v4786, 7
        %v4788 = vsub.s32 %v4785, %v4787
        %v4789 = vrot.slane %v4775, %v4788
        %v4790 = vcombine.low %v4782, %v4789
        %v4791 = vcombine.low %v3511, %v3518
        %v4792 = vcombine.low %v3525, %v3532
        %v4794 = vunpack.c.l.s4 1983009808
        %v4795 = vunpack.c.0.s8 %v4794
        %v4796 = vlaneseq
        %v4797 = vshrl.u32 %v4796, 7
        %v4798 = vsub.s32 %v4795, %v4797
        %v4799 = vrot.slane %v4791, %v4798
        %v4801 = vunpack.c.l.s4 1983009808
        %v4802 = vunpack.c.0.s8 %v4801
        %v4803 = vlaneseq
        %v4804 = vshrl.u32 %v4803, 7
        %v4805 = vsub.s32 %v4802, %v4804
        %v4806 = vrot.slane %v4792, %v4805
        %v4807 = vcombine.low %v4799, %v4806
        %v4808 = vcombine.low %v3539, %v3546
        %v4809 = vcombine.low %v3553, %v3560
        %v4811 = vunpack.c.l.s4 1983009808
        %v4812 = vunpack.c.0.s8 %v4811
        %v4813 = vlaneseq
        %v4814 = vshrl.u32 %v4813, 7
        %v4815 = vsub.s32 %v4812, %v4814
        %v4816 = vrot.slane %v4808, %v4815
        %v4818 = vunpack.c.l.s4 1983009808
        %v4819 = vunpack.c.0.s8 %v4818
        %v4820 = vlaneseq
        %v4821 = vshrl.u32 %v4820, 7
        %v4822 = vsub.s32 %v4819, %v4821
        %v4823 = vrot.slane %v4809, %v4822
        %v4824 = vcombine.low %v4816, %v4823
        %v4825 = vcombine.low %v3567, %v3574
        %v4826 = vcombine.low %v3581, %v3588
        %v4828 = vunpack.c.l.s4 1983009808
        %v4829 = vunpack.c.0.s8 %v4828
        %v4830 = vlaneseq
        %v4831 = vshrl.u32 %v4830, 7
        %v4832 = vsub.s32 %v4829, %v4831
        %v4833 = vrot.slane %v4825, %v4832
        %v4835 = vunpack.c.l.s4 1983009808
        %v4836 = vunpack.c.0.s8 %v4835
        %v4837 = vlaneseq
        %v4838 = vshrl.u32 %v4837, 7
        %v4839 = vsub.s32 %v4836, %v4838
        %v4840 = vrot.slane %v4826, %v4839
        %v4841 = vcombine.low %v4833, %v4840
        %v4842 = vcombine.low %v3595, %v3602
        %v4843 = vcombine.low %v3609, %v3616
        %v4845 = vunpack.c.l.s4 1983009808
        %v4846 = vunpack.c.0.s8 %v4845
        %v4847 = vlaneseq
        %v4848 = vshrl.u32 %v4847, 7
        %v4849 = vsub.s32 %v4846, %v4848
        %v4850 = vrot.slane %v4842, %v4849
        %v4852 = vunpack.c.l.s4 1983009808
        %v4853 = vunpack.c.0.s8 %v4852
        %v4854 = vlaneseq
        %v4855 = vshrl.u32 %v4854, 7
        %v4856 = vsub.s32 %v4853, %v4855
        %v4857 = vrot.slane %v4843, %v4856
        %v4858 = vcombine.low %v4850, %v4857
        %v4859 = vcombine.low %v3623, %v3630
        %v4860 = vcombine.low %v3637, %v3644
        %v4862 = vunpack.c.l.s4 1983009808
        %v4863 = vunpack.c.0.s8 %v4862
        %v4864 = vlaneseq
        %v4865 = vshrl.u32 %v4864, 7
        %v4866 = vsub.s32 %v4863, %v4865
        %v4867 = vrot.slane %v4859, %v4866
        %v4869 = vunpack.c.l.s4 1983009808
        %v4870 = vunpack.c.0.s8 %v4869
        %v4871 = vlaneseq
        %v4872 = vshrl.u32 %v4871, 7
        %v4873 = vsub.s32 %v4870, %v4872
        %v4874 = vrot.slane %v4860, %v4873
        %v4875 = vcombine.low %v4867, %v4874
        %v4876 = vcombine.low %v3651, %v3658
        %v4877 = vcombine.low %v3665, %v3672
        %v4879 = vunpack.c.l.s4 1983009808
        %v4880 = vunpack.c.0.s8 %v4879
        %v4881 = vlaneseq
        %v4882 = vshrl.u32 %v4881, 7
        %v4883 = vsub.s32 %v4880, %v4882
        %v4884 = vrot.slane %v4876, %v4883
        %v4886 = vunpack.c.l.s4 1983009808
        %v4887 = vunpack.c.0.s8 %v4886
        %v4888 = vlaneseq
        %v4889 = vshrl.u32 %v4888, 7
        %v4890 = vsub.s32 %v4887, %v4889
        %v4891 = vrot.slane %v4877, %v4890
        %v4892 = vcombine.low %v4884, %v4891
        %v4893 = vcombine.low %v3679, %v3686
        %v4894 = vcombine.low %v3693, %v3700
        %v4896 = vunpack.c.l.s4 1983009808
        %v4897 = vunpack.c.0.s8 %v4896
        %v4898 = vlaneseq
        %v4899 = vshrl.u32 %v4898, 7
        %v4900 = vsub.s32 %v4897, %v4899
        %v4901 = vrot.slane %v4893, %v4900
        %v4903 = vunpack.c.l.s4 1983009808
        %v4904 = vunpack.c.0.s8 %v4903
        %v4905 = vlaneseq
        %v4906 = vshrl.u32 %v4905, 7
        %v4907 = vsub.s32 %v4904, %v4906
        %v4908 = vrot.slane %v4894, %v4907
        %v4909 = vcombine.low %v4901, %v4908
        %v4910 = vcombine.low %v3707, %v3714
        %v4911 = vcombine.low %v3721, %v3728
        %v4913 = vunpack.c.l.s4 1983009808
        %v4914 = vunpack.c.0.s8 %v4913
        %v4915 = vlaneseq
        %v4916 = vshrl.u32 %v4915, 7
        %v4917 = vsub.s32 %v4914, %v4916
        %v4918 = vrot.slane %v4910, %v4917
        %v4920 = vunpack.c.l.s4 1983009808
        %v4921 = vunpack.c.0.s8 %v4920
        %v4922 = vlaneseq
        %v4923 = vshrl.u32 %v4922, 7
        %v4924 = vsub.s32 %v4921, %v4923
        %v4925 = vrot.slane %v4911, %v4924
        %v4926 = vcombine.low %v4918, %v4925
        %v4927 = vcombine.low %v3735, %v3742
        %v4928 = vcombine.low %v3749, %v3756
        %v4930 = vunpack.c.l.s4 1983009808
        %v4931 = vunpack.c.0.s8 %v4930
        %v4932 = vlaneseq
        %v4933 = vshrl.u32 %v4932, 7
        %v4934 = vsub.s32 %v4931, %v4933
        %v4935 = vrot.slane %v4927, %v4934
        %v4937 = vunpack.c.l.s4 1983009808
        %v4938 = vunpack.c.0.s8 %v4937
        %v4939 = vlaneseq
        %v4940 = vshrl.u32 %v4939, 7
        %v4941 = vsub.s32 %v4938, %v4940
        %v4942 = vrot.slane %v4928, %v4941
        %v4943 = vcombine.low %v4935, %v4942
        %v4944 = vcombine.low %v3763, %v3770
        %v4945 = vcombine.low %v3777, %v3784
        %v4947 = vunpack.c.l.s4 1983009808
        %v4948 = vunpack.c.0.s8 %v4947
        %v4949 = vlaneseq
        %v4950 = vshrl.u32 %v4949, 7
        %v4951 = vsub.s32 %v4948, %v4950
        %v4952 = vrot.slane %v4944, %v4951
        %v4954 = vunpack.c.l.s4 1983009808
        %v4955 = vunpack.c.0.s8 %v4954
        %v4956 = vlaneseq
        %v4957 = vshrl.u32 %v4956, 7
        %v4958 = vsub.s32 %v4955, %v4957
        %v4959 = vrot.slane %v4945, %v4958
        %v4960 = vcombine.low %v4952, %v4959
        %v4961 = vcombine.low %v3791, %v3798
        %v4962 = vcombine.low %v3805, %v3812
        %v4964 = vunpack.c.l.s4 1983009808
        %v4965 = vunpack.c.0.s8 %v4964
        %v4966 = vlaneseq
        %v4967 = vshrl.u32 %v4966, 7
        %v4968 = vsub.s32 %v4965, %v4967
        %v4969 = vrot.slane %v4961, %v4968
        %v4971 = vunpack.c.l.s4 1983009808
        %v4972 = vunpack.c.0.s8 %v4971
        %v4973 = vlaneseq
        %v4974 = vshrl.u32 %v4973, 7
        %v4975 = vsub.s32 %v4972, %v4974
        %v4976 = vrot.slane %v4962, %v4975
        %v4977 = vcombine.low %v4969, %v4976
        %v4978 = vcombine.low %v3819, %v3826
        %v4979 = vcombine.low %v3833, %v3840
        %v4981 = vunpack.c.l.s4 1983009808
        %v4982 = vunpack.c.0.s8 %v4981
        %v4983 = vlaneseq
        %v4984 = vshrl.u32 %v4983, 7
        %v4985 = vsub.s32 %v4982, %v4984
        %v4986 = vrot.slane %v4978, %v4985
        %v4988 = vunpack.c.l.s4 1983009808
        %v4989 = vunpack.c.0.s8 %v4988
        %v4990 = vlaneseq
        %v4991 = vshrl.u32 %v4990, 7
        %v4992 = vsub.s32 %v4989, %v4991
        %v4993 = vrot.slane %v4979, %v4992
        %v4994 = vcombine.low %v4986, %v4993
        %v4995 = vcombine.low %v3847, %v3854
        %v4996 = vcombine.low %v3861, %v3868
        %v4998 = vunpack.c.l.s4 1983009808
        %v4999 = vunpack.c.0.s8 %v4998
        %v5000 = vlaneseq
        %v5001 = vshrl.u32 %v5000, 7
        %v5002 = vsub.s32 %v4999, %v5001
        %v5003 = vrot.slane %v4995, %v5002
        %v5005 = vunpack.c.l.s4 1983009808
        %v5006 = vunpack.c.0.s8 %v5005
        %v5007 = vlaneseq
        %v5008 = vshrl.u32 %v5007, 7
        %v5009 = vsub.s32 %v5006, %v5008
        %v5010 = vrot.slane %v4996, %v5009
        %v5011 = vcombine.low %v5003, %v5010
        %v5012 = vcombine.low %v3875, %v3882
        %v5013 = vcombine.low %v3889, %v3896
        %v5015 = vunpack.c.l.s4 1983009808
        %v5016 = vunpack.c.0.s8 %v5015
        %v5017 = vlaneseq
        %v5018 = vshrl.u32 %v5017, 7
        %v5019 = vsub.s32 %v5016, %v5018
        %v5020 = vrot.slane %v5012, %v5019
        %v5022 = vunpack.c.l.s4 1983009808
        %v5023 = vunpack.c.0.s8 %v5022
        %v5024 = vlaneseq
        %v5025 = vshrl.u32 %v5024, 7
        %v5026 = vsub.s32 %v5023, %v5025
        %v5027 = vrot.slane %v5013, %v5026
        %v5028 = vcombine.low %v5020, %v5027
        %v5029 = vcombine.low %v3903, %v3910
        %v5030 = vcombine.low %v3917, %v3924
        %v5032 = vunpack.c.l.s4 1983009808
        %v5033 = vunpack.c.0.s8 %v5032
        %v5034 = vlaneseq
        %v5035 = vshrl.u32 %v5034, 7
        %v5036 = vsub.s32 %v5033, %v5035
        %v5037 = vrot.slane %v5029, %v5036
        %v5039 = vunpack.c.l.s4 1983009808
        %v5040 = vunpack.c.0.s8 %v5039
        %v5041 = vlaneseq
        %v5042 = vshrl.u32 %v5041, 7
        %v5043 = vsub.s32 %v5040, %v5042
        %v5044 = vrot.slane %v5030, %v5043
        %v5045 = vcombine.low %v5037, %v5044
        %v5046 = vcombine.low %v3931, %v3938
        %v5047 = vcombine.low %v3945, %v3952
        %v5049 = vunpack.c.l.s4 1983009808
        %v5050 = vunpack.c.0.s8 %v5049
        %v5051 = vlaneseq
        %v5052 = vshrl.u32 %v5051, 7
        %v5053 = vsub.s32 %v5050, %v5052
        %v5054 = vrot.slane %v5046, %v5053
        %v5056 = vunpack.c.l.s4 1983009808
        %v5057 = vunpack.c.0.s8 %v5056
        %v5058 = vlaneseq
        %v5059 = vshrl.u32 %v5058, 7
        %v5060 = vsub.s32 %v5057, %v5059
        %v5061 = vrot.slane %v5047, %v5060
        %v5062 = vcombine.low %v5054, %v5061
        %v5063 = vcombine.low %v3959, %v3966
        %v5064 = vcombine.low %v3973, %v3980
        %v5066 = vunpack.c.l.s4 1983009808
        %v5067 = vunpack.c.0.s8 %v5066
        %v5068 = vlaneseq
        %v5069 = vshrl.u32 %v5068, 7
        %v5070 = vsub.s32 %v5067, %v5069
        %v5071 = vrot.slane %v5063, %v5070
        %v5073 = vunpack.c.l.s4 1983009808
        %v5074 = vunpack.c.0.s8 %v5073
        %v5075 = vlaneseq
        %v5076 = vshrl.u32 %v5075, 7
        %v5077 = vsub.s32 %v5074, %v5076
        %v5078 = vrot.slane %v5064, %v5077
        %v5079 = vcombine.low %v5071, %v5078
        %v5080 = vcombine.low %v3987, %v3994
        %v5081 = vcombine.low %v4001, %v4008
        %v5083 = vunpack.c.l.s4 1983009808
        %v5084 = vunpack.c.0.s8 %v5083
        %v5085 = vlaneseq
        %v5086 = vshrl.u32 %v5085, 7
        %v5087 = vsub.s32 %v5084, %v5086
        %v5088 = vrot.slane %v5080, %v5087
        %v5090 = vunpack.c.l.s4 1983009808
        %v5091 = vunpack.c.0.s8 %v5090
        %v5092 = vlaneseq
        %v5093 = vshrl.u32 %v5092, 7
        %v5094 = vsub.s32 %v5091, %v5093
        %v5095 = vrot.slane %v5081, %v5094
        %v5096 = vcombine.low %v5088, %v5095
        %5097 = vset.pattern.permute.xlu0 0
        %5098 = vperm.xlu0 %5097, %v4025
        %v5099 = vpop.permute.xlu0 %5098
        %5100 = vset.pattern.permute.xlu0 0
        %5101 = vperm.xlu0 %5100, %v4042
        %v5102 = vpop.permute.xlu0 %5101
        %5103 = vset.pattern.permute.xlu0 0
        %5104 = vperm.xlu0 %5103, %v4059
        %v5105 = vpop.permute.xlu0 %5104
        %5106 = vset.pattern.permute.xlu0 0
        %5107 = vperm.xlu0 %5106, %v4076
        %v5108 = vpop.permute.xlu0 %5107
        %5109 = vset.pattern.permute.xlu0 0
        %5110 = vperm.xlu0 %5109, %v4093
        %v5111 = vpop.permute.xlu0 %5110
        %5112 = vset.pattern.permute.xlu0 0
        %5113 = vperm.xlu0 %5112, %v4110
        %v5114 = vpop.permute.xlu0 %5113
        %5115 = vset.pattern.permute.xlu0 0
        %5116 = vperm.xlu0 %5115, %v4127
        %v5117 = vpop.permute.xlu0 %5116
        %5118 = vset.pattern.permute.xlu0 0
        %5119 = vperm.xlu0 %5118, %v4144
        %v5120 = vpop.permute.xlu0 %5119
        %5121 = vset.pattern.permute.xlu0 0
        %5122 = vperm.xlu0 %5121, %v4161
        %v5123 = vpop.permute.xlu0 %5122
        %5124 = vset.pattern.permute.xlu0 0
        %5125 = vperm.xlu0 %5124, %v4178
        %v5126 = vpop.permute.xlu0 %5125
        %5127 = vset.pattern.permute.xlu0 0
        %5128 = vperm.xlu0 %5127, %v4195
        %v5129 = vpop.permute.xlu0 %5128
        %5130 = vset.pattern.permute.xlu0 0
        %5131 = vperm.xlu0 %5130, %v4212
        %v5132 = vpop.permute.xlu0 %5131
        %5133 = vset.pattern.permute.xlu0 0
        %5134 = vperm.xlu0 %5133, %v4229
        %v5135 = vpop.permute.xlu0 %5134
        %5136 = vset.pattern.permute.xlu0 0
        %5137 = vperm.xlu0 %5136, %v4246
        %v5138 = vpop.permute.xlu0 %5137
        %5139 = vset.pattern.permute.xlu0 0
        %5140 = vperm.xlu0 %5139, %v4263
        %v5141 = vpop.permute.xlu0 %5140
        %5142 = vset.pattern.permute.xlu0 0
        %5143 = vperm.xlu0 %5142, %v4280
        %v5144 = vpop.permute.xlu0 %5143
        %5145 = vset.pattern.permute.xlu0 0
        %5146 = vperm.xlu0 %5145, %v4297
        %v5147 = vpop.permute.xlu0 %5146
        %5148 = vset.pattern.permute.xlu0 0
        %5149 = vperm.xlu0 %5148, %v4314
        %v5150 = vpop.permute.xlu0 %5149
        %5151 = vset.pattern.permute.xlu0 0
        %5152 = vperm.xlu0 %5151, %v4331
        %v5153 = vpop.permute.xlu0 %5152
        %5154 = vset.pattern.permute.xlu0 0
        %5155 = vperm.xlu0 %5154, %v4348
        %v5156 = vpop.permute.xlu0 %5155
        %5157 = vset.pattern.permute.xlu0 0
        %5158 = vperm.xlu0 %5157, %v4365
        %v5159 = vpop.permute.xlu0 %5158
        %5160 = vset.pattern.permute.xlu0 0
        %5161 = vperm.xlu0 %5160, %v4382
        %v5162 = vpop.permute.xlu0 %5161
        %5163 = vset.pattern.permute.xlu0 0
        %5164 = vperm.xlu0 %5163, %v4399
        %v5165 = vpop.permute.xlu0 %5164
        %5166 = vset.pattern.permute.xlu0 0
        %5167 = vperm.xlu0 %5166, %v4416
        %v5168 = vpop.permute.xlu0 %5167
        %5169 = vset.pattern.permute.xlu0 0
        %5170 = vperm.xlu0 %5169, %v4433
        %v5171 = vpop.permute.xlu0 %5170
        %5172 = vset.pattern.permute.xlu0 0
        %5173 = vperm.xlu0 %5172, %v4450
        %v5174 = vpop.permute.xlu0 %5173
        %5175 = vset.pattern.permute.xlu0 0
        %5176 = vperm.xlu0 %5175, %v4467
        %v5177 = vpop.permute.xlu0 %5176
        %5178 = vset.pattern.permute.xlu0 0
        %5179 = vperm.xlu0 %5178, %v4484
        %v5180 = vpop.permute.xlu0 %5179
        %5181 = vset.pattern.permute.xlu0 0
        %5182 = vperm.xlu0 %5181, %v4501
        %v5183 = vpop.permute.xlu0 %5182
        %5184 = vset.pattern.permute.xlu0 0
        %5185 = vperm.xlu0 %5184, %v4518
        %v5186 = vpop.permute.xlu0 %5185
        %5187 = vset.pattern.permute.xlu0 0
        %5188 = vperm.xlu0 %5187, %v4535
        %v5189 = vpop.permute.xlu0 %5188
        %5190 = vset.pattern.permute.xlu0 0
        %5191 = vperm.xlu0 %5190, %v4552
        %v5192 = vpop.permute.xlu0 %5191
        %5193 = vset.pattern.permute.xlu0 0
        %5194 = vperm.xlu0 %5193, %v4569
        %v5195 = vpop.permute.xlu0 %5194
        %5196 = vset.pattern.permute.xlu0 0
        %5197 = vperm.xlu0 %5196, %v4586
        %v5198 = vpop.permute.xlu0 %5197
        %5199 = vset.pattern.permute.xlu0 0
        %5200 = vperm.xlu0 %5199, %v4603
        %v5201 = vpop.permute.xlu0 %5200
        %5202 = vset.pattern.permute.xlu0 0
        %5203 = vperm.xlu0 %5202, %v4620
        %v5204 = vpop.permute.xlu0 %5203
        %5205 = vset.pattern.permute.xlu0 0
        %5206 = vperm.xlu0 %5205, %v4637
        %v5207 = vpop.permute.xlu0 %5206
        %5208 = vset.pattern.permute.xlu0 0
        %5209 = vperm.xlu0 %5208, %v4654
        %v5210 = vpop.permute.xlu0 %5209
        %5211 = vset.pattern.permute.xlu0 0
        %5212 = vperm.xlu0 %5211, %v4671
        %v5213 = vpop.permute.xlu0 %5212
        %5214 = vset.pattern.permute.xlu0 0
        %5215 = vperm.xlu0 %5214, %v4688
        %v5216 = vpop.permute.xlu0 %5215
        %5217 = vset.pattern.permute.xlu0 0
        %5218 = vperm.xlu0 %5217, %v4705
        %v5219 = vpop.permute.xlu0 %5218
        %5220 = vset.pattern.permute.xlu0 0
        %5221 = vperm.xlu0 %5220, %v4722
        %v5222 = vpop.permute.xlu0 %5221
        %5223 = vset.pattern.permute.xlu0 0
        %5224 = vperm.xlu0 %5223, %v4739
        %v5225 = vpop.permute.xlu0 %5224
        %5226 = vset.pattern.permute.xlu0 0
        %5227 = vperm.xlu0 %5226, %v4756
        %v5228 = vpop.permute.xlu0 %5227
        %5229 = vset.pattern.permute.xlu0 0
        %5230 = vperm.xlu0 %5229, %v4773
        %v5231 = vpop.permute.xlu0 %5230
        %5232 = vset.pattern.permute.xlu0 0
        %5233 = vperm.xlu0 %5232, %v4790
        %v5234 = vpop.permute.xlu0 %5233
        %5235 = vset.pattern.permute.xlu0 0
        %5236 = vperm.xlu0 %5235, %v4807
        %v5237 = vpop.permute.xlu0 %5236
        %5238 = vset.pattern.permute.xlu0 0
        %5239 = vperm.xlu0 %5238, %v4824
        %v5240 = vpop.permute.xlu0 %5239
        %5241 = vset.pattern.permute.xlu0 0
        %5242 = vperm.xlu0 %5241, %v4841
        %v5243 = vpop.permute.xlu0 %5242
        %5244 = vset.pattern.permute.xlu0 0
        %5245 = vperm.xlu0 %5244, %v4858
        %v5246 = vpop.permute.xlu0 %5245
        %5247 = vset.pattern.permute.xlu0 0
        %5248 = vperm.xlu0 %5247, %v4875
        %v5249 = vpop.permute.xlu0 %5248
        %5250 = vset.pattern.permute.xlu0 0
        %5251 = vperm.xlu0 %5250, %v4892
        %v5252 = vpop.permute.xlu0 %5251
        %5253 = vset.pattern.permute.xlu0 0
        %5254 = vperm.xlu0 %5253, %v4909
        %v5255 = vpop.permute.xlu0 %5254
        %5256 = vset.pattern.permute.xlu0 0
        %5257 = vperm.xlu0 %5256, %v4926
        %v5258 = vpop.permute.xlu0 %5257
        %5259 = vset.pattern.permute.xlu0 0
        %5260 = vperm.xlu0 %5259, %v4943
        %v5261 = vpop.permute.xlu0 %5260
        %5262 = vset.pattern.permute.xlu0 0
        %5263 = vperm.xlu0 %5262, %v4960
        %v5264 = vpop.permute.xlu0 %5263
        %5265 = vset.pattern.permute.xlu0 0
        %5266 = vperm.xlu0 %5265, %v4977
        %v5267 = vpop.permute.xlu0 %5266
        %5268 = vset.pattern.permute.xlu0 0
        %5269 = vperm.xlu0 %5268, %v4994
        %v5270 = vpop.permute.xlu0 %5269
        %5271 = vset.pattern.permute.xlu0 0
        %5272 = vperm.xlu0 %5271, %v5011
        %v5273 = vpop.permute.xlu0 %5272
        %5274 = vset.pattern.permute.xlu0 0
        %5275 = vperm.xlu0 %5274, %v5028
        %v5276 = vpop.permute.xlu0 %5275
        %5277 = vset.pattern.permute.xlu0 0
        %5278 = vperm.xlu0 %5277, %v5045
        %v5279 = vpop.permute.xlu0 %5278
        %5280 = vset.pattern.permute.xlu0 0
        %5281 = vperm.xlu0 %5280, %v5062
        %v5282 = vpop.permute.xlu0 %5281
        %5283 = vset.pattern.permute.xlu0 0
        %5284 = vperm.xlu0 %5283, %v5079
        %v5285 = vpop.permute.xlu0 %5284
        %5286 = vset.pattern.permute.xlu0 0
        %5287 = vperm.xlu0 %5286, %v5096
        %v5288 = vpop.permute.xlu0 %5287
        %v5289 = vlaneseq
        %v5290 = vand.u32 %v5289, 127
        %v5291 = vlaneseq
        %v5292 = vshrl.u32 %v5291, 7
        %v5293 = vsub.s32 %v5290, %v5292
        %v5294 = vrot.slane %v5099, %v5293
        %v5295 = vadd.s32 %v5290, 4294967288
        %v5296 = vlaneseq
        %v5297 = vshrl.u32 %v5296, 7
        %v5298 = vsub.s32 %v5295, %v5297
        %v5299 = vrot.slane %v5102, %v5298
        %vm5300 = vcmask 130112
        %v5301 = vsel %vm5300, %v5299, %v5294
        %v5302 = vadd.s32 %v5290, 4294967280
        %v5303 = vlaneseq
        %v5304 = vshrl.u32 %v5303, 7
        %v5305 = vsub.s32 %v5302, %v5304
        %v5306 = vrot.slane %v5105, %v5305
        %vm5307 = vcmask 195712
        %v5308 = vsel %vm5307, %v5306, %v5301
        %v5309 = vadd.s32 %v5290, 4294967272
        %v5310 = vlaneseq
        %v5311 = vshrl.u32 %v5310, 7
        %v5312 = vsub.s32 %v5309, %v5311
        %v5313 = vrot.slane %v5108, %v5312
        %vm5314 = vcmask 261312
        %v5315 = vsel %vm5314, %v5313, %v5308
        %v5316 = vadd.s32 %v5290, 4294967264
        %v5317 = vlaneseq
        %v5318 = vshrl.u32 %v5317, 7
        %v5319 = vsub.s32 %v5316, %v5318
        %v5320 = vrot.slane %v5111, %v5319
        %vm5321 = vcmask 326912
        %v5322 = vsel %vm5321, %v5320, %v5315
        %v5323 = vadd.s32 %v5290, 4294967256
        %v5324 = vlaneseq
        %v5325 = vshrl.u32 %v5324, 7
        %v5326 = vsub.s32 %v5323, %v5325
        %v5327 = vrot.slane %v5114, %v5326
        %vm5328 = vcmask 392512
        %v5329 = vsel %vm5328, %v5327, %v5322
        %v5330 = vadd.s32 %v5290, 4294967248
        %v5331 = vlaneseq
        %v5332 = vshrl.u32 %v5331, 7
        %v5333 = vsub.s32 %v5330, %v5332
        %v5334 = vrot.slane %v5117, %v5333
        %vm5335 = vcmask 458112
        %v5336 = vsel %vm5335, %v5334, %v5329
        %v5337 = vadd.s32 %v5290, 4294967240
        %v5338 = vlaneseq
        %v5339 = vshrl.u32 %v5338, 7
        %v5340 = vsub.s32 %v5337, %v5339
        %v5341 = vrot.slane %v5120, %v5340
        %vm5342 = vcmask 523712
        %v5343 = vsel %vm5342, %v5341, %v5336
        %v5344 = vadd.s32 %v5290, 4294967232
        %v5345 = vlaneseq
        %v5346 = vshrl.u32 %v5345, 7
        %v5347 = vsub.s32 %v5344, %v5346
        %v5348 = vrot.slane %v5123, %v5347
        %vm5349 = vcmask 589312
        %v5350 = vsel %vm5349, %v5348, %v5343
        %v5351 = vadd.s32 %v5290, 4294967224
        %v5352 = vlaneseq
        %v5353 = vshrl.u32 %v5352, 7
        %v5354 = vsub.s32 %v5351, %v5353
        %v5355 = vrot.slane %v5126, %v5354
        %vm5356 = vcmask 654912
        %v5357 = vsel %vm5356, %v5355, %v5350
        %v5358 = vadd.s32 %v5290, 4294967216
        %v5359 = vlaneseq
        %v5360 = vshrl.u32 %v5359, 7
        %v5361 = vsub.s32 %v5358, %v5360
        %v5362 = vrot.slane %v5129, %v5361
        %vm5363 = vcmask 720512
        %v5364 = vsel %vm5363, %v5362, %v5357
        %v5365 = vadd.s32 %v5290, 4294967208
        %v5366 = vlaneseq
        %v5367 = vshrl.u32 %v5366, 7
        %v5368 = vsub.s32 %v5365, %v5367
        %v5369 = vrot.slane %v5132, %v5368
        %vm5370 = vcmask 786112
        %v5371 = vsel %vm5370, %v5369, %v5364
        %v5372 = vadd.s32 %v5290, 4294967200
        %v5373 = vlaneseq
        %v5374 = vshrl.u32 %v5373, 7
        %v5375 = vsub.s32 %v5372, %v5374
        %v5376 = vrot.slane %v5135, %v5375
        %vm5377 = vcmask 851712
        %v5378 = vsel %vm5377, %v5376, %v5371
        %v5379 = vadd.s32 %v5290, 4294967192
        %v5380 = vlaneseq
        %v5381 = vshrl.u32 %v5380, 7
        %v5382 = vsub.s32 %v5379, %v5381
        %v5383 = vrot.slane %v5138, %v5382
        %vm5384 = vcmask 917312
        %v5385 = vsel %vm5384, %v5383, %v5378
        %v5386 = vadd.s32 %v5290, 4294967184
        %v5387 = vlaneseq
        %v5388 = vshrl.u32 %v5387, 7
        %v5389 = vsub.s32 %v5386, %v5388
        %v5390 = vrot.slane %v5141, %v5389
        %vm5391 = vcmask 982912
        %v5392 = vsel %vm5391, %v5390, %v5385
        %v5393 = vadd.s32 %v5290, 4294967176
        %v5394 = vlaneseq
        %v5395 = vshrl.u32 %v5394, 7
        %v5396 = vsub.s32 %v5393, %v5395
        %v5397 = vrot.slane %v5144, %v5396
        %vm5398 = vcmask 1048512
        %v5399 = vsel %vm5398, %v5397, %v5392
        %v5400 = vlaneseq
        %v5401 = vshrl.u32 %v5400, 7
        %v5402 = vsub.s32 %v5290, %v5401
        %v5403 = vrot.slane %v5147, %v5402
        %v5404 = vlaneseq
        %v5405 = vshrl.u32 %v5404, 7
        %v5406 = vsub.s32 %v5295, %v5405
        %v5407 = vrot.slane %v5150, %v5406
        %v5408 = vsel %vm5300, %v5407, %v5403
        %v5409 = vlaneseq
        %v5410 = vshrl.u32 %v5409, 7
        %v5411 = vsub.s32 %v5302, %v5410
        %v5412 = vrot.slane %v5153, %v5411
        %v5413 = vsel %vm5307, %v5412, %v5408
        %v5414 = vlaneseq
        %v5415 = vshrl.u32 %v5414, 7
        %v5416 = vsub.s32 %v5309, %v5415
        %v5417 = vrot.slane %v5156, %v5416
        %v5418 = vsel %vm5314, %v5417, %v5413
        %v5419 = vlaneseq
        %v5420 = vshrl.u32 %v5419, 7
        %v5421 = vsub.s32 %v5316, %v5420
        %v5422 = vrot.slane %v5159, %v5421
        %v5423 = vsel %vm5321, %v5422, %v5418
        %v5424 = vlaneseq
        %v5425 = vshrl.u32 %v5424, 7
        %v5426 = vsub.s32 %v5323, %v5425
        %v5427 = vrot.slane %v5162, %v5426
        %v5428 = vsel %vm5328, %v5427, %v5423
        %v5429 = vlaneseq
        %v5430 = vshrl.u32 %v5429, 7
        %v5431 = vsub.s32 %v5330, %v5430
        %v5432 = vrot.slane %v5165, %v5431
        %v5433 = vsel %vm5335, %v5432, %v5428
        %v5434 = vlaneseq
        %v5435 = vshrl.u32 %v5434, 7
        %v5436 = vsub.s32 %v5337, %v5435
        %v5437 = vrot.slane %v5168, %v5436
        %v5438 = vsel %vm5342, %v5437, %v5433
        %v5439 = vlaneseq
        %v5440 = vshrl.u32 %v5439, 7
        %v5441 = vsub.s32 %v5344, %v5440
        %v5442 = vrot.slane %v5171, %v5441
        %v5443 = vsel %vm5349, %v5442, %v5438
        %v5444 = vlaneseq
        %v5445 = vshrl.u32 %v5444, 7
        %v5446 = vsub.s32 %v5351, %v5445
        %v5447 = vrot.slane %v5174, %v5446
        %v5448 = vsel %vm5356, %v5447, %v5443
        %v5449 = vlaneseq
        %v5450 = vshrl.u32 %v5449, 7
        %v5451 = vsub.s32 %v5358, %v5450
        %v5452 = vrot.slane %v5177, %v5451
        %v5453 = vsel %vm5363, %v5452, %v5448
        %v5454 = vlaneseq
        %v5455 = vshrl.u32 %v5454, 7
        %v5456 = vsub.s32 %v5365, %v5455
        %v5457 = vrot.slane %v5180, %v5456
        %v5458 = vsel %vm5370, %v5457, %v5453
        %v5459 = vlaneseq
        %v5460 = vshrl.u32 %v5459, 7
        %v5461 = vsub.s32 %v5372, %v5460
        %v5462 = vrot.slane %v5183, %v5461
        %v5463 = vsel %vm5377, %v5462, %v5458
        %v5464 = vlaneseq
        %v5465 = vshrl.u32 %v5464, 7
        %v5466 = vsub.s32 %v5379, %v5465
        %v5467 = vrot.slane %v5186, %v5466
        %v5468 = vsel %vm5384, %v5467, %v5463
        %v5469 = vlaneseq
        %v5470 = vshrl.u32 %v5469, 7
        %v5471 = vsub.s32 %v5386, %v5470
        %v5472 = vrot.slane %v5189, %v5471
        %v5473 = vsel %vm5391, %v5472, %v5468
        %v5474 = vlaneseq
        %v5475 = vshrl.u32 %v5474, 7
        %v5476 = vsub.s32 %v5393, %v5475
        %v5477 = vrot.slane %v5192, %v5476
        %v5478 = vsel %vm5398, %v5477, %v5473
        %v5479 = vlaneseq
        %v5480 = vshrl.u32 %v5479, 7
        %v5481 = vsub.s32 %v5290, %v5480
        %v5482 = vrot.slane %v5195, %v5481
        %v5483 = vlaneseq
        %v5484 = vshrl.u32 %v5483, 7
        %v5485 = vsub.s32 %v5295, %v5484
        %v5486 = vrot.slane %v5198, %v5485
        %v5487 = vsel %vm5300, %v5486, %v5482
        %v5488 = vlaneseq
        %v5489 = vshrl.u32 %v5488, 7
        %v5490 = vsub.s32 %v5302, %v5489
        %v5491 = vrot.slane %v5201, %v5490
        %v5492 = vsel %vm5307, %v5491, %v5487
        %v5493 = vlaneseq
        %v5494 = vshrl.u32 %v5493, 7
        %v5495 = vsub.s32 %v5309, %v5494
        %v5496 = vrot.slane %v5204, %v5495
        %v5497 = vsel %vm5314, %v5496, %v5492
        %v5498 = vlaneseq
        %v5499 = vshrl.u32 %v5498, 7
        %v5500 = vsub.s32 %v5316, %v5499
        %v5501 = vrot.slane %v5207, %v5500
        %v5502 = vsel %vm5321, %v5501, %v5497
        %v5503 = vlaneseq
        %v5504 = vshrl.u32 %v5503, 7
        %v5505 = vsub.s32 %v5323, %v5504
        %v5506 = vrot.slane %v5210, %v5505
        %v5507 = vsel %vm5328, %v5506, %v5502
        %v5508 = vlaneseq
        %v5509 = vshrl.u32 %v5508, 7
        %v5510 = vsub.s32 %v5330, %v5509
        %v5511 = vrot.slane %v5213, %v5510
        %v5512 = vsel %vm5335, %v5511, %v5507
        %v5513 = vlaneseq
        %v5514 = vshrl.u32 %v5513, 7
        %v5515 = vsub.s32 %v5337, %v5514
        %v5516 = vrot.slane %v5216, %v5515
        %v5517 = vsel %vm5342, %v5516, %v5512
        %v5518 = vlaneseq
        %v5519 = vshrl.u32 %v5518, 7
        %v5520 = vsub.s32 %v5344, %v5519
        %v5521 = vrot.slane %v5219, %v5520
        %v5522 = vsel %vm5349, %v5521, %v5517
        %v5523 = vlaneseq
        %v5524 = vshrl.u32 %v5523, 7
        %v5525 = vsub.s32 %v5351, %v5524
        %v5526 = vrot.slane %v5222, %v5525
        %v5527 = vsel %vm5356, %v5526, %v5522
        %v5528 = vlaneseq
        %v5529 = vshrl.u32 %v5528, 7
        %v5530 = vsub.s32 %v5358, %v5529
        %v5531 = vrot.slane %v5225, %v5530
        %v5532 = vsel %vm5363, %v5531, %v5527
        %v5533 = vlaneseq
        %v5534 = vshrl.u32 %v5533, 7
        %v5535 = vsub.s32 %v5365, %v5534
        %v5536 = vrot.slane %v5228, %v5535
        %v5537 = vsel %vm5370, %v5536, %v5532
        %v5538 = vlaneseq
        %v5539 = vshrl.u32 %v5538, 7
        %v5540 = vsub.s32 %v5372, %v5539
        %v5541 = vrot.slane %v5231, %v5540
        %v5542 = vsel %vm5377, %v5541, %v5537
        %v5543 = vlaneseq
        %v5544 = vshrl.u32 %v5543, 7
        %v5545 = vsub.s32 %v5379, %v5544
        %v5546 = vrot.slane %v5234, %v5545
        %v5547 = vsel %vm5384, %v5546, %v5542
        %v5548 = vlaneseq
        %v5549 = vshrl.u32 %v5548, 7
        %v5550 = vsub.s32 %v5386, %v5549
        %v5551 = vrot.slane %v5237, %v5550
        %v5552 = vsel %vm5391, %v5551, %v5547
        %v5553 = vlaneseq
        %v5554 = vshrl.u32 %v5553, 7
        %v5555 = vsub.s32 %v5393, %v5554
        %v5556 = vrot.slane %v5240, %v5555
        %v5557 = vsel %vm5398, %v5556, %v5552
        %v5558 = vlaneseq
        %v5559 = vshrl.u32 %v5558, 7
        %v5560 = vsub.s32 %v5290, %v5559
        %v5561 = vrot.slane %v5243, %v5560
        %v5562 = vlaneseq
        %v5563 = vshrl.u32 %v5562, 7
        %v5564 = vsub.s32 %v5295, %v5563
        %v5565 = vrot.slane %v5246, %v5564
        %v5566 = vsel %vm5300, %v5565, %v5561
        %v5567 = vlaneseq
        %v5568 = vshrl.u32 %v5567, 7
        %v5569 = vsub.s32 %v5302, %v5568
        %v5570 = vrot.slane %v5249, %v5569
        %v5571 = vsel %vm5307, %v5570, %v5566
        %v5572 = vlaneseq
        %v5573 = vshrl.u32 %v5572, 7
        %v5574 = vsub.s32 %v5309, %v5573
        %v5575 = vrot.slane %v5252, %v5574
        %v5576 = vsel %vm5314, %v5575, %v5571
        %v5577 = vlaneseq
        %v5578 = vshrl.u32 %v5577, 7
        %v5579 = vsub.s32 %v5316, %v5578
        %v5580 = vrot.slane %v5255, %v5579
        %v5581 = vsel %vm5321, %v5580, %v5576
        %v5582 = vlaneseq
        %v5583 = vshrl.u32 %v5582, 7
        %v5584 = vsub.s32 %v5323, %v5583
        %v5585 = vrot.slane %v5258, %v5584
        %v5586 = vsel %vm5328, %v5585, %v5581
        %v5587 = vlaneseq
        %v5588 = vshrl.u32 %v5587, 7
        %v5589 = vsub.s32 %v5330, %v5588
        %v5590 = vrot.slane %v5261, %v5589
        %v5591 = vsel %vm5335, %v5590, %v5586
        %v5592 = vlaneseq
        %v5593 = vshrl.u32 %v5592, 7
        %v5594 = vsub.s32 %v5337, %v5593
        %v5595 = vrot.slane %v5264, %v5594
        %v5596 = vsel %vm5342, %v5595, %v5591
        %v5597 = vlaneseq
        %v5598 = vshrl.u32 %v5597, 7
        %v5599 = vsub.s32 %v5344, %v5598
        %v5600 = vrot.slane %v5267, %v5599
        %v5601 = vsel %vm5349, %v5600, %v5596
        %v5602 = vlaneseq
        %v5603 = vshrl.u32 %v5602, 7
        %v5604 = vsub.s32 %v5351, %v5603
        %v5605 = vrot.slane %v5270, %v5604
        %v5606 = vsel %vm5356, %v5605, %v5601
        %v5607 = vlaneseq
        %v5608 = vshrl.u32 %v5607, 7
        %v5609 = vsub.s32 %v5358, %v5608
        %v5610 = vrot.slane %v5273, %v5609
        %v5611 = vsel %vm5363, %v5610, %v5606
        %v5612 = vlaneseq
        %v5613 = vshrl.u32 %v5612, 7
        %v5614 = vsub.s32 %v5365, %v5613
        %v5615 = vrot.slane %v5276, %v5614
        %v5616 = vsel %vm5370, %v5615, %v5611
        %v5617 = vlaneseq
        %v5618 = vshrl.u32 %v5617, 7
        %v5619 = vsub.s32 %v5372, %v5618
        %v5620 = vrot.slane %v5279, %v5619
        %v5621 = vsel %vm5377, %v5620, %v5616
        %v5622 = vlaneseq
        %v5623 = vshrl.u32 %v5622, 7
        %v5624 = vsub.s32 %v5379, %v5623
        %v5625 = vrot.slane %v5282, %v5624
        %v5626 = vsel %vm5384, %v5625, %v5621
        %v5627 = vlaneseq
        %v5628 = vshrl.u32 %v5627, 7
        %v5629 = vsub.s32 %v5386, %v5628
        %v5630 = vrot.slane %v5285, %v5629
        %v5631 = vsel %vm5391, %v5630, %v5626
        %v5632 = vlaneseq
        %v5633 = vshrl.u32 %v5632, 7
        %v5634 = vsub.s32 %v5393, %v5633
        %v5635 = vrot.slane %v5288, %v5634
        %v5636 = vsel %vm5398, %v5635, %v5631
        %vm5637 = vcmask 1041409
        %v5638 = vsel %vm5637, %v5557, %v5399
        %v5639 = vsel %vm5637, %v5636, %v5478
        %v5640 = vcombine.low %v5638, %v5639
        %v5642 = vunpack.c.l.s4 1983009808
        %v5643 = vunpack.c.0.s8 %v5642
        %v5644 = vlaneseq
        %v5645 = vshrl.u32 %v5644, 7
        %v5646 = vsub.s32 %v5643, %v5645
        %v5647 = vrot.slane %v5640, %v5646
        %v5649 = vadd.f32 %v2152, %v5647
        %5650 = vst [vmem:[#allocation2] sm:$0xf] %v5649
        // Predicated region
        $region33: #{tpu_custom_call.1} parent=27 // pred_check
          %p5651 = pneg %p207
        $region34: #{tpu_custom_call.1} parent=27 // pred_check_branch
          %5653 = sbr.rel (%p5651) target = $region36
        $region35: #{tpu_custom_call.1} parent=27 // pred_region
          %v5654 = vld [vmem:[#allocation2] sm:$0xf]
          %v5655 = vmul.f32 %v5654, 0.00390625
          %5656 = vst [vmem:[%s187] sm:$0xf] %v5655
        $region36: #{tpu_custom_call.1} parent=27 // pred_fallthru
          _
        %s5657 = sand.u32 %s99, 1
        %s5658 = scalar_lea.sflag [#allocation4], %s5657
        %s5659 = sand.u32 %s99, 1
        %s5660 = smul.addr %s5659, 4
        %s5661 = scalar_lea.vmem [#allocation3], %s5660
        // Predicated region
        $region37: #{tpu_custom_call.1} parent=27 // pred_check
          %p5662 = pneg %p109
        $region38: #{tpu_custom_call.1} parent=27 // pred_check_branch
          %5664 = sbr.rel (%p5662) target = $region40
        $region39: #{tpu_custom_call.1} parent=27 // pred_region
          %s5665 = smul.u32 2, %s22
          %s5667 = ssub.s32 64, 64
          %5668 = vsyncadd %s5658, %s5667
          %s5669 = smul.addr %s21, 14
          %s5670 = sadd.s32 %s5665, %s5669
          %s5671 = smul.addr %s5670, 32
          %s5672 = scalar_lea.hbm %s2, %s5671
          %s5674 = sshll.u32 %s5661, 4
          %s5675 = int_to_ptr.vmem [resolvable:$true] %s5674
          %5677 = dma.vmem_to_hbm [thread:$0]  %s5675, 64, %s5672, %s5658
        $region40: #{tpu_custom_call.1} parent=27 // pred_fallthru
          _
      $region28: #{tpu_custom_call.1} parent=5 // pred_fallthru
        _
      %p5678 = scmp.le.s32.totalorder 2, %s11
      // Predicated region
      $region41: #{tpu_custom_call.1} parent=5 // pred_check
        %p5679 = pneg %p5678
      $region42: #{tpu_custom_call.1} parent=5 // pred_check_branch
        %5681 = sbr.rel (%p5679) target = $region44
      $region43: #{tpu_custom_call.1} parent=5 // pred_region
        %s5682 = ssub.s32 %s11, 2
        // Predicated region
        $region45: #{tpu_custom_call.1} parent=43 // pred_check
          %p5683 = pneg %p115
        $region46: #{tpu_custom_call.1} parent=43 // pred_check_branch
          %5685 = sbr.rel (%p5683) target = $region48
        $region47: #{tpu_custom_call.1} parent=43 // pred_region
          %s5686 = sand.u32 %s100, 1
          %s5687 = scalar_lea.sflag [#allocation4], %s5686
          %s5688 = sand.u32 %s100, 1
          %s5689 = smul.addr %s5688, 4
          %s5690 = scalar_lea.vmem [#allocation3], %s5689
          %5691 = dma.done %s5687, 64
        $region48: #{tpu_custom_call.1} parent=43 // pred_fallthru
          _
      $region44: #{tpu_custom_call.1} parent=5 // pred_fallthru
        _
    $region6: #{tpu_custom_call.1} parent=1 // loop_footer
      %s15 = sadd.s32 1, %s11
    $region7: #{tpu_custom_call.1} parent=1 // loop_footer_branch
      %10 = sbr.rel target = $region3
    $region8: #{tpu_custom_call.1} parent=1 // loop_exit
      _
    %5692 = vsyncpa [#allocation4], 1
    %s5693 = scalar_lea.sflag [#allocation4], 1
    %5694 = vsyncpa %s5693, 1

</llo_original>
